<compile_context>
chip_gen: v6e
topology: v6e:2x2x1
jax: 0.10.0
libtpu: 0.0.40
codegen_flags: <defaults>
</compile_context>

<pallas_src>
import jax
import jax.numpy as jnp
from jax.experimental import pallas as pl
from jax.experimental.pallas import tpu as pltpu

# ---- small synthetic config (BERT-like, scaled down) ----
VOCAB = 100
HIDDEN = 32
NUM_HEADS = 4
HEAD_DIM = HIDDEN // NUM_HEADS
INTERMEDIATE = 64
NUM_LAYERS = 2
SEQ = 8
BATCH = 2
NUM_LABELS = 3
NUM_LABELS_PAD = 128          # lane-dense padded classifier width
LN_EPS = 1e-12
NEG_BIAS = -1e9               # bias for padded label columns (exp underflows to 0)

# packed per-layer matrix slab column offsets: [ Wqkv | Wo | W1 ]
QKV_W = 3 * HIDDEN                         # 96
OFF_WO = QKV_W                             # 96
OFF_W1 = QKV_W + HIDDEN                    # 128
LMAT_W = QKV_W + HIDDEN + INTERMEDIATE     # 192
LVEC_ROWS = 8                              # [bqkv, bo, b1, b2, g1, be1, g2, be2]
LVEC_W = 128


def _layernorm(x, gamma, beta):
    mu = jnp.mean(x, axis=-1, keepdims=True)
    var = jnp.mean((x - mu) ** 2, axis=-1, keepdims=True)
    return (x - mu) * jax.lax.rsqrt(var + LN_EPS) * gamma + beta


def _gelu(x):
    # TODO(synk): BERT reference GELU is erf-based; tanh approx used (EUP-friendly).
    c = 0.7978845608028654  # sqrt(2/pi)
    return 0.5 * x * (1.0 + jnp.tanh(c * (x + 0.044715 * x * x * x)))


# --------------------------------------------------------------------------
# Single fused kernel: embedding LN + all encoder layers + pooler/classifier
# --------------------------------------------------------------------------
def bert_fused_kernel(x_ref, lmat_ref, lw2_ref, lvec_ref, hw_ref, hv_ref, o_ref):
    hv = hv_ref[...]                           # (4, 128) head vector slab
    hw = hw_ref[...]                           # (H, H + 128) head matrix slab

    # Embedding LayerNorm over the flattened (B*S, H) token slab.
    x = _layernorm(x_ref[...], hv[0:1, :HIDDEN], hv[1:2, :HIDDEN])

    for l in range(NUM_LAYERS):                # static unroll; net resident in VMEM
        wmat = lmat_ref[l]                     # (H, 192) = [Wqkv | Wo | W1]
        w2 = lw2_ref[l]                        # (I, H)
        vec = lvec_ref[l]                      # (8, 128)
        bqkv = vec[0:1, :QKV_W]
        bo = vec[1:2, :HIDDEN]
        b1 = vec[2:3, :INTERMEDIATE]
        b2 = vec[3:4, :HIDDEN]
        g1 = vec[4:5, :HIDDEN]
        be1 = vec[5:6, :HIDDEN]
        g2 = vec[6:7, :HIDDEN]
        be2 = vec[7:8, :HIDDEN]

        # Fused Q/K/V: one lane-dense (H, 3H) matmul (scale pre-folded into Wq).
        qkv = jnp.dot(x, wmat[:, :QKV_W], preferred_element_type=jnp.float32) + bqkv
        q3 = qkv[:, :HIDDEN].reshape(BATCH, SEQ, HIDDEN)
        k3 = qkv[:, HIDDEN:2 * HIDDEN].reshape(BATCH, SEQ, HIDDEN)
        v3 = qkv[:, 2 * HIDDEN:3 * HIDDEN].reshape(BATCH, SEQ, HIDDEN)

        # Attention: per-head batched einsums over the batch dim, contexts kept
        # as values and concatenated along the lane axis (no scratch, no
        # sub-128-lane masked stores, no VMEM readback).
        # TODO(synk): single rank-4 'bqhd,bkhd->bhqk' einsum once Mosaic
        #             dot_general supports multiple batch dims.
        ctx_heads = []
        for h in range(NUM_HEADS):             # static
            sl = slice(h * HEAD_DIM, (h + 1) * HEAD_DIM)
            s = jnp.einsum('bqd,bkd->bqk', q3[:, :, sl], k3[:, :, sl],
                           preferred_element_type=jnp.float32)      # (B, S, S)
            s = s - jnp.max(s, axis=-1, keepdims=True)
            pw = jnp.exp(s)
            pw = pw * pl.reciprocal(jnp.sum(pw, axis=-1, keepdims=True), approx=True)
            ctx_heads.append(jnp.einsum('bqk,bkd->bqd', pw, v3[:, :, sl],
                                        preferred_element_type=jnp.float32))
        ctx = jnp.concatenate(ctx_heads, axis=-1).reshape(BATCH * SEQ, HIDDEN)

        attn_out = jnp.dot(ctx, wmat[:, OFF_WO:OFF_WO + HIDDEN],
                           preferred_element_type=jnp.float32) + bo
        x = _layernorm(x + attn_out, g1, be1)

        ff = _gelu(jnp.dot(x, wmat[:, OFF_W1:OFF_W1 + INTERMEDIATE],
                           preferred_element_type=jnp.float32) + b1)
        ff = jnp.dot(ff, w2, preferred_element_type=jnp.float32) + b2
        x = _layernorm(x + ff, g2, be2)

    # Pooler + dropout(identity) + classifier + softmax on the CLS rows only.
    cls = x.reshape(BATCH, SEQ, HIDDEN)[:, 0:1, :].reshape(BATCH, HIDDEN)
    pooled = jnp.tanh(jnp.dot(cls, hw[:, :HIDDEN],
                              preferred_element_type=jnp.float32) + hv[2:3, :HIDDEN])
    logits = jnp.dot(pooled, hw[:, HIDDEN:],
                     preferred_element_type=jnp.float32) + hv[3:4, :]
    # Padded label columns carry a large negative bias -> exp underflows to 0,
    # so the 128-wide softmax equals nn.Softmax over the real labels.
    logits = logits - jnp.max(logits, axis=-1, keepdims=True)
    e = jnp.exp(logits)
    o_ref[...] = e * pl.reciprocal(jnp.sum(e, axis=-1, keepdims=True), approx=False)


def run_bert_fused(x_emb, p):
    args = (x_emb, p["lmat"], p["lw2"], p["lvec"], p["head_w"], p["head_v"])

    def full_spec(a):
        nd = a.ndim
        return pl.BlockSpec(a.shape, lambda i, _nd=nd: (0,) * _nd)

    # TODO(synk): for real BERT sizes, grid the layer axis (lambda l: (l,0,0)),
    #             store weights in bf16, and request single buffering
    #             (pipeline_mode=pl.Buffered(1)) / double-buffer only the
    #             active layer so one layer fits v7x's 64 MiB VMEM; add a
    #             leading "parallel" batch axis for v7x's second TensorCore.
    #             Not worth it at B*S=16, H=32.
    return pl.pallas_call(
        bert_fused_kernel,
        out_shape=jax.ShapeDtypeStruct((BATCH, NUM_LABELS_PAD), jnp.float32),
        grid=(1,),
        in_specs=[full_spec(a) for a in args],
        out_specs=pl.BlockSpec((BATCH, NUM_LABELS_PAD), lambda i: (0, 0)),
        compiler_params=pltpu.CompilerParams(
            dimension_semantics=("arbitrary",)),
    )(*args)


# --------------------------------------------------------------------------
# Plain-JAX glue: embedding gather/sum, packed-parameter setup.
# --------------------------------------------------------------------------
def init_params(key):
    def normal(k, shape, scale=0.02):
        return (scale * jax.random.normal(k, shape)).astype(jnp.float32)

    keys = iter(jax.random.split(key, 64))
    p = {}
    p["word_emb"] = normal(next(keys), (VOCAB, HIDDEN))   # frozen pretrained_vec
    p["pos_emb"] = normal(next(keys), (SEQ, HIDDEN))
    p["type_emb"] = normal(next(keys), (2, HIDDEN))

    emb_gamma = jnp.ones((HIDDEN,), jnp.float32)
    emb_beta = jnp.zeros((HIDDEN,), jnp.float32)

    attn_scale = 1.0 / (HEAD_DIM ** 0.5)

    lmat, lw2, lvec = [], [], []
    for _ in range(NUM_LAYERS):
        wq = normal(next(keys), (HIDDEN, HIDDEN)) * attn_scale   # scale folded into Wq
        wk = normal(next(keys), (HIDDEN, HIDDEN))
        wv = normal(next(keys), (HIDDEN, HIDDEN))
        wo = normal(next(keys), (HIDDEN, HIDDEN))
        w1 = normal(next(keys), (HIDDEN, INTERMEDIATE))
        w2 = normal(next(keys), (INTERMEDIATE, HIDDEN))
        bq = jnp.zeros((HIDDEN,), jnp.float32)                   # zero bias; scale moot
        bk = jnp.zeros((HIDDEN,), jnp.float32)
        bv = jnp.zeros((HIDDEN,), jnp.float32)
        bo = jnp.zeros((HIDDEN,), jnp.float32)
        b1 = jnp.zeros((INTERMEDIATE,), jnp.float32)
        b2 = jnp.zeros((HIDDEN,), jnp.float32)
        ln1_g = jnp.ones((HIDDEN,), jnp.float32)
        ln1_b = jnp.zeros((HIDDEN,), jnp.float32)
        ln2_g = jnp.ones((HIDDEN,), jnp.float32)
        ln2_b = jnp.zeros((HIDDEN,), jnp.float32)

        lmat.append(jnp.concatenate([wq, wk, wv, wo, w1], axis=1))   # (H, 192)
        lw2.append(w2)                                               # (I, H)
        vec = jnp.zeros((LVEC_ROWS, LVEC_W), jnp.float32)
        vec = vec.at[0, :QKV_W].set(jnp.concatenate([bq, bk, bv]))
        vec = vec.at[1, :HIDDEN].set(bo)
        vec = vec.at[2, :INTERMEDIATE].set(b1)
        vec = vec.at[3, :HIDDEN].set(b2)
        vec = vec.at[4, :HIDDEN].set(ln1_g)
        vec = vec.at[5, :HIDDEN].set(ln1_b)
        vec = vec.at[6, :HIDDEN].set(ln2_g)
        vec = vec.at[7, :HIDDEN].set(ln2_b)
        lvec.append(vec)

    p["lmat"] = jnp.stack(lmat)            # (L, H, 192)
    p["lw2"] = jnp.stack(lw2)              # (L, I, H)
    p["lvec"] = jnp.stack(lvec)            # (L, 8, 128)

    pooler_w = normal(next(keys), (HIDDEN, HIDDEN))
    pooler_b = jnp.zeros((HIDDEN,), jnp.float32)
    # Lane-dense padded classifier: columns >= NUM_LABELS get NEG_BIAS so the
    # in-kernel 128-wide softmax reduces exactly to the NUM_LABELS softmax.
    cls_w = normal(next(keys), (HIDDEN, NUM_LABELS))
    cls_b = jnp.zeros((NUM_LABELS,), jnp.float32)
    cls_w_pad = jnp.zeros((HIDDEN, NUM_LABELS_PAD), jnp.float32).at[:, :NUM_LABELS].set(cls_w)
    cls_b_pad = jnp.full((NUM_LABELS_PAD,), NEG_BIAS, jnp.float32).at[:NUM_LABELS].set(cls_b)

    p["head_w"] = jnp.concatenate([pooler_w, cls_w_pad], axis=1)   # (H, H + 128)
    hv = jnp.zeros((4, NUM_LABELS_PAD), jnp.float32)
    hv = hv.at[0, :HIDDEN].set(emb_gamma)
    hv = hv.at[1, :HIDDEN].set(emb_beta)
    hv = hv.at[2, :HIDDEN].set(pooler_b)
    hv = hv.at[3, :].set(cls_b_pad)
    p["head_v"] = hv                                               # (4, 128)
    return p


def bert_classify_forward(token_ids, p):
    # TODO(synk): no attention_mask handling (full-length sequences assumed).
    B, S = token_ids.shape
    we = p["word_emb"][token_ids]                       # (B, S, H) gather (JAX glue)
    pe = p["pos_emb"][None, :S, :]                      # (1, S, H)
    te = p["type_emb"][0][None, None, :]                # token_type_ids = 0
    x = (we + pe + te).reshape(B * S, HIDDEN).astype(jnp.float32)
    probs = run_bert_fused(x, p)                        # (B, 128), CLS rows only
    return probs[:, :NUM_LABELS]                        # drop padded label columns


if __name__ == "__main__":
    key = jax.random.PRNGKey(0)
    k_tok, k_params = jax.random.split(key)
    token_ids = jax.random.randint(k_tok, (BATCH, SEQ), 0, VOCAB, dtype=jnp.int32)
    params = init_params(k_params)

    probs = bert_classify_forward(token_ids, params)
    probs = jax.block_until_ready(probs)

    assert probs.shape == (BATCH, NUM_LABELS)
    assert bool(jnp.all(jnp.isfinite(probs)))
    # softmax rows sum to 1
    assert bool(jnp.allclose(jnp.sum(probs, axis=-1), 1.0, atol=1e-4))
    print("KERNEL_OK")
</pallas_src>

<mosaic_0001>
module attributes {stable_mosaic.version = 11 : i64} {
  func.func @bert_fused_kernel(%arg0: i32, %arg1: memref<16x32xf32, #tpu.memory_space<vmem>>, %arg2: memref<2x32x192xf32, #tpu.memory_space<vmem>>, %arg3: memref<2x64x32xf32, #tpu.memory_space<vmem>>, %arg4: memref<2x8x128xf32, #tpu.memory_space<vmem>>, %arg5: memref<32x160xf32, #tpu.memory_space<vmem>>, %arg6: memref<4x128xf32, #tpu.memory_space<vmem>>, %arg7: memref<2x128xf32, #tpu.memory_space<vmem>>) attributes {dimension_semantics = [#tpu.dimension_semantics<arbitrary>], iteration_bounds = array<i64: 1>, scalar_prefetch = 0 : i64, scratch_operands = 0 : i64, tpu.core_type = #tpu.core_type<tc>, window_params = [{pipeline_mode = #tpu.pipeline_mode<synchronous>, transform_indices = @transform_0, window_bounds = array<i64: 16, 32>}, {pipeline_mode = #tpu.pipeline_mode<synchronous>, transform_indices = @transform_1, window_bounds = array<i64: 2, 32, 192>}, {pipeline_mode = #tpu.pipeline_mode<synchronous>, transform_indices = @transform_2, window_bounds = array<i64: 2, 64, 32>}, {pipeline_mode = #tpu.pipeline_mode<synchronous>, transform_indices = @transform_3, window_bounds = array<i64: 2, 8, 128>}, {pipeline_mode = #tpu.pipeline_mode<synchronous>, transform_indices = @transform_4, window_bounds = array<i64: 32, 160>}, {pipeline_mode = #tpu.pipeline_mode<synchronous>, transform_indices = @transform_5, window_bounds = array<i64: 4, 128>}, {pipeline_mode = #tpu.pipeline_mode<synchronous>, transform_indices = @transform_6, window_bounds = array<i64: 2, 128>}]} {
    %c0 = arith.constant 0 : index
    %c0_0 = arith.constant 0 : index
    %0 = vector.load %arg6[%c0, %c0_0] : memref<4x128xf32, #tpu.memory_space<vmem>>, vector<4x128xf32>
    %c0_1 = arith.constant 0 : index
    %c0_2 = arith.constant 0 : index
    %1 = vector.load %arg5[%c0_1, %c0_2] : memref<32x160xf32, #tpu.memory_space<vmem>>, vector<32x160xf32>
    %c0_3 = arith.constant 0 : index
    %c0_4 = arith.constant 0 : index
    %2 = vector.load %arg1[%c0_3, %c0_4] : memref<16x32xf32, #tpu.memory_space<vmem>>, vector<16x32xf32>
    %3 = vector.extract_strided_slice %0 {offsets = [0, 0], sizes = [1, 32], strides = [1, 1]} : vector<4x128xf32> to vector<1x32xf32>
    %4 = vector.extract_strided_slice %0 {offsets = [1, 0], sizes = [1, 32], strides = [1, 1]} : vector<4x128xf32> to vector<1x32xf32>
    %cst = arith.constant dense<0.000000e+00> : vector<16xf32>
    %5 = vector.multi_reduction <add>, %2, %cst [1] : vector<16x32xf32> to vector<16xf32>
    %6 = vector.shape_cast %5 : vector<16xf32> to vector<16x1xf32>
    %cst_5 = arith.constant 3.200000e+01 : f32
    %7 = vector.broadcast %cst_5 : f32 to vector<16x1xf32>
    %8 = arith.divf %6, %7 : vector<16x1xf32>
    %9 = vector.broadcast %8 : vector<16x1xf32> to vector<16x32xf32>
    %10 = arith.subf %2, %9 : vector<16x32xf32>
    %11 = arith.mulf %10, %10 : vector<16x32xf32>
    %cst_6 = arith.constant dense<0.000000e+00> : vector<16xf32>
    %12 = vector.multi_reduction <add>, %11, %cst_6 [1] : vector<16x32xf32> to vector<16xf32>
    %13 = vector.shape_cast %12 : vector<16xf32> to vector<16x1xf32>
    %cst_7 = arith.constant 3.200000e+01 : f32
    %14 = vector.broadcast %cst_7 : f32 to vector<16x1xf32>
    %15 = arith.divf %13, %14 : vector<16x1xf32>
    %16 = vector.broadcast %8 : vector<16x1xf32> to vector<16x32xf32>
    %17 = arith.subf %2, %16 : vector<16x32xf32>
    %cst_8 = arith.constant 9.99999996E-13 : f32
    %18 = vector.broadcast %cst_8 : f32 to vector<16x1xf32>
    %19 = arith.addf %15, %18 : vector<16x1xf32>
    %20 = math.rsqrt %19 : vector<16x1xf32>
    %21 = vector.broadcast %20 : vector<16x1xf32> to vector<16x32xf32>
    %22 = arith.mulf %17, %21 : vector<16x32xf32>
    %23 = vector.broadcast %3 : vector<1x32xf32> to vector<16x32xf32>
    %24 = arith.mulf %22, %23 : vector<16x32xf32>
    %25 = vector.broadcast %4 : vector<1x32xf32> to vector<16x32xf32>
    %26 = arith.addf %24, %25 : vector<16x32xf32>
    %c0_9 = arith.constant 0 : index
    %c0_10 = arith.constant 0 : index
    %c0_11 = arith.constant 0 : index
    %27 = vector.load %arg2[%c0_9, %c0_10, %c0_11] : memref<2x32x192xf32, #tpu.memory_space<vmem>>, vector<1x32x192xf32>
    %28 = vector.shape_cast %27 : vector<1x32x192xf32> to vector<32x192xf32>
    %c0_12 = arith.constant 0 : index
    %c0_13 = arith.constant 0 : index
    %c0_14 = arith.constant 0 : index
    %29 = vector.load %arg3[%c0_12, %c0_13, %c0_14] : memref<2x64x32xf32, #tpu.memory_space<vmem>>, vector<1x64x32xf32>
    %30 = vector.shape_cast %29 : vector<1x64x32xf32> to vector<64x32xf32>
    %c0_15 = arith.constant 0 : index
    %c0_16 = arith.constant 0 : index
    %c0_17 = arith.constant 0 : index
    %31 = vector.load %arg4[%c0_15, %c0_16, %c0_17] : memref<2x8x128xf32, #tpu.memory_space<vmem>>, vector<1x8x128xf32>
    %32 = vector.shape_cast %31 : vector<1x8x128xf32> to vector<8x128xf32>
    %33 = vector.extract_strided_slice %32 {offsets = [0, 0], sizes = [1, 96], strides = [1, 1]} : vector<8x128xf32> to vector<1x96xf32>
    %34 = vector.extract_strided_slice %32 {offsets = [1, 0], sizes = [1, 32], strides = [1, 1]} : vector<8x128xf32> to vector<1x32xf32>
    %35 = vector.extract_strided_slice %32 {offsets = [2, 0], sizes = [1, 64], strides = [1, 1]} : vector<8x128xf32> to vector<1x64xf32>
    %36 = vector.extract_strided_slice %32 {offsets = [3, 0], sizes = [1, 32], strides = [1, 1]} : vector<8x128xf32> to vector<1x32xf32>
    %37 = vector.extract_strided_slice %32 {offsets = [4, 0], sizes = [1, 32], strides = [1, 1]} : vector<8x128xf32> to vector<1x32xf32>
    %38 = vector.extract_strided_slice %32 {offsets = [5, 0], sizes = [1, 32], strides = [1, 1]} : vector<8x128xf32> to vector<1x32xf32>
    %39 = vector.extract_strided_slice %32 {offsets = [6, 0], sizes = [1, 32], strides = [1, 1]} : vector<8x128xf32> to vector<1x32xf32>
    %40 = vector.extract_strided_slice %32 {offsets = [7, 0], sizes = [1, 32], strides = [1, 1]} : vector<8x128xf32> to vector<1x32xf32>
    %41 = vector.extract_strided_slice %28 {offsets = [0, 0], sizes = [32, 96], strides = [1, 1]} : vector<32x192xf32> to vector<32x96xf32>
    %cst_18 = arith.constant dense<0.000000e+00> : vector<16x96xf32>
    %42 = tpu.matmul %26, %41, %cst_18 {dimension_numbers = #tpu.dot_dimension_numbers<[1], [0], [0], [1], [0, 0, 1, 1], [], []>} : vector<16x32xf32>, vector<32x96xf32>, vector<16x96xf32> -> vector<16x96xf32>
    %43 = vector.broadcast %33 : vector<1x96xf32> to vector<16x96xf32>
    %44 = arith.addf %42, %43 : vector<16x96xf32>
    %45 = vector.extract_strided_slice %44 {offsets = [0, 0], sizes = [16, 32], strides = [1, 1]} : vector<16x96xf32> to vector<16x32xf32>
    %46 = vector.shape_cast %45 : vector<16x32xf32> to vector<2x8x32xf32>
    %47 = vector.extract_strided_slice %44 {offsets = [0, 32], sizes = [16, 32], strides = [1, 1]} : vector<16x96xf32> to vector<16x32xf32>
    %48 = vector.shape_cast %47 : vector<16x32xf32> to vector<2x8x32xf32>
    %49 = vector.extract_strided_slice %44 {offsets = [0, 64], sizes = [16, 32], strides = [1, 1]} : vector<16x96xf32> to vector<16x32xf32>
    %50 = vector.shape_cast %49 : vector<16x32xf32> to vector<2x8x32xf32>
    %51 = vector.extract_strided_slice %46 {offsets = [0, 0, 0], sizes = [2, 8, 8], strides = [1, 1, 1]} : vector<2x8x32xf32> to vector<2x8x8xf32>
    %52 = vector.extract_strided_slice %48 {offsets = [0, 0, 0], sizes = [2, 8, 8], strides = [1, 1, 1]} : vector<2x8x32xf32> to vector<2x8x8xf32>
    "tpu.trace_start"() <{level = 10 : i32, message = "bqd,bkd->bqk"}> : () -> ()
    %cst_19 = arith.constant dense<0.000000e+00> : vector<2x8x8xf32>
    %53 = tpu.matmul %51, %52, %cst_19 {dimension_numbers = #tpu.dot_dimension_numbers<[2], [2], [1], [1], [0, 0, 0, 1, 1, 1], [0], [0]>} : vector<2x8x8xf32>, vector<2x8x8xf32>, vector<2x8x8xf32> -> vector<2x8x8xf32>
    "tpu.trace_stop"() : () -> ()
    %cst_20 = arith.constant dense<0xFF800000> : vector<2x8xf32>
    %54 = vector.multi_reduction <maximumf>, %53, %cst_20 [2] : vector<2x8x8xf32> to vector<2x8xf32>
    %55 = vector.shape_cast %54 : vector<2x8xf32> to vector<2x8x1xf32>
    %56 = vector.broadcast %55 : vector<2x8x1xf32> to vector<2x8x8xf32>
    %57 = arith.subf %53, %56 : vector<2x8x8xf32>
    %58 = math.exp %57 : vector<2x8x8xf32>
    %cst_21 = arith.constant dense<0.000000e+00> : vector<2x8xf32>
    %59 = vector.multi_reduction <add>, %58, %cst_21 [2] : vector<2x8x8xf32> to vector<2x8xf32>
    %60 = vector.shape_cast %59 : vector<2x8xf32> to vector<2x8x1xf32>
    %61 = tpu.reciprocal %60 {approx = true} : vector<2x8x1xf32> -> vector<2x8x1xf32>
    %62 = vector.broadcast %61 : vector<2x8x1xf32> to vector<2x8x8xf32>
    %63 = arith.mulf %58, %62 : vector<2x8x8xf32>
    %64 = vector.extract_strided_slice %50 {offsets = [0, 0, 0], sizes = [2, 8, 8], strides = [1, 1, 1]} : vector<2x8x32xf32> to vector<2x8x8xf32>
    "tpu.trace_start"() <{level = 10 : i32, message = "bqk,bkd->bqd"}> : () -> ()
    %cst_22 = arith.constant dense<0.000000e+00> : vector<2x8x8xf32>
    %65 = tpu.matmul %63, %64, %cst_22 {dimension_numbers = #tpu.dot_dimension_numbers<[2], [1], [1], [2], [0, 0, 0, 1, 1, 2], [0], [0]>} : vector<2x8x8xf32>, vector<2x8x8xf32>, vector<2x8x8xf32> -> vector<2x8x8xf32>
    "tpu.trace_stop"() : () -> ()
    %66 = vector.extract_strided_slice %46 {offsets = [0, 0, 8], sizes = [2, 8, 8], strides = [1, 1, 1]} : vector<2x8x32xf32> to vector<2x8x8xf32>
    %67 = vector.extract_strided_slice %48 {offsets = [0, 0, 8], sizes = [2, 8, 8], strides = [1, 1, 1]} : vector<2x8x32xf32> to vector<2x8x8xf32>
    "tpu.trace_start"() <{level = 10 : i32, message = "bqd,bkd->bqk"}> : () -> ()
    %cst_23 = arith.constant dense<0.000000e+00> : vector<2x8x8xf32>
    %68 = tpu.matmul %66, %67, %cst_23 {dimension_numbers = #tpu.dot_dimension_numbers<[2], [2], [1], [1], [0, 0, 0, 1, 1, 1], [0], [0]>} : vector<2x8x8xf32>, vector<2x8x8xf32>, vector<2x8x8xf32> -> vector<2x8x8xf32>
    "tpu.trace_stop"() : () -> ()
    %cst_24 = arith.constant dense<0xFF800000> : vector<2x8xf32>
    %69 = vector.multi_reduction <maximumf>, %68, %cst_24 [2] : vector<2x8x8xf32> to vector<2x8xf32>
    %70 = vector.shape_cast %69 : vector<2x8xf32> to vector<2x8x1xf32>
    %71 = vector.broadcast %70 : vector<2x8x1xf32> to vector<2x8x8xf32>
    %72 = arith.subf %68, %71 : vector<2x8x8xf32>
    %73 = math.exp %72 : vector<2x8x8xf32>
    %cst_25 = arith.constant dense<0.000000e+00> : vector<2x8xf32>
    %74 = vector.multi_reduction <add>, %73, %cst_25 [2] : vector<2x8x8xf32> to vector<2x8xf32>
    %75 = vector.shape_cast %74 : vector<2x8xf32> to vector<2x8x1xf32>
    %76 = tpu.reciprocal %75 {approx = true} : vector<2x8x1xf32> -> vector<2x8x1xf32>
    %77 = vector.broadcast %76 : vector<2x8x1xf32> to vector<2x8x8xf32>
    %78 = arith.mulf %73, %77 : vector<2x8x8xf32>
    %79 = vector.extract_strided_slice %50 {offsets = [0, 0, 8], sizes = [2, 8, 8], strides = [1, 1, 1]} : vector<2x8x32xf32> to vector<2x8x8xf32>
    "tpu.trace_start"() <{level = 10 : i32, message = "bqk,bkd->bqd"}> : () -> ()
    %cst_26 = arith.constant dense<0.000000e+00> : vector<2x8x8xf32>
    %80 = tpu.matmul %78, %79, %cst_26 {dimension_numbers = #tpu.dot_dimension_numbers<[2], [1], [1], [2], [0, 0, 0, 1, 1, 2], [0], [0]>} : vector<2x8x8xf32>, vector<2x8x8xf32>, vector<2x8x8xf32> -> vector<2x8x8xf32>
    "tpu.trace_stop"() : () -> ()
    %81 = vector.extract_strided_slice %46 {offsets = [0, 0, 16], sizes = [2, 8, 8], strides = [1, 1, 1]} : vector<2x8x32xf32> to vector<2x8x8xf32>
    %82 = vector.extract_strided_slice %48 {offsets = [0, 0, 16], sizes = [2, 8, 8], strides = [1, 1, 1]} : vector<2x8x32xf32> to vector<2x8x8xf32>
    "tpu.trace_start"() <{level = 10 : i32, message = "bqd,bkd->bqk"}> : () -> ()
    %cst_27 = arith.constant dense<0.000000e+00> : vector<2x8x8xf32>
    %83 = tpu.matmul %81, %82, %cst_27 {dimension_numbers = #tpu.dot_dimension_numbers<[2], [2], [1], [1], [0, 0, 0, 1, 1, 1], [0], [0]>} : vector<2x8x8xf32>, vector<2x8x8xf32>, vector<2x8x8xf32> -> vector<2x8x8xf32>
    "tpu.trace_stop"() : () -> ()
    %cst_28 = arith.constant dense<0xFF800000> : vector<2x8xf32>
    %84 = vector.multi_reduction <maximumf>, %83, %cst_28 [2] : vector<2x8x8xf32> to vector<2x8xf32>
    %85 = vector.shape_cast %84 : vector<2x8xf32> to vector<2x8x1xf32>
    %86 = vector.broadcast %85 : vector<2x8x1xf32> to vector<2x8x8xf32>
    %87 = arith.subf %83, %86 : vector<2x8x8xf32>
    %88 = math.exp %87 : vector<2x8x8xf32>
    %cst_29 = arith.constant dense<0.000000e+00> : vector<2x8xf32>
    %89 = vector.multi_reduction <add>, %88, %cst_29 [2] : vector<2x8x8xf32> to vector<2x8xf32>
    %90 = vector.shape_cast %89 : vector<2x8xf32> to vector<2x8x1xf32>
    %91 = tpu.reciprocal %90 {approx = true} : vector<2x8x1xf32> -> vector<2x8x1xf32>
    %92 = vector.broadcast %91 : vector<2x8x1xf32> to vector<2x8x8xf32>
    %93 = arith.mulf %88, %92 : vector<2x8x8xf32>
    %94 = vector.extract_strided_slice %50 {offsets = [0, 0, 16], sizes = [2, 8, 8], strides = [1, 1, 1]} : vector<2x8x32xf32> to vector<2x8x8xf32>
    "tpu.trace_start"() <{level = 10 : i32, message = "bqk,bkd->bqd"}> : () -> ()
    %cst_30 = arith.constant dense<0.000000e+00> : vector<2x8x8xf32>
    %95 = tpu.matmul %93, %94, %cst_30 {dimension_numbers = #tpu.dot_dimension_numbers<[2], [1], [1], [2], [0, 0, 0, 1, 1, 2], [0], [0]>} : vector<2x8x8xf32>, vector<2x8x8xf32>, vector<2x8x8xf32> -> vector<2x8x8xf32>
    "tpu.trace_stop"() : () -> ()
    %96 = vector.extract_strided_slice %46 {offsets = [0, 0, 24], sizes = [2, 8, 8], strides = [1, 1, 1]} : vector<2x8x32xf32> to vector<2x8x8xf32>
    %97 = vector.extract_strided_slice %48 {offsets = [0, 0, 24], sizes = [2, 8, 8], strides = [1, 1, 1]} : vector<2x8x32xf32> to vector<2x8x8xf32>
    "tpu.trace_start"() <{level = 10 : i32, message = "bqd,bkd->bqk"}> : () -> ()
    %cst_31 = arith.constant dense<0.000000e+00> : vector<2x8x8xf32>
    %98 = tpu.matmul %96, %97, %cst_31 {dimension_numbers = #tpu.dot_dimension_numbers<[2], [2], [1], [1], [0, 0, 0, 1, 1, 1], [0], [0]>} : vector<2x8x8xf32>, vector<2x8x8xf32>, vector<2x8x8xf32> -> vector<2x8x8xf32>
    "tpu.trace_stop"() : () -> ()
    %cst_32 = arith.constant dense<0xFF800000> : vector<2x8xf32>
    %99 = vector.multi_reduction <maximumf>, %98, %cst_32 [2] : vector<2x8x8xf32> to vector<2x8xf32>
    %100 = vector.shape_cast %99 : vector<2x8xf32> to vector<2x8x1xf32>
    %101 = vector.broadcast %100 : vector<2x8x1xf32> to vector<2x8x8xf32>
    %102 = arith.subf %98, %101 : vector<2x8x8xf32>
    %103 = math.exp %102 : vector<2x8x8xf32>
    %cst_33 = arith.constant dense<0.000000e+00> : vector<2x8xf32>
    %104 = vector.multi_reduction <add>, %103, %cst_33 [2] : vector<2x8x8xf32> to vector<2x8xf32>
    %105 = vector.shape_cast %104 : vector<2x8xf32> to vector<2x8x1xf32>
    %106 = tpu.reciprocal %105 {approx = true} : vector<2x8x1xf32> -> vector<2x8x1xf32>
    %107 = vector.broadcast %106 : vector<2x8x1xf32> to vector<2x8x8xf32>
    %108 = arith.mulf %103, %107 : vector<2x8x8xf32>
    %109 = vector.extract_strided_slice %50 {offsets = [0, 0, 24], sizes = [2, 8, 8], strides = [1, 1, 1]} : vector<2x8x32xf32> to vector<2x8x8xf32>
    "tpu.trace_start"() <{level = 10 : i32, message = "bqk,bkd->bqd"}> : () -> ()
    %cst_34 = arith.constant dense<0.000000e+00> : vector<2x8x8xf32>
    %110 = tpu.matmul %108, %109, %cst_34 {dimension_numbers = #tpu.dot_dimension_numbers<[2], [1], [1], [2], [0, 0, 0, 1, 1, 2], [0], [0]>} : vector<2x8x8xf32>, vector<2x8x8xf32>, vector<2x8x8xf32> -> vector<2x8x8xf32>
    "tpu.trace_stop"() : () -> ()
    %111 = tpu.concatenate %65, %80, %95, %110 in 2 : vector<2x8x8xf32>, vector<2x8x8xf32>, vector<2x8x8xf32>, vector<2x8x8xf32> -> vector<2x8x32xf32>
    %112 = vector.shape_cast %111 : vector<2x8x32xf32> to vector<16x32xf32>
    %113 = vector.extract_strided_slice %28 {offsets = [0, 96], sizes = [32, 32], strides = [1, 1]} : vector<32x192xf32> to vector<32x32xf32>
    %cst_35 = arith.constant dense<0.000000e+00> : vector<16x32xf32>
    %114 = tpu.matmul %112, %113, %cst_35 {dimension_numbers = #tpu.dot_dimension_numbers<[1], [0], [0], [1], [0, 0, 1, 1], [], []>} : vector<16x32xf32>, vector<32x32xf32>, vector<16x32xf32> -> vector<16x32xf32>
    %115 = vector.broadcast %34 : vector<1x32xf32> to vector<16x32xf32>
    %116 = arith.addf %114, %115 : vector<16x32xf32>
    %117 = arith.addf %26, %116 : vector<16x32xf32>
    %cst_36 = arith.constant dense<0.000000e+00> : vector<16xf32>
    %118 = vector.multi_reduction <add>, %117, %cst_36 [1] : vector<16x32xf32> to vector<16xf32>
    %119 = vector.shape_cast %118 : vector<16xf32> to vector<16x1xf32>
    %cst_37 = arith.constant 3.200000e+01 : f32
    %120 = vector.broadcast %cst_37 : f32 to vector<16x1xf32>
    %121 = arith.divf %119, %120 : vector<16x1xf32>
    %122 = vector.broadcast %121 : vector<16x1xf32> to vector<16x32xf32>
    %123 = arith.subf %117, %122 : vector<16x32xf32>
    %124 = arith.mulf %123, %123 : vector<16x32xf32>
    %cst_38 = arith.constant dense<0.000000e+00> : vector<16xf32>
    %125 = vector.multi_reduction <add>, %124, %cst_38 [1] : vector<16x32xf32> to vector<16xf32>
    %126 = vector.shape_cast %125 : vector<16xf32> to vector<16x1xf32>
    %cst_39 = arith.constant 3.200000e+01 : f32
    %127 = vector.broadcast %cst_39 : f32 to vector<16x1xf32>
    %128 = arith.divf %126, %127 : vector<16x1xf32>
    %129 = vector.broadcast %121 : vector<16x1xf32> to vector<16x32xf32>
    %130 = arith.subf %117, %129 : vector<16x32xf32>
    %cst_40 = arith.constant 9.99999996E-13 : f32
    %131 = vector.broadcast %cst_40 : f32 to vector<16x1xf32>
    %132 = arith.addf %128, %131 : vector<16x1xf32>
    %133 = math.rsqrt %132 : vector<16x1xf32>
    %134 = vector.broadcast %133 : vector<16x1xf32> to vector<16x32xf32>
    %135 = arith.mulf %130, %134 : vector<16x32xf32>
    %136 = vector.broadcast %37 : vector<1x32xf32> to vector<16x32xf32>
    %137 = arith.mulf %135, %136 : vector<16x32xf32>
    %138 = vector.broadcast %38 : vector<1x32xf32> to vector<16x32xf32>
    %139 = arith.addf %137, %138 : vector<16x32xf32>
    %140 = vector.extract_strided_slice %28 {offsets = [0, 128], sizes = [32, 64], strides = [1, 1]} : vector<32x192xf32> to vector<32x64xf32>
    %cst_41 = arith.constant dense<0.000000e+00> : vector<16x64xf32>
    %141 = tpu.matmul %139, %140, %cst_41 {dimension_numbers = #tpu.dot_dimension_numbers<[1], [0], [0], [1], [0, 0, 1, 1], [], []>} : vector<16x32xf32>, vector<32x64xf32>, vector<16x64xf32> -> vector<16x64xf32>
    %142 = vector.broadcast %35 : vector<1x64xf32> to vector<16x64xf32>
    %143 = arith.addf %141, %142 : vector<16x64xf32>
    %cst_42 = arith.constant 5.000000e-01 : f32
    %144 = vector.broadcast %cst_42 : f32 to vector<16x64xf32>
    %145 = arith.mulf %144, %143 : vector<16x64xf32>
    %cst_43 = arith.constant 4.471500e-02 : f32
    %146 = vector.broadcast %cst_43 : f32 to vector<16x64xf32>
    %147 = arith.mulf %146, %143 : vector<16x64xf32>
    %148 = arith.mulf %147, %143 : vector<16x64xf32>
    %149 = arith.mulf %148, %143 : vector<16x64xf32>
    %150 = arith.addf %143, %149 : vector<16x64xf32>
    %cst_44 = arith.constant 0.797884583 : f32
    %151 = vector.broadcast %cst_44 : f32 to vector<16x64xf32>
    %152 = arith.mulf %151, %150 : vector<16x64xf32>
    %153 = math.tanh %152 : vector<16x64xf32>
    %cst_45 = arith.constant 1.000000e+00 : f32
    %154 = vector.broadcast %cst_45 : f32 to vector<16x64xf32>
    %155 = arith.addf %154, %153 : vector<16x64xf32>
    %156 = arith.mulf %145, %155 : vector<16x64xf32>
    %cst_46 = arith.constant dense<0.000000e+00> : vector<16x32xf32>
    %157 = tpu.matmul %156, %30, %cst_46 {dimension_numbers = #tpu.dot_dimension_numbers<[1], [0], [0], [1], [0, 0, 1, 1], [], []>} : vector<16x64xf32>, vector<64x32xf32>, vector<16x32xf32> -> vector<16x32xf32>
    %158 = vector.broadcast %36 : vector<1x32xf32> to vector<16x32xf32>
    %159 = arith.addf %157, %158 : vector<16x32xf32>
    %160 = arith.addf %139, %159 : vector<16x32xf32>
    %cst_47 = arith.constant dense<0.000000e+00> : vector<16xf32>
    %161 = vector.multi_reduction <add>, %160, %cst_47 [1] : vector<16x32xf32> to vector<16xf32>
    %162 = vector.shape_cast %161 : vector<16xf32> to vector<16x1xf32>
    %cst_48 = arith.constant 3.200000e+01 : f32
    %163 = vector.broadcast %cst_48 : f32 to vector<16x1xf32>
    %164 = arith.divf %162, %163 : vector<16x1xf32>
    %165 = vector.broadcast %164 : vector<16x1xf32> to vector<16x32xf32>
    %166 = arith.subf %160, %165 : vector<16x32xf32>
    %167 = arith.mulf %166, %166 : vector<16x32xf32>
    %cst_49 = arith.constant dense<0.000000e+00> : vector<16xf32>
    %168 = vector.multi_reduction <add>, %167, %cst_49 [1] : vector<16x32xf32> to vector<16xf32>
    %169 = vector.shape_cast %168 : vector<16xf32> to vector<16x1xf32>
    %cst_50 = arith.constant 3.200000e+01 : f32
    %170 = vector.broadcast %cst_50 : f32 to vector<16x1xf32>
    %171 = arith.divf %169, %170 : vector<16x1xf32>
    %172 = vector.broadcast %164 : vector<16x1xf32> to vector<16x32xf32>
    %173 = arith.subf %160, %172 : vector<16x32xf32>
    %cst_51 = arith.constant 9.99999996E-13 : f32
    %174 = vector.broadcast %cst_51 : f32 to vector<16x1xf32>
    %175 = arith.addf %171, %174 : vector<16x1xf32>
    %176 = math.rsqrt %175 : vector<16x1xf32>
    %177 = vector.broadcast %176 : vector<16x1xf32> to vector<16x32xf32>
    %178 = arith.mulf %173, %177 : vector<16x32xf32>
    %179 = vector.broadcast %39 : vector<1x32xf32> to vector<16x32xf32>
    %180 = arith.mulf %178, %179 : vector<16x32xf32>
    %181 = vector.broadcast %40 : vector<1x32xf32> to vector<16x32xf32>
    %182 = arith.addf %180, %181 : vector<16x32xf32>
    %c1 = arith.constant 1 : index
    %c0_52 = arith.constant 0 : index
    %c0_53 = arith.constant 0 : index
    %183 = vector.load %arg2[%c1, %c0_52, %c0_53] : memref<2x32x192xf32, #tpu.memory_space<vmem>>, vector<1x32x192xf32>
    %184 = vector.shape_cast %183 : vector<1x32x192xf32> to vector<32x192xf32>
    %c1_54 = arith.constant 1 : index
    %c0_55 = arith.constant 0 : index
    %c0_56 = arith.constant 0 : index
    %185 = vector.load %arg3[%c1_54, %c0_55, %c0_56] : memref<2x64x32xf32, #tpu.memory_space<vmem>>, vector<1x64x32xf32>
    %186 = vector.shape_cast %185 : vector<1x64x32xf32> to vector<64x32xf32>
    %c1_57 = arith.constant 1 : index
    %c0_58 = arith.constant 0 : index
    %c0_59 = arith.constant 0 : index
    %187 = vector.load %arg4[%c1_57, %c0_58, %c0_59] : memref<2x8x128xf32, #tpu.memory_space<vmem>>, vector<1x8x128xf32>
    %188 = vector.shape_cast %187 : vector<1x8x128xf32> to vector<8x128xf32>
    %189 = vector.extract_strided_slice %188 {offsets = [0, 0], sizes = [1, 96], strides = [1, 1]} : vector<8x128xf32> to vector<1x96xf32>
    %190 = vector.extract_strided_slice %188 {offsets = [1, 0], sizes = [1, 32], strides = [1, 1]} : vector<8x128xf32> to vector<1x32xf32>
    %191 = vector.extract_strided_slice %188 {offsets = [2, 0], sizes = [1, 64], strides = [1, 1]} : vector<8x128xf32> to vector<1x64xf32>
    %192 = vector.extract_strided_slice %188 {offsets = [3, 0], sizes = [1, 32], strides = [1, 1]} : vector<8x128xf32> to vector<1x32xf32>
    %193 = vector.extract_strided_slice %188 {offsets = [4, 0], sizes = [1, 32], strides = [1, 1]} : vector<8x128xf32> to vector<1x32xf32>
    %194 = vector.extract_strided_slice %188 {offsets = [5, 0], sizes = [1, 32], strides = [1, 1]} : vector<8x128xf32> to vector<1x32xf32>
    %195 = vector.extract_strided_slice %188 {offsets = [6, 0], sizes = [1, 32], strides = [1, 1]} : vector<8x128xf32> to vector<1x32xf32>
    %196 = vector.extract_strided_slice %188 {offsets = [7, 0], sizes = [1, 32], strides = [1, 1]} : vector<8x128xf32> to vector<1x32xf32>
    %197 = vector.extract_strided_slice %184 {offsets = [0, 0], sizes = [32, 96], strides = [1, 1]} : vector<32x192xf32> to vector<32x96xf32>
    %cst_60 = arith.constant dense<0.000000e+00> : vector<16x96xf32>
    %198 = tpu.matmul %182, %197, %cst_60 {dimension_numbers = #tpu.dot_dimension_numbers<[1], [0], [0], [1], [0, 0, 1, 1], [], []>} : vector<16x32xf32>, vector<32x96xf32>, vector<16x96xf32> -> vector<16x96xf32>
    %199 = vector.broadcast %189 : vector<1x96xf32> to vector<16x96xf32>
    %200 = arith.addf %198, %199 : vector<16x96xf32>
    %201 = vector.extract_strided_slice %200 {offsets = [0, 0], sizes = [16, 32], strides = [1, 1]} : vector<16x96xf32> to vector<16x32xf32>
    %202 = vector.shape_cast %201 : vector<16x32xf32> to vector<2x8x32xf32>
    %203 = vector.extract_strided_slice %200 {offsets = [0, 32], sizes = [16, 32], strides = [1, 1]} : vector<16x96xf32> to vector<16x32xf32>
    %204 = vector.shape_cast %203 : vector<16x32xf32> to vector<2x8x32xf32>
    %205 = vector.extract_strided_slice %200 {offsets = [0, 64], sizes = [16, 32], strides = [1, 1]} : vector<16x96xf32> to vector<16x32xf32>
    %206 = vector.shape_cast %205 : vector<16x32xf32> to vector<2x8x32xf32>
    %207 = vector.extract_strided_slice %202 {offsets = [0, 0, 0], sizes = [2, 8, 8], strides = [1, 1, 1]} : vector<2x8x32xf32> to vector<2x8x8xf32>
    %208 = vector.extract_strided_slice %204 {offsets = [0, 0, 0], sizes = [2, 8, 8], strides = [1, 1, 1]} : vector<2x8x32xf32> to vector<2x8x8xf32>
    "tpu.trace_start"() <{level = 10 : i32, message = "bqd,bkd->bqk"}> : () -> ()
    %cst_61 = arith.constant dense<0.000000e+00> : vector<2x8x8xf32>
    %209 = tpu.matmul %207, %208, %cst_61 {dimension_numbers = #tpu.dot_dimension_numbers<[2], [2], [1], [1], [0, 0, 0, 1, 1, 1], [0], [0]>} : vector<2x8x8xf32>, vector<2x8x8xf32>, vector<2x8x8xf32> -> vector<2x8x8xf32>
    "tpu.trace_stop"() : () -> ()
    %cst_62 = arith.constant dense<0xFF800000> : vector<2x8xf32>
    %210 = vector.multi_reduction <maximumf>, %209, %cst_62 [2] : vector<2x8x8xf32> to vector<2x8xf32>
    %211 = vector.shape_cast %210 : vector<2x8xf32> to vector<2x8x1xf32>
    %212 = vector.broadcast %211 : vector<2x8x1xf32> to vector<2x8x8xf32>
    %213 = arith.subf %209, %212 : vector<2x8x8xf32>
    %214 = math.exp %213 : vector<2x8x8xf32>
    %cst_63 = arith.constant dense<0.000000e+00> : vector<2x8xf32>
    %215 = vector.multi_reduction <add>, %214, %cst_63 [2] : vector<2x8x8xf32> to vector<2x8xf32>
    %216 = vector.shape_cast %215 : vector<2x8xf32> to vector<2x8x1xf32>
    %217 = tpu.reciprocal %216 {approx = true} : vector<2x8x1xf32> -> vector<2x8x1xf32>
    %218 = vector.broadcast %217 : vector<2x8x1xf32> to vector<2x8x8xf32>
    %219 = arith.mulf %214, %218 : vector<2x8x8xf32>
    %220 = vector.extract_strided_slice %206 {offsets = [0, 0, 0], sizes = [2, 8, 8], strides = [1, 1, 1]} : vector<2x8x32xf32> to vector<2x8x8xf32>
    "tpu.trace_start"() <{level = 10 : i32, message = "bqk,bkd->bqd"}> : () -> ()
    %cst_64 = arith.constant dense<0.000000e+00> : vector<2x8x8xf32>
    %221 = tpu.matmul %219, %220, %cst_64 {dimension_numbers = #tpu.dot_dimension_numbers<[2], [1], [1], [2], [0, 0, 0, 1, 1, 2], [0], [0]>} : vector<2x8x8xf32>, vector<2x8x8xf32>, vector<2x8x8xf32> -> vector<2x8x8xf32>
    "tpu.trace_stop"() : () -> ()
    %222 = vector.extract_strided_slice %202 {offsets = [0, 0, 8], sizes = [2, 8, 8], strides = [1, 1, 1]} : vector<2x8x32xf32> to vector<2x8x8xf32>
    %223 = vector.extract_strided_slice %204 {offsets = [0, 0, 8], sizes = [2, 8, 8], strides = [1, 1, 1]} : vector<2x8x32xf32> to vector<2x8x8xf32>
    "tpu.trace_start"() <{level = 10 : i32, message = "bqd,bkd->bqk"}> : () -> ()
    %cst_65 = arith.constant dense<0.000000e+00> : vector<2x8x8xf32>
    %224 = tpu.matmul %222, %223, %cst_65 {dimension_numbers = #tpu.dot_dimension_numbers<[2], [2], [1], [1], [0, 0, 0, 1, 1, 1], [0], [0]>} : vector<2x8x8xf32>, vector<2x8x8xf32>, vector<2x8x8xf32> -> vector<2x8x8xf32>
    "tpu.trace_stop"() : () -> ()
    %cst_66 = arith.constant dense<0xFF800000> : vector<2x8xf32>
    %225 = vector.multi_reduction <maximumf>, %224, %cst_66 [2] : vector<2x8x8xf32> to vector<2x8xf32>
    %226 = vector.shape_cast %225 : vector<2x8xf32> to vector<2x8x1xf32>
    %227 = vector.broadcast %226 : vector<2x8x1xf32> to vector<2x8x8xf32>
    %228 = arith.subf %224, %227 : vector<2x8x8xf32>
    %229 = math.exp %228 : vector<2x8x8xf32>
    %cst_67 = arith.constant dense<0.000000e+00> : vector<2x8xf32>
    %230 = vector.multi_reduction <add>, %229, %cst_67 [2] : vector<2x8x8xf32> to vector<2x8xf32>
    %231 = vector.shape_cast %230 : vector<2x8xf32> to vector<2x8x1xf32>
    %232 = tpu.reciprocal %231 {approx = true} : vector<2x8x1xf32> -> vector<2x8x1xf32>
    %233 = vector.broadcast %232 : vector<2x8x1xf32> to vector<2x8x8xf32>
    %234 = arith.mulf %229, %233 : vector<2x8x8xf32>
    %235 = vector.extract_strided_slice %206 {offsets = [0, 0, 8], sizes = [2, 8, 8], strides = [1, 1, 1]} : vector<2x8x32xf32> to vector<2x8x8xf32>
    "tpu.trace_start"() <{level = 10 : i32, message = "bqk,bkd->bqd"}> : () -> ()
    %cst_68 = arith.constant dense<0.000000e+00> : vector<2x8x8xf32>
    %236 = tpu.matmul %234, %235, %cst_68 {dimension_numbers = #tpu.dot_dimension_numbers<[2], [1], [1], [2], [0, 0, 0, 1, 1, 2], [0], [0]>} : vector<2x8x8xf32>, vector<2x8x8xf32>, vector<2x8x8xf32> -> vector<2x8x8xf32>
    "tpu.trace_stop"() : () -> ()
    %237 = vector.extract_strided_slice %202 {offsets = [0, 0, 16], sizes = [2, 8, 8], strides = [1, 1, 1]} : vector<2x8x32xf32> to vector<2x8x8xf32>
    %238 = vector.extract_strided_slice %204 {offsets = [0, 0, 16], sizes = [2, 8, 8], strides = [1, 1, 1]} : vector<2x8x32xf32> to vector<2x8x8xf32>
    "tpu.trace_start"() <{level = 10 : i32, message = "bqd,bkd->bqk"}> : () -> ()
    %cst_69 = arith.constant dense<0.000000e+00> : vector<2x8x8xf32>
    %239 = tpu.matmul %237, %238, %cst_69 {dimension_numbers = #tpu.dot_dimension_numbers<[2], [2], [1], [1], [0, 0, 0, 1, 1, 1], [0], [0]>} : vector<2x8x8xf32>, vector<2x8x8xf32>, vector<2x8x8xf32> -> vector<2x8x8xf32>
    "tpu.trace_stop"() : () -> ()
    %cst_70 = arith.constant dense<0xFF800000> : vector<2x8xf32>
    %240 = vector.multi_reduction <maximumf>, %239, %cst_70 [2] : vector<2x8x8xf32> to vector<2x8xf32>
    %241 = vector.shape_cast %240 : vector<2x8xf32> to vector<2x8x1xf32>
    %242 = vector.broadcast %241 : vector<2x8x1xf32> to vector<2x8x8xf32>
    %243 = arith.subf %239, %242 : vector<2x8x8xf32>
    %244 = math.exp %243 : vector<2x8x8xf32>
    %cst_71 = arith.constant dense<0.000000e+00> : vector<2x8xf32>
    %245 = vector.multi_reduction <add>, %244, %cst_71 [2] : vector<2x8x8xf32> to vector<2x8xf32>
    %246 = vector.shape_cast %245 : vector<2x8xf32> to vector<2x8x1xf32>
    %247 = tpu.reciprocal %246 {approx = true} : vector<2x8x1xf32> -> vector<2x8x1xf32>
    %248 = vector.broadcast %247 : vector<2x8x1xf32> to vector<2x8x8xf32>
    %249 = arith.mulf %244, %248 : vector<2x8x8xf32>
    %250 = vector.extract_strided_slice %206 {offsets = [0, 0, 16], sizes = [2, 8, 8], strides = [1, 1, 1]} : vector<2x8x32xf32> to vector<2x8x8xf32>
    "tpu.trace_start"() <{level = 10 : i32, message = "bqk,bkd->bqd"}> : () -> ()
    %cst_72 = arith.constant dense<0.000000e+00> : vector<2x8x8xf32>
    %251 = tpu.matmul %249, %250, %cst_72 {dimension_numbers = #tpu.dot_dimension_numbers<[2], [1], [1], [2], [0, 0, 0, 1, 1, 2], [0], [0]>} : vector<2x8x8xf32>, vector<2x8x8xf32>, vector<2x8x8xf32> -> vector<2x8x8xf32>
    "tpu.trace_stop"() : () -> ()
    %252 = vector.extract_strided_slice %202 {offsets = [0, 0, 24], sizes = [2, 8, 8], strides = [1, 1, 1]} : vector<2x8x32xf32> to vector<2x8x8xf32>
    %253 = vector.extract_strided_slice %204 {offsets = [0, 0, 24], sizes = [2, 8, 8], strides = [1, 1, 1]} : vector<2x8x32xf32> to vector<2x8x8xf32>
    "tpu.trace_start"() <{level = 10 : i32, message = "bqd,bkd->bqk"}> : () -> ()
    %cst_73 = arith.constant dense<0.000000e+00> : vector<2x8x8xf32>
    %254 = tpu.matmul %252, %253, %cst_73 {dimension_numbers = #tpu.dot_dimension_numbers<[2], [2], [1], [1], [0, 0, 0, 1, 1, 1], [0], [0]>} : vector<2x8x8xf32>, vector<2x8x8xf32>, vector<2x8x8xf32> -> vector<2x8x8xf32>
    "tpu.trace_stop"() : () -> ()
    %cst_74 = arith.constant dense<0xFF800000> : vector<2x8xf32>
    %255 = vector.multi_reduction <maximumf>, %254, %cst_74 [2] : vector<2x8x8xf32> to vector<2x8xf32>
    %256 = vector.shape_cast %255 : vector<2x8xf32> to vector<2x8x1xf32>
    %257 = vector.broadcast %256 : vector<2x8x1xf32> to vector<2x8x8xf32>
    %258 = arith.subf %254, %257 : vector<2x8x8xf32>
    %259 = math.exp %258 : vector<2x8x8xf32>
    %cst_75 = arith.constant dense<0.000000e+00> : vector<2x8xf32>
    %260 = vector.multi_reduction <add>, %259, %cst_75 [2] : vector<2x8x8xf32> to vector<2x8xf32>
    %261 = vector.shape_cast %260 : vector<2x8xf32> to vector<2x8x1xf32>
    %262 = tpu.reciprocal %261 {approx = true} : vector<2x8x1xf32> -> vector<2x8x1xf32>
    %263 = vector.broadcast %262 : vector<2x8x1xf32> to vector<2x8x8xf32>
    %264 = arith.mulf %259, %263 : vector<2x8x8xf32>
    %265 = vector.extract_strided_slice %206 {offsets = [0, 0, 24], sizes = [2, 8, 8], strides = [1, 1, 1]} : vector<2x8x32xf32> to vector<2x8x8xf32>
    "tpu.trace_start"() <{level = 10 : i32, message = "bqk,bkd->bqd"}> : () -> ()
    %cst_76 = arith.constant dense<0.000000e+00> : vector<2x8x8xf32>
    %266 = tpu.matmul %264, %265, %cst_76 {dimension_numbers = #tpu.dot_dimension_numbers<[2], [1], [1], [2], [0, 0, 0, 1, 1, 2], [0], [0]>} : vector<2x8x8xf32>, vector<2x8x8xf32>, vector<2x8x8xf32> -> vector<2x8x8xf32>
    "tpu.trace_stop"() : () -> ()
    %267 = tpu.concatenate %221, %236, %251, %266 in 2 : vector<2x8x8xf32>, vector<2x8x8xf32>, vector<2x8x8xf32>, vector<2x8x8xf32> -> vector<2x8x32xf32>
    %268 = vector.shape_cast %267 : vector<2x8x32xf32> to vector<16x32xf32>
    %269 = vector.extract_strided_slice %184 {offsets = [0, 96], sizes = [32, 32], strides = [1, 1]} : vector<32x192xf32> to vector<32x32xf32>
    %cst_77 = arith.constant dense<0.000000e+00> : vector<16x32xf32>
    %270 = tpu.matmul %268, %269, %cst_77 {dimension_numbers = #tpu.dot_dimension_numbers<[1], [0], [0], [1], [0, 0, 1, 1], [], []>} : vector<16x32xf32>, vector<32x32xf32>, vector<16x32xf32> -> vector<16x32xf32>
    %271 = vector.broadcast %190 : vector<1x32xf32> to vector<16x32xf32>
    %272 = arith.addf %270, %271 : vector<16x32xf32>
    %273 = arith.addf %182, %272 : vector<16x32xf32>
    %cst_78 = arith.constant dense<0.000000e+00> : vector<16xf32>
    %274 = vector.multi_reduction <add>, %273, %cst_78 [1] : vector<16x32xf32> to vector<16xf32>
    %275 = vector.shape_cast %274 : vector<16xf32> to vector<16x1xf32>
    %cst_79 = arith.constant 3.200000e+01 : f32
    %276 = vector.broadcast %cst_79 : f32 to vector<16x1xf32>
    %277 = arith.divf %275, %276 : vector<16x1xf32>
    %278 = vector.broadcast %277 : vector<16x1xf32> to vector<16x32xf32>
    %279 = arith.subf %273, %278 : vector<16x32xf32>
    %280 = arith.mulf %279, %279 : vector<16x32xf32>
    %cst_80 = arith.constant dense<0.000000e+00> : vector<16xf32>
    %281 = vector.multi_reduction <add>, %280, %cst_80 [1] : vector<16x32xf32> to vector<16xf32>
    %282 = vector.shape_cast %281 : vector<16xf32> to vector<16x1xf32>
    %cst_81 = arith.constant 3.200000e+01 : f32
    %283 = vector.broadcast %cst_81 : f32 to vector<16x1xf32>
    %284 = arith.divf %282, %283 : vector<16x1xf32>
    %285 = vector.broadcast %277 : vector<16x1xf32> to vector<16x32xf32>
    %286 = arith.subf %273, %285 : vector<16x32xf32>
    %cst_82 = arith.constant 9.99999996E-13 : f32
    %287 = vector.broadcast %cst_82 : f32 to vector<16x1xf32>
    %288 = arith.addf %284, %287 : vector<16x1xf32>
    %289 = math.rsqrt %288 : vector<16x1xf32>
    %290 = vector.broadcast %289 : vector<16x1xf32> to vector<16x32xf32>
    %291 = arith.mulf %286, %290 : vector<16x32xf32>
    %292 = vector.broadcast %193 : vector<1x32xf32> to vector<16x32xf32>
    %293 = arith.mulf %291, %292 : vector<16x32xf32>
    %294 = vector.broadcast %194 : vector<1x32xf32> to vector<16x32xf32>
    %295 = arith.addf %293, %294 : vector<16x32xf32>
    %296 = vector.extract_strided_slice %184 {offsets = [0, 128], sizes = [32, 64], strides = [1, 1]} : vector<32x192xf32> to vector<32x64xf32>
    %cst_83 = arith.constant dense<0.000000e+00> : vector<16x64xf32>
    %297 = tpu.matmul %295, %296, %cst_83 {dimension_numbers = #tpu.dot_dimension_numbers<[1], [0], [0], [1], [0, 0, 1, 1], [], []>} : vector<16x32xf32>, vector<32x64xf32>, vector<16x64xf32> -> vector<16x64xf32>
    %298 = vector.broadcast %191 : vector<1x64xf32> to vector<16x64xf32>
    %299 = arith.addf %297, %298 : vector<16x64xf32>
    %cst_84 = arith.constant 5.000000e-01 : f32
    %300 = vector.broadcast %cst_84 : f32 to vector<16x64xf32>
    %301 = arith.mulf %300, %299 : vector<16x64xf32>
    %cst_85 = arith.constant 4.471500e-02 : f32
    %302 = vector.broadcast %cst_85 : f32 to vector<16x64xf32>
    %303 = arith.mulf %302, %299 : vector<16x64xf32>
    %304 = arith.mulf %303, %299 : vector<16x64xf32>
    %305 = arith.mulf %304, %299 : vector<16x64xf32>
    %306 = arith.addf %299, %305 : vector<16x64xf32>
    %cst_86 = arith.constant 0.797884583 : f32
    %307 = vector.broadcast %cst_86 : f32 to vector<16x64xf32>
    %308 = arith.mulf %307, %306 : vector<16x64xf32>
    %309 = math.tanh %308 : vector<16x64xf32>
    %cst_87 = arith.constant 1.000000e+00 : f32
    %310 = vector.broadcast %cst_87 : f32 to vector<16x64xf32>
    %311 = arith.addf %310, %309 : vector<16x64xf32>
    %312 = arith.mulf %301, %311 : vector<16x64xf32>
    %cst_88 = arith.constant dense<0.000000e+00> : vector<16x32xf32>
    %313 = tpu.matmul %312, %186, %cst_88 {dimension_numbers = #tpu.dot_dimension_numbers<[1], [0], [0], [1], [0, 0, 1, 1], [], []>} : vector<16x64xf32>, vector<64x32xf32>, vector<16x32xf32> -> vector<16x32xf32>
    %314 = vector.broadcast %192 : vector<1x32xf32> to vector<16x32xf32>
    %315 = arith.addf %313, %314 : vector<16x32xf32>
    %316 = arith.addf %295, %315 : vector<16x32xf32>
    %cst_89 = arith.constant dense<0.000000e+00> : vector<16xf32>
    %317 = vector.multi_reduction <add>, %316, %cst_89 [1] : vector<16x32xf32> to vector<16xf32>
    %318 = vector.shape_cast %317 : vector<16xf32> to vector<16x1xf32>
    %cst_90 = arith.constant 3.200000e+01 : f32
    %319 = vector.broadcast %cst_90 : f32 to vector<16x1xf32>
    %320 = arith.divf %318, %319 : vector<16x1xf32>
    %321 = vector.broadcast %320 : vector<16x1xf32> to vector<16x32xf32>
    %322 = arith.subf %316, %321 : vector<16x32xf32>
    %323 = arith.mulf %322, %322 : vector<16x32xf32>
    %cst_91 = arith.constant dense<0.000000e+00> : vector<16xf32>
    %324 = vector.multi_reduction <add>, %323, %cst_91 [1] : vector<16x32xf32> to vector<16xf32>
    %325 = vector.shape_cast %324 : vector<16xf32> to vector<16x1xf32>
    %cst_92 = arith.constant 3.200000e+01 : f32
    %326 = vector.broadcast %cst_92 : f32 to vector<16x1xf32>
    %327 = arith.divf %325, %326 : vector<16x1xf32>
    %328 = vector.broadcast %320 : vector<16x1xf32> to vector<16x32xf32>
    %329 = arith.subf %316, %328 : vector<16x32xf32>
    %cst_93 = arith.constant 9.99999996E-13 : f32
    %330 = vector.broadcast %cst_93 : f32 to vector<16x1xf32>
    %331 = arith.addf %327, %330 : vector<16x1xf32>
    %332 = math.rsqrt %331 : vector<16x1xf32>
    %333 = vector.broadcast %332 : vector<16x1xf32> to vector<16x32xf32>
    %334 = arith.mulf %329, %333 : vector<16x32xf32>
    %335 = vector.broadcast %195 : vector<1x32xf32> to vector<16x32xf32>
    %336 = arith.mulf %334, %335 : vector<16x32xf32>
    %337 = vector.broadcast %196 : vector<1x32xf32> to vector<16x32xf32>
    %338 = arith.addf %336, %337 : vector<16x32xf32>
    %339 = vector.shape_cast %338 : vector<16x32xf32> to vector<2x8x32xf32>
    %340 = vector.extract_strided_slice %339 {offsets = [0, 0, 0], sizes = [2, 1, 32], strides = [1, 1, 1]} : vector<2x8x32xf32> to vector<2x1x32xf32>
    %341 = vector.shape_cast %340 : vector<2x1x32xf32> to vector<2x32xf32>
    %342 = vector.extract_strided_slice %1 {offsets = [0, 0], sizes = [32, 32], strides = [1, 1]} : vector<32x160xf32> to vector<32x32xf32>
    %cst_94 = arith.constant dense<0.000000e+00> : vector<2x32xf32>
    %343 = tpu.matmul %341, %342, %cst_94 {dimension_numbers = #tpu.dot_dimension_numbers<[1], [0], [0], [1], [0, 0, 1, 1], [], []>} : vector<2x32xf32>, vector<32x32xf32>, vector<2x32xf32> -> vector<2x32xf32>
    %344 = vector.extract_strided_slice %0 {offsets = [2, 0], sizes = [1, 32], strides = [1, 1]} : vector<4x128xf32> to vector<1x32xf32>
    %345 = vector.broadcast %344 : vector<1x32xf32> to vector<2x32xf32>
    %346 = arith.addf %343, %345 : vector<2x32xf32>
    %347 = math.tanh %346 : vector<2x32xf32>
    %348 = vector.extract_strided_slice %1 {offsets = [0, 32], sizes = [32, 128], strides = [1, 1]} : vector<32x160xf32> to vector<32x128xf32>
    %cst_95 = arith.constant dense<0.000000e+00> : vector<2x128xf32>
    %349 = tpu.matmul %347, %348, %cst_95 {dimension_numbers = #tpu.dot_dimension_numbers<[1], [0], [0], [1], [0, 0, 1, 1], [], []>} : vector<2x32xf32>, vector<32x128xf32>, vector<2x128xf32> -> vector<2x128xf32>
    %350 = vector.extract_strided_slice %0 {offsets = [3, 0], sizes = [1, 128], strides = [1, 1]} : vector<4x128xf32> to vector<1x128xf32>
    %351 = vector.broadcast %350 : vector<1x128xf32> to vector<2x128xf32>
    %352 = arith.addf %349, %351 : vector<2x128xf32>
    %cst_96 = arith.constant dense<0xFF800000> : vector<2xf32>
    %353 = vector.multi_reduction <maximumf>, %352, %cst_96 [1] : vector<2x128xf32> to vector<2xf32>
    %354 = vector.shape_cast %353 : vector<2xf32> to vector<2x1xf32>
    %355 = vector.broadcast %354 : vector<2x1xf32> to vector<2x128xf32>
    %356 = arith.subf %352, %355 : vector<2x128xf32>
    %357 = math.exp %356 : vector<2x128xf32>
    %cst_97 = arith.constant dense<0.000000e+00> : vector<2xf32>
    %358 = vector.multi_reduction <add>, %357, %cst_97 [1] : vector<2x128xf32> to vector<2xf32>
    %359 = vector.shape_cast %358 : vector<2xf32> to vector<2x1xf32>
    %360 = tpu.reciprocal %359 : vector<2x1xf32> -> vector<2x1xf32>
    %361 = vector.broadcast %360 : vector<2x1xf32> to vector<2x128xf32>
    %362 = arith.mulf %357, %361 : vector<2x128xf32>
    %c0_98 = arith.constant 0 : index
    %c0_99 = arith.constant 0 : index
    %363 = vector.load %arg7[%c0_98, %c0_99] : memref<2x128xf32, #tpu.memory_space<vmem>>, vector<2x128xf32>
    tpu.vector_store %arg7[%c0_98, %c0_99], %362 {strides = array<i32>} : memref<2x128xf32, #tpu.memory_space<vmem>>, vector<2x128xf32>,
    return
  }
  func.func @transform_0(%arg0: i32) -> (i32, i32) {
    %c0_i32 = arith.constant 0 : i32
    %c0_i32_0 = arith.constant 0 : i32
    %c0_i32_1 = arith.constant 0 : i32
    return %c0_i32, %c0_i32_0 : i32, i32
  }
  func.func @transform_1(%arg0: i32) -> (i32, i32, i32) {
    %c0_i32 = arith.constant 0 : i32
    %c0_i32_0 = arith.constant 0 : i32
    %c0_i32_1 = arith.constant 0 : i32
    %c0_i32_2 = arith.constant 0 : i32
    return %c0_i32, %c0_i32_0, %c0_i32_1 : i32, i32, i32
  }
  func.func @transform_2(%arg0: i32) -> (i32, i32, i32) {
    %c0_i32 = arith.constant 0 : i32
    %c0_i32_0 = arith.constant 0 : i32
    %c0_i32_1 = arith.constant 0 : i32
    %c0_i32_2 = arith.constant 0 : i32
    return %c0_i32, %c0_i32_0, %c0_i32_1 : i32, i32, i32
  }
  func.func @transform_3(%arg0: i32) -> (i32, i32, i32) {
    %c0_i32 = arith.constant 0 : i32
    %c0_i32_0 = arith.constant 0 : i32
    %c0_i32_1 = arith.constant 0 : i32
    %c0_i32_2 = arith.constant 0 : i32
    return %c0_i32, %c0_i32_0, %c0_i32_1 : i32, i32, i32
  }
  func.func @transform_4(%arg0: i32) -> (i32, i32) {
    %c0_i32 = arith.constant 0 : i32
    %c0_i32_0 = arith.constant 0 : i32
    %c0_i32_1 = arith.constant 0 : i32
    return %c0_i32, %c0_i32_0 : i32, i32
  }
  func.func @transform_5(%arg0: i32) -> (i32, i32) {
    %c0_i32 = arith.constant 0 : i32
    %c0_i32_0 = arith.constant 0 : i32
    %c0_i32_1 = arith.constant 0 : i32
    return %c0_i32, %c0_i32_0 : i32, i32
  }
  func.func @transform_6(%arg0: i32) -> (i32, i32) {
    %c0_i32 = arith.constant 0 : i32
    %c0_i32_0 = arith.constant 0 : i32
    %c0_i32_1 = arith.constant 0 : i32
    return %c0_i32, %c0_i32_0 : i32, i32
  }
}

</mosaic_0001>

<llo_original>
// kernel: tpu_custom_call.1
$region0: #{tpu_custom_call.1}
  #allocation0 [shape = 'u32[]', space=smem, size = 0x4, offset = 0x4, fixed_abs, tag = 'smem constant byte address 0x4 - core index']
  #allocation1 [shape = 'u32[144,128]{1,0:T(1,128)}', space=vmem, size = 0x12000, scoped, tag = 'internal scratch']
  %s0 = inlined_call_operand.hbm [shape: f32[16,32], index: 0, kind: input, shape index: {}]
  %s1 = inlined_call_operand.vmem [shape: f32[2,32,192], index: 1, kind: input, shape index: {}]
  %s2 = inlined_call_operand.vmem [shape: f32[2,64,32], index: 2, kind: input, shape index: {}]
  %s3 = inlined_call_operand.hbm [shape: f32[2,8,128], index: 3, kind: input, shape index: {}]
  %s4 = inlined_call_operand.vmem [shape: f32[32,160], index: 4, kind: input, shape index: {}]
  %s5 = inlined_call_operand.vmem [shape: f32[4,128], index: 5, kind: input, shape index: {}]
  %s6 = inlined_call_operand.hbm [shape: f32[2,128], index: 6, kind: output, shape index: {}]
  %s7 = sld [smem:[#allocation0]]
  $region42: #{tpu_custom_call.1} parent=0
    _
  %s9 = ssub.s32 1, %s7
  %s10 = scalar_select 0, %s9, %s7
  $region1: #{tpu_custom_call.1} parent=0
    #allocation2 [shape = 'u8[8192]{0}', space=vmem, size = 0x2000, scoped, tag = 'input window, operand 0, single buffered']
    #allocation3 [shape = 's32[1]{0}', space=sflag, size = 0x4, scoped, tag = 'scoped memory for tpu_custom_call.1']
    #allocation4 [shape = 's32[1]{0}', space=sflag, size = 0x4, scoped, tag = 'scoped memory for tpu_custom_call.1']
    #allocation5 [shape = 'u8[8192]{0}', space=vmem, size = 0x2000, scoped, tag = 'input window, operand 3, single buffered']
    #allocation6 [shape = 's32[1]{0}', space=sflag, size = 0x4, scoped, tag = 'scoped memory for tpu_custom_call.1']
    #allocation7 [shape = 'u8[1024]{0}', space=vmem, size = 0x400, scoped, tag = 'output window, operand 0, single buffered']
    %11 = vsyncpa [#allocation3], 0
    %12 = vsyncpa [#allocation6], 0
    %13 = vsyncpa [#allocation4], 0
    // Predicated region
    $region2: #{tpu_custom_call.1} parent=1 // pred_check
      _
    $region3: #{tpu_custom_call.1} parent=1 // pred_check_branch
      %15 = sbr.rel (0) target = $region5
    $region4: #{tpu_custom_call.1} parent=1 // pred_region
      %s17 = ssub.s32 256, 256
      %18 = vsyncadd [#allocation3], %s17
      %s19 = sshll.u32 [#allocation2], 4
      %s20 = int_to_ptr.vmem [resolvable:$true] %s19
      %25 = dma.hbm_to_vmem [thread:$0]  %s0, 256, %s20, [#allocation3], 128, 128, 8
    $region5: #{tpu_custom_call.1} parent=1 // pred_fallthru
      _
    // Predicated region
    $region6: #{tpu_custom_call.1} parent=1 // pred_check
      _
    $region7: #{tpu_custom_call.1} parent=1 // pred_check_branch
      %27 = sbr.rel (0) target = $region9
    $region8: #{tpu_custom_call.1} parent=1 // pred_region
      _
    $region9: #{tpu_custom_call.1} parent=1 // pred_fallthru
      _
    // Predicated region
    $region10: #{tpu_custom_call.1} parent=1 // pred_check
      _
    $region11: #{tpu_custom_call.1} parent=1 // pred_check_branch
      %29 = sbr.rel (0) target = $region13
    $region12: #{tpu_custom_call.1} parent=1 // pred_region
      _
    $region13: #{tpu_custom_call.1} parent=1 // pred_fallthru
      _
    // Predicated region
    $region14: #{tpu_custom_call.1} parent=1 // pred_check
      _
    $region15: #{tpu_custom_call.1} parent=1 // pred_check_branch
      %31 = sbr.rel (0) target = $region17
    $region16: #{tpu_custom_call.1} parent=1 // pred_region
      %s33 = ssub.s32 256, 256
      %34 = vsyncadd [#allocation6], %s33
      %s35 = sshll.u32 [#allocation5], 4
      %s36 = int_to_ptr.vmem [resolvable:$true] %s35
      %41 = dma.hbm_to_vmem [thread:$0]  %s3, 256, %s36, [#allocation6], 128, 128, 8
    $region17: #{tpu_custom_call.1} parent=1 // pred_fallthru
      _
    // Predicated region
    $region18: #{tpu_custom_call.1} parent=1 // pred_check
      _
    $region19: #{tpu_custom_call.1} parent=1 // pred_check_branch
      %43 = sbr.rel (0) target = $region21
    $region20: #{tpu_custom_call.1} parent=1 // pred_region
      _
    $region21: #{tpu_custom_call.1} parent=1 // pred_fallthru
      _
    // Predicated region
    $region22: #{tpu_custom_call.1} parent=1 // pred_check
      _
    $region23: #{tpu_custom_call.1} parent=1 // pred_check_branch
      %45 = sbr.rel (0) target = $region25
    $region24: #{tpu_custom_call.1} parent=1 // pred_region
      _
    $region25: #{tpu_custom_call.1} parent=1 // pred_fallthru
      _
    // Predicated region
    $region26: #{tpu_custom_call.1} parent=1 // pred_check
      _
    $region27: #{tpu_custom_call.1} parent=1 // pred_check_branch
      %47 = sbr.rel (0) target = $region29
    $region28: #{tpu_custom_call.1} parent=1 // pred_region
      %48 = dma.done [#allocation3], 256
    $region29: #{tpu_custom_call.1} parent=1 // pred_fallthru
      _
    // Predicated region
    $region30: #{tpu_custom_call.1} parent=1 // pred_check
      _
    $region31: #{tpu_custom_call.1} parent=1 // pred_check_branch
      %50 = sbr.rel (0) target = $region33
    $region32: #{tpu_custom_call.1} parent=1 // pred_region
      %51 = dma.done [#allocation6], 256
    $region33: #{tpu_custom_call.1} parent=1 // pred_fallthru
      _
    %v52 = vld [vmem:[%s5] sm:$0xf]
    %v53 = vld [vmem:[%s4] sm:$0xff]
    %v54 = vld [vmem:[%s4 + $0x8] sm:$0xff]
    %v55 = vld [vmem:[%s4 + $0x10] sm:$0xff]
    %v56 = vld [vmem:[%s4 + $0x18] sm:$0xff]
    %v57 = vld [vmem:[%s4 + $0x20] sm:$0xff]
    %v58 = vld [vmem:[%s4 + $0x28] sm:$0xff]
    %v59 = vld [vmem:[%s4 + $0x30] sm:$0xff]
    %v60 = vld [vmem:[%s4 + $0x38] sm:$0xff]
    %v61 = vld [vmem:[#allocation2] sm:$0xff]
    %v62 = vld [vmem:[#allocation2 + $0x8] sm:$0xff]
    %vm63 = vcmask 261120
    %v64 = vsel %vm63, %v61, 0.0
    %65 = vadd.xlane.f32.xlu0 %v64
    %v66 = vpop.xlane.xlu0 %65
    %v67 = vsel %vm63, %v62, 0.0
    %68 = vadd.xlane.f32.xlu0 %v67
    %v69 = vpop.xlane.xlu0 %68
    %v70 = vrcp.pop 32.0
    %v71 = vmul.f32 %v66, %v70
    %v72 = vmul.f32 %v69, %v70
    %v73 = vsub.f32 %v61, %v71
    %v74 = vsub.f32 %v62, %v72
    %v75 = vmul.f32 %v73, %v73
    %v76 = vmul.f32 %v74, %v74
    %v77 = vsel %vm63, %v75, 0.0
    %78 = vadd.xlane.f32.xlu0 %v77
    %v79 = vpop.xlane.xlu0 %78
    %v80 = vsel %vm63, %v76, 0.0
    %81 = vadd.xlane.f32.xlu0 %v80
    %v82 = vpop.xlane.xlu0 %81
    %v83 = vmul.f32 %v79, %v70
    %v84 = vmul.f32 %v82, %v70
    %v85 = vadd.f32 %v83, 1e-12
    %v86 = vadd.f32 %v84, 1e-12
    %v87 = vrsqrt.pop %v85
    %v88 = vrsqrt.pop %v86
    %v89 = vmul.f32 %v73, %v87
    %v90 = vmul.f32 %v74, %v88
    %v91 = vlaneseq
    %v92 = vshrl.u32 %v91, 7
    %v93 = vsub.s32 0, %v92
    %v94 = vrot.slane %v52, %v93
    %v95 = vmul.f32 %v89, %v94
    %v96 = vmul.f32 %v90, %v94
    %v97 = vlaneseq
    %v98 = vshrl.u32 %v97, 7
    %v99 = vsub.s32 1, %v98
    %v100 = vrot.slane %v52, %v99
    %v101 = vadd.f32 %v95, %v100
    %v102 = vadd.f32 %v96, %v100
    %v103 = vld [vmem:[%s1] sm:$0xff]
    %v104 = vld [vmem:[%s1 + $0x8] sm:$0xff]
    %v105 = vld [vmem:[%s1 + $0x10] sm:$0xff]
    %v106 = vld [vmem:[%s1 + $0x18] sm:$0xff]
    %v107 = vld [vmem:[%s1 + $0x20] sm:$0xff]
    %v108 = vld [vmem:[%s1 + $0x28] sm:$0xff]
    %v109 = vld [vmem:[%s1 + $0x30] sm:$0xff]
    %v110 = vld [vmem:[%s1 + $0x38] sm:$0xff]
    %v111 = vld [vmem:[%s2] sm:$0xff]
    %v112 = vld [vmem:[%s2 + $0x8] sm:$0xff]
    %v113 = vld [vmem:[%s2 + $0x10] sm:$0xff]
    %v114 = vld [vmem:[%s2 + $0x18] sm:$0xff]
    %v115 = vld [vmem:[%s2 + $0x20] sm:$0xff]
    %v116 = vld [vmem:[%s2 + $0x28] sm:$0xff]
    %v117 = vld [vmem:[%s2 + $0x30] sm:$0xff]
    %v118 = vld [vmem:[%s2 + $0x38] sm:$0xff]
    %v119 = vld [vmem:[#allocation5] sm:$0xff]
    %v120 = vlaneseq
    %v121 = vshrl.u32 %v120, 7
    %v122 = vsub.s32 0, %v121
    %v123 = vrot.slane %v119, %v122
    %v125 = vsel %vm63, %v101, 0
    %v128 = vsel %vm63, %v102, 0
    %130 = vmatprep.subr.mxu0 0.0
    %131 = vmatpush1.msra.mxu0 0.0
    %132 = vmatprep.subr.mxu0 0.0
    %133 = vmatpush1.msra.mxu0 0.0
    %134 = vmatprep.subr.mxu0 0.0
    %135 = vmatpush1.msra.mxu0 0.0
    %136 = vmatprep.subr.mxu0 0.0
    %137 = vmatpush1.msra.mxu0 0.0
    %138 = vmatprep.subr.mxu0 0.0
    %139 = vmatpush1.msra.mxu0 0.0
    %140 = vmatprep.subr.mxu0 0.0
    %141 = vmatpush1.msra.mxu0 0.0
    %142 = vmatprep.subr.mxu0 0.0
    %143 = vmatpush1.msra.mxu0 0.0
    %144 = vmatprep.subr.mxu0 0.0
    %145 = vmatpush1.msra.mxu0 0.0
    %146 = vmatprep.subr.mxu0 0.0
    %147 = vmatpush1.msra.mxu0 0.0
    %148 = vmatprep.subr.mxu0 0.0
    %149 = vmatpush1.msra.mxu0 0.0
    %150 = vmatprep.subr.mxu0 0.0
    %151 = vmatpush1.msra.mxu0 0.0
    %152 = vmatprep.subr.mxu0 0.0
    %153 = vmatpush1.msra.mxu0 0.0
    %154 = vmatprep.subr.mxu0 0.0
    %155 = vmatpush1.msra.mxu0 %v109
    %156 = vmatprep.subr.mxu0 0.0
    %157 = vmatpush1.msra.mxu0 %v107
    %158 = vmatprep.subr.mxu0 0.0
    %159 = vmatpush1.msra.mxu0 %v105
    %160 = vmatprep.subr.mxu0 0.0
    %161 = vmatpush1.msra.mxu0 %v103
    %162 = vmatprep.subr.mxu0 0.0
    %163 = vmatpush2.msra.mxu0 0.0
    %164 = vmatprep.subr.mxu0 0.0
    %165 = vmatpush2.msra.mxu0 0.0
    %166 = vmatprep.subr.mxu0 0.0
    %167 = vmatpush2.msra.mxu0 0.0
    %168 = vmatprep.subr.mxu0 0.0
    %169 = vmatpush2.msra.mxu0 0.0
    %170 = vmatprep.subr.mxu0 0.0
    %171 = vmatpush2.msra.mxu0 0.0
    %172 = vmatprep.subr.mxu0 0.0
    %173 = vmatpush2.msra.mxu0 0.0
    %174 = vmatprep.subr.mxu0 0.0
    %175 = vmatpush2.msra.mxu0 0.0
    %176 = vmatprep.subr.mxu0 0.0
    %177 = vmatpush2.msra.mxu0 0.0
    %178 = vmatprep.subr.mxu0 0.0
    %179 = vmatpush2.msra.mxu0 0.0
    %180 = vmatprep.subr.mxu0 0.0
    %181 = vmatpush2.msra.mxu0 0.0
    %182 = vmatprep.subr.mxu0 0.0
    %183 = vmatpush2.msra.mxu0 0.0
    %184 = vmatprep.subr.mxu0 0.0
    %185 = vmatpush2.msra.mxu0 0.0
    %186 = vmatprep.subr.mxu0 0.0
    %187 = vmatpush2.msra.mxu0 0.0
    %188 = vmatprep.subr.mxu0 0.0
    %189 = vmatpush2.msra.mxu0 0.0
    %190 = vmatprep.subr.mxu0 0.0
    %191 = vmatpush2.msra.mxu0 0.0
    %192 = vmatprep.subr.mxu0 0.0
    %193 = vmatpush2.msra.mxu0 0.0
    %194 = vmatprep.mubr.f32.mxu0 0.0
    %195 = vmatmul.mubr.f32.gmra.mxu0 %v125
    %v196 = vpop.f32.mrf.mxu0
    %v197 = vadd.f32 %v123, %v196
    %v198 = vpop.f32.mrf.mxu0
    %199 = vmatprep.mubr.f32.mxu0 0.0
    %200 = vmatmul.mubr.f32.gmra.mxu0 %v128
    %v201 = vpop.f32.mrf.mxu0
    %v202 = vadd.f32 %v123, %v201
    %v203 = vpop.f32.mrf.mxu0
    %204 = vdwg.mxu0
    %206 = vrot.lane.b32.xlu0 %v197, 96
    %v207 = vpop.permute.xlu0 %206
    %vm208 = vcmask 64512
    %v209 = vsel %vm208, %v197, 0
    %v211 = vsel %vm208, %v207, 0
    %213 = vmatprep.subr.mxu0 0.0
    %214 = vmatpush1.xpose.msra.mxu0 0.0
    %215 = vmatprep.subr.mxu0 0.0
    %216 = vmatpush1.xpose.msra.mxu0 0.0
    %217 = vmatprep.subr.mxu0 0.0
    %218 = vmatpush1.xpose.msra.mxu0 0.0
    %219 = vmatprep.subr.mxu0 0.0
    %220 = vmatpush1.xpose.msra.mxu0 0.0
    %221 = vmatprep.subr.mxu0 0.0
    %222 = vmatpush1.xpose.msra.mxu0 0.0
    %223 = vmatprep.subr.mxu0 0.0
    %224 = vmatpush1.xpose.msra.mxu0 0.0
    %225 = vmatprep.subr.mxu0 0.0
    %226 = vmatpush1.xpose.msra.mxu0 0.0
    %227 = vmatprep.subr.mxu0 0.0
    %228 = vmatpush1.xpose.msra.mxu0 0.0
    %229 = vmatprep.subr.mxu0 0.0
    %230 = vmatpush1.xpose.msra.mxu0 0.0
    %231 = vmatprep.subr.mxu0 0.0
    %232 = vmatpush1.xpose.msra.mxu0 0.0
    %233 = vmatprep.subr.mxu0 0.0
    %234 = vmatpush1.xpose.msra.mxu0 0.0
    %235 = vmatprep.subr.mxu0 0.0
    %236 = vmatpush1.xpose.msra.mxu0 0.0
    %237 = vmatprep.subr.mxu0 0.0
    %238 = vmatpush1.xpose.msra.mxu0 0.0
    %239 = vmatprep.subr.mxu0 0.0
    %240 = vmatpush1.xpose.msra.mxu0 0.0
    %241 = vmatprep.subr.mxu0 0.0
    %242 = vmatpush1.xpose.msra.mxu0 0.0
    %243 = vmatprep.subr.mxu0 0.0
    %244 = vmatpush1.xpose.msra.mxu0 %v211
    %245 = vmatprep.subr.mxu0 0.0
    %246 = vmatpush2.xpose.msra.mxu0 0.0
    %247 = vmatprep.subr.mxu0 0.0
    %248 = vmatpush2.xpose.msra.mxu0 0.0
    %249 = vmatprep.subr.mxu0 0.0
    %250 = vmatpush2.xpose.msra.mxu0 0.0
    %251 = vmatprep.subr.mxu0 0.0
    %252 = vmatpush2.xpose.msra.mxu0 0.0
    %253 = vmatprep.subr.mxu0 0.0
    %254 = vmatpush2.xpose.msra.mxu0 0.0
    %255 = vmatprep.subr.mxu0 0.0
    %256 = vmatpush2.xpose.msra.mxu0 0.0
    %257 = vmatprep.subr.mxu0 0.0
    %258 = vmatpush2.xpose.msra.mxu0 0.0
    %259 = vmatprep.subr.mxu0 0.0
    %260 = vmatpush2.xpose.msra.mxu0 0.0
    %261 = vmatprep.subr.mxu0 0.0
    %262 = vmatpush2.xpose.msra.mxu0 0.0
    %263 = vmatprep.subr.mxu0 0.0
    %264 = vmatpush2.xpose.msra.mxu0 0.0
    %265 = vmatprep.subr.mxu0 0.0
    %266 = vmatpush2.xpose.msra.mxu0 0.0
    %267 = vmatprep.subr.mxu0 0.0
    %268 = vmatpush2.xpose.msra.mxu0 0.0
    %269 = vmatprep.subr.mxu0 0.0
    %270 = vmatpush2.xpose.msra.mxu0 0.0
    %271 = vmatprep.subr.mxu0 0.0
    %272 = vmatpush2.xpose.msra.mxu0 0.0
    %273 = vmatprep.subr.mxu0 0.0
    %274 = vmatpush2.xpose.msra.mxu0 0.0
    %275 = vmatprep.subr.mxu0 0.0
    %276 = vmatpush2.xpose.msra.mxu0 0.0
    %277 = vmatprep.mubr.f32.mxu0 0.0
    %278 = vmatmul.mubr.f32.gmra.mxu0 %v209
    %v279 = vpop.f32.mrf.mxu0
    %v280 = vadd.f32 0.0, %v279
    %v281 = vpop.f32.mrf.mxu0
    %282 = vdwg.mxu0
    %284 = vrot.lane.b32.xlu0 %v202, 96
    %v285 = vpop.permute.xlu0 %284
    %v286 = vsel %vm208, %v202, 0
    %v288 = vsel %vm208, %v285, 0
    %290 = vmatprep.subr.mxu0 0.0
    %291 = vmatpush1.xpose.msra.mxu0 0.0
    %292 = vmatprep.subr.mxu0 0.0
    %293 = vmatpush1.xpose.msra.mxu0 0.0
    %294 = vmatprep.subr.mxu0 0.0
    %295 = vmatpush1.xpose.msra.mxu0 0.0
    %296 = vmatprep.subr.mxu0 0.0
    %297 = vmatpush1.xpose.msra.mxu0 0.0
    %298 = vmatprep.subr.mxu0 0.0
    %299 = vmatpush1.xpose.msra.mxu0 0.0
    %300 = vmatprep.subr.mxu0 0.0
    %301 = vmatpush1.xpose.msra.mxu0 0.0
    %302 = vmatprep.subr.mxu0 0.0
    %303 = vmatpush1.xpose.msra.mxu0 0.0
    %304 = vmatprep.subr.mxu0 0.0
    %305 = vmatpush1.xpose.msra.mxu0 0.0
    %306 = vmatprep.subr.mxu0 0.0
    %307 = vmatpush1.xpose.msra.mxu0 0.0
    %308 = vmatprep.subr.mxu0 0.0
    %309 = vmatpush1.xpose.msra.mxu0 0.0
    %310 = vmatprep.subr.mxu0 0.0
    %311 = vmatpush1.xpose.msra.mxu0 0.0
    %312 = vmatprep.subr.mxu0 0.0
    %313 = vmatpush1.xpose.msra.mxu0 0.0
    %314 = vmatprep.subr.mxu0 0.0
    %315 = vmatpush1.xpose.msra.mxu0 0.0
    %316 = vmatprep.subr.mxu0 0.0
    %317 = vmatpush1.xpose.msra.mxu0 0.0
    %318 = vmatprep.subr.mxu0 0.0
    %319 = vmatpush1.xpose.msra.mxu0 0.0
    %320 = vmatprep.subr.mxu0 0.0
    %321 = vmatpush1.xpose.msra.mxu0 %v288
    %322 = vmatprep.subr.mxu0 0.0
    %323 = vmatpush2.xpose.msra.mxu0 0.0
    %324 = vmatprep.subr.mxu0 0.0
    %325 = vmatpush2.xpose.msra.mxu0 0.0
    %326 = vmatprep.subr.mxu0 0.0
    %327 = vmatpush2.xpose.msra.mxu0 0.0
    %328 = vmatprep.subr.mxu0 0.0
    %329 = vmatpush2.xpose.msra.mxu0 0.0
    %330 = vmatprep.subr.mxu0 0.0
    %331 = vmatpush2.xpose.msra.mxu0 0.0
    %332 = vmatprep.subr.mxu0 0.0
    %333 = vmatpush2.xpose.msra.mxu0 0.0
    %334 = vmatprep.subr.mxu0 0.0
    %335 = vmatpush2.xpose.msra.mxu0 0.0
    %336 = vmatprep.subr.mxu0 0.0
    %337 = vmatpush2.xpose.msra.mxu0 0.0
    %338 = vmatprep.subr.mxu0 0.0
    %339 = vmatpush2.xpose.msra.mxu0 0.0
    %340 = vmatprep.subr.mxu0 0.0
    %341 = vmatpush2.xpose.msra.mxu0 0.0
    %342 = vmatprep.subr.mxu0 0.0
    %343 = vmatpush2.xpose.msra.mxu0 0.0
    %344 = vmatprep.subr.mxu0 0.0
    %345 = vmatpush2.xpose.msra.mxu0 0.0
    %346 = vmatprep.subr.mxu0 0.0
    %347 = vmatpush2.xpose.msra.mxu0 0.0
    %348 = vmatprep.subr.mxu0 0.0
    %349 = vmatpush2.xpose.msra.mxu0 0.0
    %350 = vmatprep.subr.mxu0 0.0
    %351 = vmatpush2.xpose.msra.mxu0 0.0
    %352 = vmatprep.subr.mxu0 0.0
    %353 = vmatpush2.xpose.msra.mxu0 0.0
    %354 = vmatprep.mubr.f32.mxu0 0.0
    %355 = vmatmul.mubr.f32.gmra.mxu0 %v286
    %v356 = vpop.f32.mrf.mxu0
    %v357 = vadd.f32 0.0, %v356
    %v358 = vpop.f32.mrf.mxu0
    %359 = vdwg.mxu0
    %v360 = vsel %vm208, %v280, -inf
    %361 = vmax.xlane.f32.xlu0 %v360
    %v362 = vpop.xlane.xlu0 %361
    %v363 = vsel %vm208, %v357, -inf
    %364 = vmax.xlane.f32.xlu0 %v363
    %v365 = vpop.xlane.xlu0 %364
    %v366 = vsub.f32 %v280, %v362
    %v367 = vsub.f32 %v357, %v365
    %v368 = vmul.f32 %v366, 1.442695
    %v369 = vpow.pop %v368
    %v370 = vmul.f32 %v367, 1.442695
    %v371 = vpow.pop %v370
    %v372 = vsel %vm208, %v369, 0.0
    %373 = vadd.xlane.f32.xlu0 %v372
    %v374 = vpop.xlane.xlu0 %373
    %v375 = vsel %vm208, %v371, 0.0
    %376 = vadd.xlane.f32.xlu0 %v375
    %v377 = vpop.xlane.xlu0 %376
    %v378 = vrcp.pop %v374
    %v379 = vrcp.pop %v377
    %v380 = vmul.f32 %v369, %v378
    %v381 = vmul.f32 %v371, %v379
    %382 = vrot.lane.b32.xlu0 %v197, 64
    %v383 = vpop.permute.xlu0 %382
    %v386 = vsel %vm208, %v380, 0
    %388 = vmatprep.subr.mxu0 0.0
    %389 = vmatpush1.msra.mxu0 0.0
    %390 = vmatprep.subr.mxu0 0.0
    %391 = vmatpush1.msra.mxu0 0.0
    %392 = vmatprep.subr.mxu0 0.0
    %393 = vmatpush1.msra.mxu0 0.0
    %394 = vmatprep.subr.mxu0 0.0
    %395 = vmatpush1.msra.mxu0 0.0
    %396 = vmatprep.subr.mxu0 0.0
    %397 = vmatpush1.msra.mxu0 0.0
    %398 = vmatprep.subr.mxu0 0.0
    %399 = vmatpush1.msra.mxu0 0.0
    %400 = vmatprep.subr.mxu0 0.0
    %401 = vmatpush1.msra.mxu0 0.0
    %402 = vmatprep.subr.mxu0 0.0
    %403 = vmatpush1.msra.mxu0 0.0
    %404 = vmatprep.subr.mxu0 0.0
    %405 = vmatpush1.msra.mxu0 0.0
    %406 = vmatprep.subr.mxu0 0.0
    %407 = vmatpush1.msra.mxu0 0.0
    %408 = vmatprep.subr.mxu0 0.0
    %409 = vmatpush1.msra.mxu0 0.0
    %410 = vmatprep.subr.mxu0 0.0
    %411 = vmatpush1.msra.mxu0 0.0
    %412 = vmatprep.subr.mxu0 0.0
    %413 = vmatpush1.msra.mxu0 0.0
    %414 = vmatprep.subr.mxu0 0.0
    %415 = vmatpush1.msra.mxu0 0.0
    %416 = vmatprep.subr.mxu0 0.0
    %417 = vmatpush1.msra.mxu0 0.0
    %418 = vmatprep.subr.mxu0 0.0
    %419 = vmatpush1.msra.mxu0 %v383
    %420 = vmatprep.subr.mxu0 0.0
    %421 = vmatpush2.msra.mxu0 0.0
    %422 = vmatprep.subr.mxu0 0.0
    %423 = vmatpush2.msra.mxu0 0.0
    %424 = vmatprep.subr.mxu0 0.0
    %425 = vmatpush2.msra.mxu0 0.0
    %426 = vmatprep.subr.mxu0 0.0
    %427 = vmatpush2.msra.mxu0 0.0
    %428 = vmatprep.subr.mxu0 0.0
    %429 = vmatpush2.msra.mxu0 0.0
    %430 = vmatprep.subr.mxu0 0.0
    %431 = vmatpush2.msra.mxu0 0.0
    %432 = vmatprep.subr.mxu0 0.0
    %433 = vmatpush2.msra.mxu0 0.0
    %434 = vmatprep.subr.mxu0 0.0
    %435 = vmatpush2.msra.mxu0 0.0
    %436 = vmatprep.subr.mxu0 0.0
    %437 = vmatpush2.msra.mxu0 0.0
    %438 = vmatprep.subr.mxu0 0.0
    %439 = vmatpush2.msra.mxu0 0.0
    %440 = vmatprep.subr.mxu0 0.0
    %441 = vmatpush2.msra.mxu0 0.0
    %442 = vmatprep.subr.mxu0 0.0
    %443 = vmatpush2.msra.mxu0 0.0
    %444 = vmatprep.subr.mxu0 0.0
    %445 = vmatpush2.msra.mxu0 0.0
    %446 = vmatprep.subr.mxu0 0.0
    %447 = vmatpush2.msra.mxu0 0.0
    %448 = vmatprep.subr.mxu0 0.0
    %449 = vmatpush2.msra.mxu0 0.0
    %450 = vmatprep.subr.mxu0 0.0
    %451 = vmatpush2.msra.mxu0 0.0
    %452 = vmatprep.mubr.f32.mxu0 0.0
    %453 = vmatmul.mubr.f32.gmra.mxu0 %v386
    %v454 = vpop.f32.mrf.mxu0
    %v455 = vadd.f32 0.0, %v454
    %v456 = vpop.f32.mrf.mxu0
    %457 = vdwg.mxu0
    %458 = vrot.lane.b32.xlu0 %v202, 64
    %v459 = vpop.permute.xlu0 %458
    %v462 = vsel %vm208, %v381, 0
    %464 = vmatprep.subr.mxu0 0.0
    %465 = vmatpush1.msra.mxu0 0.0
    %466 = vmatprep.subr.mxu0 0.0
    %467 = vmatpush1.msra.mxu0 0.0
    %468 = vmatprep.subr.mxu0 0.0
    %469 = vmatpush1.msra.mxu0 0.0
    %470 = vmatprep.subr.mxu0 0.0
    %471 = vmatpush1.msra.mxu0 0.0
    %472 = vmatprep.subr.mxu0 0.0
    %473 = vmatpush1.msra.mxu0 0.0
    %474 = vmatprep.subr.mxu0 0.0
    %475 = vmatpush1.msra.mxu0 0.0
    %476 = vmatprep.subr.mxu0 0.0
    %477 = vmatpush1.msra.mxu0 0.0
    %478 = vmatprep.subr.mxu0 0.0
    %479 = vmatpush1.msra.mxu0 0.0
    %480 = vmatprep.subr.mxu0 0.0
    %481 = vmatpush1.msra.mxu0 0.0
    %482 = vmatprep.subr.mxu0 0.0
    %483 = vmatpush1.msra.mxu0 0.0
    %484 = vmatprep.subr.mxu0 0.0
    %485 = vmatpush1.msra.mxu0 0.0
    %486 = vmatprep.subr.mxu0 0.0
    %487 = vmatpush1.msra.mxu0 0.0
    %488 = vmatprep.subr.mxu0 0.0
    %489 = vmatpush1.msra.mxu0 0.0
    %490 = vmatprep.subr.mxu0 0.0
    %491 = vmatpush1.msra.mxu0 0.0
    %492 = vmatprep.subr.mxu0 0.0
    %493 = vmatpush1.msra.mxu0 0.0
    %494 = vmatprep.subr.mxu0 0.0
    %495 = vmatpush1.msra.mxu0 %v459
    %496 = vmatprep.subr.mxu0 0.0
    %497 = vmatpush2.msra.mxu0 0.0
    %498 = vmatprep.subr.mxu0 0.0
    %499 = vmatpush2.msra.mxu0 0.0
    %500 = vmatprep.subr.mxu0 0.0
    %501 = vmatpush2.msra.mxu0 0.0
    %502 = vmatprep.subr.mxu0 0.0
    %503 = vmatpush2.msra.mxu0 0.0
    %504 = vmatprep.subr.mxu0 0.0
    %505 = vmatpush2.msra.mxu0 0.0
    %506 = vmatprep.subr.mxu0 0.0
    %507 = vmatpush2.msra.mxu0 0.0
    %508 = vmatprep.subr.mxu0 0.0
    %509 = vmatpush2.msra.mxu0 0.0
    %510 = vmatprep.subr.mxu0 0.0
    %511 = vmatpush2.msra.mxu0 0.0
    %512 = vmatprep.subr.mxu0 0.0
    %513 = vmatpush2.msra.mxu0 0.0
    %514 = vmatprep.subr.mxu0 0.0
    %515 = vmatpush2.msra.mxu0 0.0
    %516 = vmatprep.subr.mxu0 0.0
    %517 = vmatpush2.msra.mxu0 0.0
    %518 = vmatprep.subr.mxu0 0.0
    %519 = vmatpush2.msra.mxu0 0.0
    %520 = vmatprep.subr.mxu0 0.0
    %521 = vmatpush2.msra.mxu0 0.0
    %522 = vmatprep.subr.mxu0 0.0
    %523 = vmatpush2.msra.mxu0 0.0
    %524 = vmatprep.subr.mxu0 0.0
    %525 = vmatpush2.msra.mxu0 0.0
    %526 = vmatprep.subr.mxu0 0.0
    %527 = vmatpush2.msra.mxu0 0.0
    %528 = vmatprep.mubr.f32.mxu0 0.0
    %529 = vmatmul.mubr.f32.gmra.mxu0 %v462
    %v530 = vpop.f32.mrf.mxu0
    %v531 = vadd.f32 0.0, %v530
    %v532 = vpop.f32.mrf.mxu0
    %533 = vdwg.mxu0
    %534 = vrot.lane.b32.xlu0 %v197, 120
    %v535 = vpop.permute.xlu0 %534
    %536 = vrot.lane.b32.xlu0 %v197, 88
    %v537 = vpop.permute.xlu0 %536
    %v538 = vsel %vm208, %v535, 0
    %v540 = vsel %vm208, %v537, 0
    %542 = vmatprep.subr.mxu0 0.0
    %543 = vmatpush1.xpose.msra.mxu0 0.0
    %544 = vmatprep.subr.mxu0 0.0
    %545 = vmatpush1.xpose.msra.mxu0 0.0
    %546 = vmatprep.subr.mxu0 0.0
    %547 = vmatpush1.xpose.msra.mxu0 0.0
    %548 = vmatprep.subr.mxu0 0.0
    %549 = vmatpush1.xpose.msra.mxu0 0.0
    %550 = vmatprep.subr.mxu0 0.0
    %551 = vmatpush1.xpose.msra.mxu0 0.0
    %552 = vmatprep.subr.mxu0 0.0
    %553 = vmatpush1.xpose.msra.mxu0 0.0
    %554 = vmatprep.subr.mxu0 0.0
    %555 = vmatpush1.xpose.msra.mxu0 0.0
    %556 = vmatprep.subr.mxu0 0.0
    %557 = vmatpush1.xpose.msra.mxu0 0.0
    %558 = vmatprep.subr.mxu0 0.0
    %559 = vmatpush1.xpose.msra.mxu0 0.0
    %560 = vmatprep.subr.mxu0 0.0
    %561 = vmatpush1.xpose.msra.mxu0 0.0
    %562 = vmatprep.subr.mxu0 0.0
    %563 = vmatpush1.xpose.msra.mxu0 0.0
    %564 = vmatprep.subr.mxu0 0.0
    %565 = vmatpush1.xpose.msra.mxu0 0.0
    %566 = vmatprep.subr.mxu0 0.0
    %567 = vmatpush1.xpose.msra.mxu0 0.0
    %568 = vmatprep.subr.mxu0 0.0
    %569 = vmatpush1.xpose.msra.mxu0 0.0
    %570 = vmatprep.subr.mxu0 0.0
    %571 = vmatpush1.xpose.msra.mxu0 0.0
    %572 = vmatprep.subr.mxu0 0.0
    %573 = vmatpush1.xpose.msra.mxu0 %v540
    %574 = vmatprep.subr.mxu0 0.0
    %575 = vmatpush2.xpose.msra.mxu0 0.0
    %576 = vmatprep.subr.mxu0 0.0
    %577 = vmatpush2.xpose.msra.mxu0 0.0
    %578 = vmatprep.subr.mxu0 0.0
    %579 = vmatpush2.xpose.msra.mxu0 0.0
    %580 = vmatprep.subr.mxu0 0.0
    %581 = vmatpush2.xpose.msra.mxu0 0.0
    %582 = vmatprep.subr.mxu0 0.0
    %583 = vmatpush2.xpose.msra.mxu0 0.0
    %584 = vmatprep.subr.mxu0 0.0
    %585 = vmatpush2.xpose.msra.mxu0 0.0
    %586 = vmatprep.subr.mxu0 0.0
    %587 = vmatpush2.xpose.msra.mxu0 0.0
    %588 = vmatprep.subr.mxu0 0.0
    %589 = vmatpush2.xpose.msra.mxu0 0.0
    %590 = vmatprep.subr.mxu0 0.0
    %591 = vmatpush2.xpose.msra.mxu0 0.0
    %592 = vmatprep.subr.mxu0 0.0
    %593 = vmatpush2.xpose.msra.mxu0 0.0
    %594 = vmatprep.subr.mxu0 0.0
    %595 = vmatpush2.xpose.msra.mxu0 0.0
    %596 = vmatprep.subr.mxu0 0.0
    %597 = vmatpush2.xpose.msra.mxu0 0.0
    %598 = vmatprep.subr.mxu0 0.0
    %599 = vmatpush2.xpose.msra.mxu0 0.0
    %600 = vmatprep.subr.mxu0 0.0
    %601 = vmatpush2.xpose.msra.mxu0 0.0
    %602 = vmatprep.subr.mxu0 0.0
    %603 = vmatpush2.xpose.msra.mxu0 0.0
    %604 = vmatprep.subr.mxu0 0.0
    %605 = vmatpush2.xpose.msra.mxu0 0.0
    %606 = vmatprep.mubr.f32.mxu0 0.0
    %607 = vmatmul.mubr.f32.gmra.mxu0 %v538
    %v608 = vpop.f32.mrf.mxu0
    %v609 = vadd.f32 0.0, %v608
    %v610 = vpop.f32.mrf.mxu0
    %611 = vdwg.mxu0
    %612 = vrot.lane.b32.xlu0 %v202, 120
    %v613 = vpop.permute.xlu0 %612
    %614 = vrot.lane.b32.xlu0 %v202, 88
    %v615 = vpop.permute.xlu0 %614
    %v616 = vsel %vm208, %v613, 0
    %v618 = vsel %vm208, %v615, 0
    %620 = vmatprep.subr.mxu0 0.0
    %621 = vmatpush1.xpose.msra.mxu0 0.0
    %622 = vmatprep.subr.mxu0 0.0
    %623 = vmatpush1.xpose.msra.mxu0 0.0
    %624 = vmatprep.subr.mxu0 0.0
    %625 = vmatpush1.xpose.msra.mxu0 0.0
    %626 = vmatprep.subr.mxu0 0.0
    %627 = vmatpush1.xpose.msra.mxu0 0.0
    %628 = vmatprep.subr.mxu0 0.0
    %629 = vmatpush1.xpose.msra.mxu0 0.0
    %630 = vmatprep.subr.mxu0 0.0
    %631 = vmatpush1.xpose.msra.mxu0 0.0
    %632 = vmatprep.subr.mxu0 0.0
    %633 = vmatpush1.xpose.msra.mxu0 0.0
    %634 = vmatprep.subr.mxu0 0.0
    %635 = vmatpush1.xpose.msra.mxu0 0.0
    %636 = vmatprep.subr.mxu0 0.0
    %637 = vmatpush1.xpose.msra.mxu0 0.0
    %638 = vmatprep.subr.mxu0 0.0
    %639 = vmatpush1.xpose.msra.mxu0 0.0
    %640 = vmatprep.subr.mxu0 0.0
    %641 = vmatpush1.xpose.msra.mxu0 0.0
    %642 = vmatprep.subr.mxu0 0.0
    %643 = vmatpush1.xpose.msra.mxu0 0.0
    %644 = vmatprep.subr.mxu0 0.0
    %645 = vmatpush1.xpose.msra.mxu0 0.0
    %646 = vmatprep.subr.mxu0 0.0
    %647 = vmatpush1.xpose.msra.mxu0 0.0
    %648 = vmatprep.subr.mxu0 0.0
    %649 = vmatpush1.xpose.msra.mxu0 0.0
    %650 = vmatprep.subr.mxu0 0.0
    %651 = vmatpush1.xpose.msra.mxu0 %v618
    %652 = vmatprep.subr.mxu0 0.0
    %653 = vmatpush2.xpose.msra.mxu0 0.0
    %654 = vmatprep.subr.mxu0 0.0
    %655 = vmatpush2.xpose.msra.mxu0 0.0
    %656 = vmatprep.subr.mxu0 0.0
    %657 = vmatpush2.xpose.msra.mxu0 0.0
    %658 = vmatprep.subr.mxu0 0.0
    %659 = vmatpush2.xpose.msra.mxu0 0.0
    %660 = vmatprep.subr.mxu0 0.0
    %661 = vmatpush2.xpose.msra.mxu0 0.0
    %662 = vmatprep.subr.mxu0 0.0
    %663 = vmatpush2.xpose.msra.mxu0 0.0
    %664 = vmatprep.subr.mxu0 0.0
    %665 = vmatpush2.xpose.msra.mxu0 0.0
    %666 = vmatprep.subr.mxu0 0.0
    %667 = vmatpush2.xpose.msra.mxu0 0.0
    %668 = vmatprep.subr.mxu0 0.0
    %669 = vmatpush2.xpose.msra.mxu0 0.0
    %670 = vmatprep.subr.mxu0 0.0
    %671 = vmatpush2.xpose.msra.mxu0 0.0
    %672 = vmatprep.subr.mxu0 0.0
    %673 = vmatpush2.xpose.msra.mxu0 0.0
    %674 = vmatprep.subr.mxu0 0.0
    %675 = vmatpush2.xpose.msra.mxu0 0.0
    %676 = vmatprep.subr.mxu0 0.0
    %677 = vmatpush2.xpose.msra.mxu0 0.0
    %678 = vmatprep.subr.mxu0 0.0
    %679 = vmatpush2.xpose.msra.mxu0 0.0
    %680 = vmatprep.subr.mxu0 0.0
    %681 = vmatpush2.xpose.msra.mxu0 0.0
    %682 = vmatprep.subr.mxu0 0.0
    %683 = vmatpush2.xpose.msra.mxu0 0.0
    %684 = vmatprep.mubr.f32.mxu0 0.0
    %685 = vmatmul.mubr.f32.gmra.mxu0 %v616
    %v686 = vpop.f32.mrf.mxu0
    %v687 = vadd.f32 0.0, %v686
    %v688 = vpop.f32.mrf.mxu0
    %689 = vdwg.mxu0
    %v690 = vsel %vm208, %v609, -inf
    %691 = vmax.xlane.f32.xlu0 %v690
    %v692 = vpop.xlane.xlu0 %691
    %v693 = vsel %vm208, %v687, -inf
    %694 = vmax.xlane.f32.xlu0 %v693
    %v695 = vpop.xlane.xlu0 %694
    %v696 = vsub.f32 %v609, %v692
    %v697 = vsub.f32 %v687, %v695
    %v698 = vmul.f32 %v696, 1.442695
    %v699 = vpow.pop %v698
    %v700 = vmul.f32 %v697, 1.442695
    %v701 = vpow.pop %v700
    %v702 = vsel %vm208, %v699, 0.0
    %703 = vadd.xlane.f32.xlu0 %v702
    %v704 = vpop.xlane.xlu0 %703
    %v705 = vsel %vm208, %v701, 0.0
    %706 = vadd.xlane.f32.xlu0 %v705
    %v707 = vpop.xlane.xlu0 %706
    %v708 = vrcp.pop %v704
    %v709 = vrcp.pop %v707
    %v710 = vmul.f32 %v699, %v708
    %v711 = vmul.f32 %v701, %v709
    %712 = vrot.lane.b32.xlu0 %v197, 56
    %v713 = vpop.permute.xlu0 %712
    %v716 = vsel %vm208, %v710, 0
    %718 = vmatprep.subr.mxu0 0.0
    %719 = vmatpush1.msra.mxu0 0.0
    %720 = vmatprep.subr.mxu0 0.0
    %721 = vmatpush1.msra.mxu0 0.0
    %722 = vmatprep.subr.mxu0 0.0
    %723 = vmatpush1.msra.mxu0 0.0
    %724 = vmatprep.subr.mxu0 0.0
    %725 = vmatpush1.msra.mxu0 0.0
    %726 = vmatprep.subr.mxu0 0.0
    %727 = vmatpush1.msra.mxu0 0.0
    %728 = vmatprep.subr.mxu0 0.0
    %729 = vmatpush1.msra.mxu0 0.0
    %730 = vmatprep.subr.mxu0 0.0
    %731 = vmatpush1.msra.mxu0 0.0
    %732 = vmatprep.subr.mxu0 0.0
    %733 = vmatpush1.msra.mxu0 0.0
    %734 = vmatprep.subr.mxu0 0.0
    %735 = vmatpush1.msra.mxu0 0.0
    %736 = vmatprep.subr.mxu0 0.0
    %737 = vmatpush1.msra.mxu0 0.0
    %738 = vmatprep.subr.mxu0 0.0
    %739 = vmatpush1.msra.mxu0 0.0
    %740 = vmatprep.subr.mxu0 0.0
    %741 = vmatpush1.msra.mxu0 0.0
    %742 = vmatprep.subr.mxu0 0.0
    %743 = vmatpush1.msra.mxu0 0.0
    %744 = vmatprep.subr.mxu0 0.0
    %745 = vmatpush1.msra.mxu0 0.0
    %746 = vmatprep.subr.mxu0 0.0
    %747 = vmatpush1.msra.mxu0 0.0
    %748 = vmatprep.subr.mxu0 0.0
    %749 = vmatpush1.msra.mxu0 %v713
    %750 = vmatprep.subr.mxu0 0.0
    %751 = vmatpush2.msra.mxu0 0.0
    %752 = vmatprep.subr.mxu0 0.0
    %753 = vmatpush2.msra.mxu0 0.0
    %754 = vmatprep.subr.mxu0 0.0
    %755 = vmatpush2.msra.mxu0 0.0
    %756 = vmatprep.subr.mxu0 0.0
    %757 = vmatpush2.msra.mxu0 0.0
    %758 = vmatprep.subr.mxu0 0.0
    %759 = vmatpush2.msra.mxu0 0.0
    %760 = vmatprep.subr.mxu0 0.0
    %761 = vmatpush2.msra.mxu0 0.0
    %762 = vmatprep.subr.mxu0 0.0
    %763 = vmatpush2.msra.mxu0 0.0
    %764 = vmatprep.subr.mxu0 0.0
    %765 = vmatpush2.msra.mxu0 0.0
    %766 = vmatprep.subr.mxu0 0.0
    %767 = vmatpush2.msra.mxu0 0.0
    %768 = vmatprep.subr.mxu0 0.0
    %769 = vmatpush2.msra.mxu0 0.0
    %770 = vmatprep.subr.mxu0 0.0
    %771 = vmatpush2.msra.mxu0 0.0
    %772 = vmatprep.subr.mxu0 0.0
    %773 = vmatpush2.msra.mxu0 0.0
    %774 = vmatprep.subr.mxu0 0.0
    %775 = vmatpush2.msra.mxu0 0.0
    %776 = vmatprep.subr.mxu0 0.0
    %777 = vmatpush2.msra.mxu0 0.0
    %778 = vmatprep.subr.mxu0 0.0
    %779 = vmatpush2.msra.mxu0 0.0
    %780 = vmatprep.subr.mxu0 0.0
    %781 = vmatpush2.msra.mxu0 0.0
    %782 = vmatprep.mubr.f32.mxu0 0.0
    %783 = vmatmul.mubr.f32.gmra.mxu0 %v716
    %v784 = vpop.f32.mrf.mxu0
    %v785 = vadd.f32 0.0, %v784
    %v786 = vpop.f32.mrf.mxu0
    %787 = vdwg.mxu0
    %788 = vrot.lane.b32.xlu0 %v202, 56
    %v789 = vpop.permute.xlu0 %788
    %v792 = vsel %vm208, %v711, 0
    %794 = vmatprep.subr.mxu0 0.0
    %795 = vmatpush1.msra.mxu0 0.0
    %796 = vmatprep.subr.mxu0 0.0
    %797 = vmatpush1.msra.mxu0 0.0
    %798 = vmatprep.subr.mxu0 0.0
    %799 = vmatpush1.msra.mxu0 0.0
    %800 = vmatprep.subr.mxu0 0.0
    %801 = vmatpush1.msra.mxu0 0.0
    %802 = vmatprep.subr.mxu0 0.0
    %803 = vmatpush1.msra.mxu0 0.0
    %804 = vmatprep.subr.mxu0 0.0
    %805 = vmatpush1.msra.mxu0 0.0
    %806 = vmatprep.subr.mxu0 0.0
    %807 = vmatpush1.msra.mxu0 0.0
    %808 = vmatprep.subr.mxu0 0.0
    %809 = vmatpush1.msra.mxu0 0.0
    %810 = vmatprep.subr.mxu0 0.0
    %811 = vmatpush1.msra.mxu0 0.0
    %812 = vmatprep.subr.mxu0 0.0
    %813 = vmatpush1.msra.mxu0 0.0
    %814 = vmatprep.subr.mxu0 0.0
    %815 = vmatpush1.msra.mxu0 0.0
    %816 = vmatprep.subr.mxu0 0.0
    %817 = vmatpush1.msra.mxu0 0.0
    %818 = vmatprep.subr.mxu0 0.0
    %819 = vmatpush1.msra.mxu0 0.0
    %820 = vmatprep.subr.mxu0 0.0
    %821 = vmatpush1.msra.mxu0 0.0
    %822 = vmatprep.subr.mxu0 0.0
    %823 = vmatpush1.msra.mxu0 0.0
    %824 = vmatprep.subr.mxu0 0.0
    %825 = vmatpush1.msra.mxu0 %v789
    %826 = vmatprep.subr.mxu0 0.0
    %827 = vmatpush2.msra.mxu0 0.0
    %828 = vmatprep.subr.mxu0 0.0
    %829 = vmatpush2.msra.mxu0 0.0
    %830 = vmatprep.subr.mxu0 0.0
    %831 = vmatpush2.msra.mxu0 0.0
    %832 = vmatprep.subr.mxu0 0.0
    %833 = vmatpush2.msra.mxu0 0.0
    %834 = vmatprep.subr.mxu0 0.0
    %835 = vmatpush2.msra.mxu0 0.0
    %836 = vmatprep.subr.mxu0 0.0
    %837 = vmatpush2.msra.mxu0 0.0
    %838 = vmatprep.subr.mxu0 0.0
    %839 = vmatpush2.msra.mxu0 0.0
    %840 = vmatprep.subr.mxu0 0.0
    %841 = vmatpush2.msra.mxu0 0.0
    %842 = vmatprep.subr.mxu0 0.0
    %843 = vmatpush2.msra.mxu0 0.0
    %844 = vmatprep.subr.mxu0 0.0
    %845 = vmatpush2.msra.mxu0 0.0
    %846 = vmatprep.subr.mxu0 0.0
    %847 = vmatpush2.msra.mxu0 0.0
    %848 = vmatprep.subr.mxu0 0.0
    %849 = vmatpush2.msra.mxu0 0.0
    %850 = vmatprep.subr.mxu0 0.0
    %851 = vmatpush2.msra.mxu0 0.0
    %852 = vmatprep.subr.mxu0 0.0
    %853 = vmatpush2.msra.mxu0 0.0
    %854 = vmatprep.subr.mxu0 0.0
    %855 = vmatpush2.msra.mxu0 0.0
    %856 = vmatprep.subr.mxu0 0.0
    %857 = vmatpush2.msra.mxu0 0.0
    %858 = vmatprep.mubr.f32.mxu0 0.0
    %859 = vmatmul.mubr.f32.gmra.mxu0 %v792
    %v860 = vpop.f32.mrf.mxu0
    %v861 = vadd.f32 0.0, %v860
    %v862 = vpop.f32.mrf.mxu0
    %863 = vdwg.mxu0
    %864 = vrot.lane.b32.xlu0 %v197, 112
    %v865 = vpop.permute.xlu0 %864
    %866 = vrot.lane.b32.xlu0 %v197, 80
    %v867 = vpop.permute.xlu0 %866
    %v868 = vsel %vm208, %v865, 0
    %v870 = vsel %vm208, %v867, 0
    %872 = vmatprep.subr.mxu0 0.0
    %873 = vmatpush1.xpose.msra.mxu0 0.0
    %874 = vmatprep.subr.mxu0 0.0
    %875 = vmatpush1.xpose.msra.mxu0 0.0
    %876 = vmatprep.subr.mxu0 0.0
    %877 = vmatpush1.xpose.msra.mxu0 0.0
    %878 = vmatprep.subr.mxu0 0.0
    %879 = vmatpush1.xpose.msra.mxu0 0.0
    %880 = vmatprep.subr.mxu0 0.0
    %881 = vmatpush1.xpose.msra.mxu0 0.0
    %882 = vmatprep.subr.mxu0 0.0
    %883 = vmatpush1.xpose.msra.mxu0 0.0
    %884 = vmatprep.subr.mxu0 0.0
    %885 = vmatpush1.xpose.msra.mxu0 0.0
    %886 = vmatprep.subr.mxu0 0.0
    %887 = vmatpush1.xpose.msra.mxu0 0.0
    %888 = vmatprep.subr.mxu0 0.0
    %889 = vmatpush1.xpose.msra.mxu0 0.0
    %890 = vmatprep.subr.mxu0 0.0
    %891 = vmatpush1.xpose.msra.mxu0 0.0
    %892 = vmatprep.subr.mxu0 0.0
    %893 = vmatpush1.xpose.msra.mxu0 0.0
    %894 = vmatprep.subr.mxu0 0.0
    %895 = vmatpush1.xpose.msra.mxu0 0.0
    %896 = vmatprep.subr.mxu0 0.0
    %897 = vmatpush1.xpose.msra.mxu0 0.0
    %898 = vmatprep.subr.mxu0 0.0
    %899 = vmatpush1.xpose.msra.mxu0 0.0
    %900 = vmatprep.subr.mxu0 0.0
    %901 = vmatpush1.xpose.msra.mxu0 0.0
    %902 = vmatprep.subr.mxu0 0.0
    %903 = vmatpush1.xpose.msra.mxu0 %v870
    %904 = vmatprep.subr.mxu0 0.0
    %905 = vmatpush2.xpose.msra.mxu0 0.0
    %906 = vmatprep.subr.mxu0 0.0
    %907 = vmatpush2.xpose.msra.mxu0 0.0
    %908 = vmatprep.subr.mxu0 0.0
    %909 = vmatpush2.xpose.msra.mxu0 0.0
    %910 = vmatprep.subr.mxu0 0.0
    %911 = vmatpush2.xpose.msra.mxu0 0.0
    %912 = vmatprep.subr.mxu0 0.0
    %913 = vmatpush2.xpose.msra.mxu0 0.0
    %914 = vmatprep.subr.mxu0 0.0
    %915 = vmatpush2.xpose.msra.mxu0 0.0
    %916 = vmatprep.subr.mxu0 0.0
    %917 = vmatpush2.xpose.msra.mxu0 0.0
    %918 = vmatprep.subr.mxu0 0.0
    %919 = vmatpush2.xpose.msra.mxu0 0.0
    %920 = vmatprep.subr.mxu0 0.0
    %921 = vmatpush2.xpose.msra.mxu0 0.0
    %922 = vmatprep.subr.mxu0 0.0
    %923 = vmatpush2.xpose.msra.mxu0 0.0
    %924 = vmatprep.subr.mxu0 0.0
    %925 = vmatpush2.xpose.msra.mxu0 0.0
    %926 = vmatprep.subr.mxu0 0.0
    %927 = vmatpush2.xpose.msra.mxu0 0.0
    %928 = vmatprep.subr.mxu0 0.0
    %929 = vmatpush2.xpose.msra.mxu0 0.0
    %930 = vmatprep.subr.mxu0 0.0
    %931 = vmatpush2.xpose.msra.mxu0 0.0
    %932 = vmatprep.subr.mxu0 0.0
    %933 = vmatpush2.xpose.msra.mxu0 0.0
    %934 = vmatprep.subr.mxu0 0.0
    %935 = vmatpush2.xpose.msra.mxu0 0.0
    %936 = vmatprep.mubr.f32.mxu0 0.0
    %937 = vmatmul.mubr.f32.gmra.mxu0 %v868
    %v938 = vpop.f32.mrf.mxu0
    %v939 = vadd.f32 0.0, %v938
    %v940 = vpop.f32.mrf.mxu0
    %941 = vdwg.mxu0
    %942 = vrot.lane.b32.xlu0 %v202, 112
    %v943 = vpop.permute.xlu0 %942
    %944 = vrot.lane.b32.xlu0 %v202, 80
    %v945 = vpop.permute.xlu0 %944
    %v946 = vsel %vm208, %v943, 0
    %v948 = vsel %vm208, %v945, 0
    %950 = vmatprep.subr.mxu0 0.0
    %951 = vmatpush1.xpose.msra.mxu0 0.0
    %952 = vmatprep.subr.mxu0 0.0
    %953 = vmatpush1.xpose.msra.mxu0 0.0
    %954 = vmatprep.subr.mxu0 0.0
    %955 = vmatpush1.xpose.msra.mxu0 0.0
    %956 = vmatprep.subr.mxu0 0.0
    %957 = vmatpush1.xpose.msra.mxu0 0.0
    %958 = vmatprep.subr.mxu0 0.0
    %959 = vmatpush1.xpose.msra.mxu0 0.0
    %960 = vmatprep.subr.mxu0 0.0
    %961 = vmatpush1.xpose.msra.mxu0 0.0
    %962 = vmatprep.subr.mxu0 0.0
    %963 = vmatpush1.xpose.msra.mxu0 0.0
    %964 = vmatprep.subr.mxu0 0.0
    %965 = vmatpush1.xpose.msra.mxu0 0.0
    %966 = vmatprep.subr.mxu0 0.0
    %967 = vmatpush1.xpose.msra.mxu0 0.0
    %968 = vmatprep.subr.mxu0 0.0
    %969 = vmatpush1.xpose.msra.mxu0 0.0
    %970 = vmatprep.subr.mxu0 0.0
    %971 = vmatpush1.xpose.msra.mxu0 0.0
    %972 = vmatprep.subr.mxu0 0.0
    %973 = vmatpush1.xpose.msra.mxu0 0.0
    %974 = vmatprep.subr.mxu0 0.0
    %975 = vmatpush1.xpose.msra.mxu0 0.0
    %976 = vmatprep.subr.mxu0 0.0
    %977 = vmatpush1.xpose.msra.mxu0 0.0
    %978 = vmatprep.subr.mxu0 0.0
    %979 = vmatpush1.xpose.msra.mxu0 0.0
    %980 = vmatprep.subr.mxu0 0.0
    %981 = vmatpush1.xpose.msra.mxu0 %v948
    %982 = vmatprep.subr.mxu0 0.0
    %983 = vmatpush2.xpose.msra.mxu0 0.0
    %984 = vmatprep.subr.mxu0 0.0
    %985 = vmatpush2.xpose.msra.mxu0 0.0
    %986 = vmatprep.subr.mxu0 0.0
    %987 = vmatpush2.xpose.msra.mxu0 0.0
    %988 = vmatprep.subr.mxu0 0.0
    %989 = vmatpush2.xpose.msra.mxu0 0.0
    %990 = vmatprep.subr.mxu0 0.0
    %991 = vmatpush2.xpose.msra.mxu0 0.0
    %992 = vmatprep.subr.mxu0 0.0
    %993 = vmatpush2.xpose.msra.mxu0 0.0
    %994 = vmatprep.subr.mxu0 0.0
    %995 = vmatpush2.xpose.msra.mxu0 0.0
    %996 = vmatprep.subr.mxu0 0.0
    %997 = vmatpush2.xpose.msra.mxu0 0.0
    %998 = vmatprep.subr.mxu0 0.0
    %999 = vmatpush2.xpose.msra.mxu0 0.0
    %1000 = vmatprep.subr.mxu0 0.0
    %1001 = vmatpush2.xpose.msra.mxu0 0.0
    %1002 = vmatprep.subr.mxu0 0.0
    %1003 = vmatpush2.xpose.msra.mxu0 0.0
    %1004 = vmatprep.subr.mxu0 0.0
    %1005 = vmatpush2.xpose.msra.mxu0 0.0
    %1006 = vmatprep.subr.mxu0 0.0
    %1007 = vmatpush2.xpose.msra.mxu0 0.0
    %1008 = vmatprep.subr.mxu0 0.0
    %1009 = vmatpush2.xpose.msra.mxu0 0.0
    %1010 = vmatprep.subr.mxu0 0.0
    %1011 = vmatpush2.xpose.msra.mxu0 0.0
    %1012 = vmatprep.subr.mxu0 0.0
    %1013 = vmatpush2.xpose.msra.mxu0 0.0
    %1014 = vmatprep.mubr.f32.mxu0 0.0
    %1015 = vmatmul.mubr.f32.gmra.mxu0 %v946
    %v1016 = vpop.f32.mrf.mxu0
    %v1017 = vadd.f32 0.0, %v1016
    %v1018 = vpop.f32.mrf.mxu0
    %1019 = vdwg.mxu0
    %v1020 = vsel %vm208, %v939, -inf
    %1021 = vmax.xlane.f32.xlu0 %v1020
    %v1022 = vpop.xlane.xlu0 %1021
    %v1023 = vsel %vm208, %v1017, -inf
    %1024 = vmax.xlane.f32.xlu0 %v1023
    %v1025 = vpop.xlane.xlu0 %1024
    %v1026 = vsub.f32 %v939, %v1022
    %v1027 = vsub.f32 %v1017, %v1025
    %v1028 = vmul.f32 %v1026, 1.442695
    %v1029 = vpow.pop %v1028
    %v1030 = vmul.f32 %v1027, 1.442695
    %v1031 = vpow.pop %v1030
    %v1032 = vsel %vm208, %v1029, 0.0
    %1033 = vadd.xlane.f32.xlu0 %v1032
    %v1034 = vpop.xlane.xlu0 %1033
    %v1035 = vsel %vm208, %v1031, 0.0
    %1036 = vadd.xlane.f32.xlu0 %v1035
    %v1037 = vpop.xlane.xlu0 %1036
    %v1038 = vrcp.pop %v1034
    %v1039 = vrcp.pop %v1037
    %v1040 = vmul.f32 %v1029, %v1038
    %v1041 = vmul.f32 %v1031, %v1039
    %1042 = vrot.lane.b32.xlu0 %v197, 48
    %v1043 = vpop.permute.xlu0 %1042
    %v1046 = vsel %vm208, %v1040, 0
    %1048 = vmatprep.subr.mxu0 0.0
    %1049 = vmatpush1.msra.mxu0 0.0
    %1050 = vmatprep.subr.mxu0 0.0
    %1051 = vmatpush1.msra.mxu0 0.0
    %1052 = vmatprep.subr.mxu0 0.0
    %1053 = vmatpush1.msra.mxu0 0.0
    %1054 = vmatprep.subr.mxu0 0.0
    %1055 = vmatpush1.msra.mxu0 0.0
    %1056 = vmatprep.subr.mxu0 0.0
    %1057 = vmatpush1.msra.mxu0 0.0
    %1058 = vmatprep.subr.mxu0 0.0
    %1059 = vmatpush1.msra.mxu0 0.0
    %1060 = vmatprep.subr.mxu0 0.0
    %1061 = vmatpush1.msra.mxu0 0.0
    %1062 = vmatprep.subr.mxu0 0.0
    %1063 = vmatpush1.msra.mxu0 0.0
    %1064 = vmatprep.subr.mxu0 0.0
    %1065 = vmatpush1.msra.mxu0 0.0
    %1066 = vmatprep.subr.mxu0 0.0
    %1067 = vmatpush1.msra.mxu0 0.0
    %1068 = vmatprep.subr.mxu0 0.0
    %1069 = vmatpush1.msra.mxu0 0.0
    %1070 = vmatprep.subr.mxu0 0.0
    %1071 = vmatpush1.msra.mxu0 0.0
    %1072 = vmatprep.subr.mxu0 0.0
    %1073 = vmatpush1.msra.mxu0 0.0
    %1074 = vmatprep.subr.mxu0 0.0
    %1075 = vmatpush1.msra.mxu0 0.0
    %1076 = vmatprep.subr.mxu0 0.0
    %1077 = vmatpush1.msra.mxu0 0.0
    %1078 = vmatprep.subr.mxu0 0.0
    %1079 = vmatpush1.msra.mxu0 %v1043
    %1080 = vmatprep.subr.mxu0 0.0
    %1081 = vmatpush2.msra.mxu0 0.0
    %1082 = vmatprep.subr.mxu0 0.0
    %1083 = vmatpush2.msra.mxu0 0.0
    %1084 = vmatprep.subr.mxu0 0.0
    %1085 = vmatpush2.msra.mxu0 0.0
    %1086 = vmatprep.subr.mxu0 0.0
    %1087 = vmatpush2.msra.mxu0 0.0
    %1088 = vmatprep.subr.mxu0 0.0
    %1089 = vmatpush2.msra.mxu0 0.0
    %1090 = vmatprep.subr.mxu0 0.0
    %1091 = vmatpush2.msra.mxu0 0.0
    %1092 = vmatprep.subr.mxu0 0.0
    %1093 = vmatpush2.msra.mxu0 0.0
    %1094 = vmatprep.subr.mxu0 0.0
    %1095 = vmatpush2.msra.mxu0 0.0
    %1096 = vmatprep.subr.mxu0 0.0
    %1097 = vmatpush2.msra.mxu0 0.0
    %1098 = vmatprep.subr.mxu0 0.0
    %1099 = vmatpush2.msra.mxu0 0.0
    %1100 = vmatprep.subr.mxu0 0.0
    %1101 = vmatpush2.msra.mxu0 0.0
    %1102 = vmatprep.subr.mxu0 0.0
    %1103 = vmatpush2.msra.mxu0 0.0
    %1104 = vmatprep.subr.mxu0 0.0
    %1105 = vmatpush2.msra.mxu0 0.0
    %1106 = vmatprep.subr.mxu0 0.0
    %1107 = vmatpush2.msra.mxu0 0.0
    %1108 = vmatprep.subr.mxu0 0.0
    %1109 = vmatpush2.msra.mxu0 0.0
    %1110 = vmatprep.subr.mxu0 0.0
    %1111 = vmatpush2.msra.mxu0 0.0
    %1112 = vmatprep.mubr.f32.mxu0 0.0
    %1113 = vmatmul.mubr.f32.gmra.mxu0 %v1046
    %v1114 = vpop.f32.mrf.mxu0
    %v1115 = vadd.f32 0.0, %v1114
    %v1116 = vpop.f32.mrf.mxu0
    %1117 = vdwg.mxu0
    %1118 = vrot.lane.b32.xlu0 %v202, 48
    %v1119 = vpop.permute.xlu0 %1118
    %v1122 = vsel %vm208, %v1041, 0
    %1124 = vmatprep.subr.mxu0 0.0
    %1125 = vmatpush1.msra.mxu0 0.0
    %1126 = vmatprep.subr.mxu0 0.0
    %1127 = vmatpush1.msra.mxu0 0.0
    %1128 = vmatprep.subr.mxu0 0.0
    %1129 = vmatpush1.msra.mxu0 0.0
    %1130 = vmatprep.subr.mxu0 0.0
    %1131 = vmatpush1.msra.mxu0 0.0
    %1132 = vmatprep.subr.mxu0 0.0
    %1133 = vmatpush1.msra.mxu0 0.0
    %1134 = vmatprep.subr.mxu0 0.0
    %1135 = vmatpush1.msra.mxu0 0.0
    %1136 = vmatprep.subr.mxu0 0.0
    %1137 = vmatpush1.msra.mxu0 0.0
    %1138 = vmatprep.subr.mxu0 0.0
    %1139 = vmatpush1.msra.mxu0 0.0
    %1140 = vmatprep.subr.mxu0 0.0
    %1141 = vmatpush1.msra.mxu0 0.0
    %1142 = vmatprep.subr.mxu0 0.0
    %1143 = vmatpush1.msra.mxu0 0.0
    %1144 = vmatprep.subr.mxu0 0.0
    %1145 = vmatpush1.msra.mxu0 0.0
    %1146 = vmatprep.subr.mxu0 0.0
    %1147 = vmatpush1.msra.mxu0 0.0
    %1148 = vmatprep.subr.mxu0 0.0
    %1149 = vmatpush1.msra.mxu0 0.0
    %1150 = vmatprep.subr.mxu0 0.0
    %1151 = vmatpush1.msra.mxu0 0.0
    %1152 = vmatprep.subr.mxu0 0.0
    %1153 = vmatpush1.msra.mxu0 0.0
    %1154 = vmatprep.subr.mxu0 0.0
    %1155 = vmatpush1.msra.mxu0 %v1119
    %1156 = vmatprep.subr.mxu0 0.0
    %1157 = vmatpush2.msra.mxu0 0.0
    %1158 = vmatprep.subr.mxu0 0.0
    %1159 = vmatpush2.msra.mxu0 0.0
    %1160 = vmatprep.subr.mxu0 0.0
    %1161 = vmatpush2.msra.mxu0 0.0
    %1162 = vmatprep.subr.mxu0 0.0
    %1163 = vmatpush2.msra.mxu0 0.0
    %1164 = vmatprep.subr.mxu0 0.0
    %1165 = vmatpush2.msra.mxu0 0.0
    %1166 = vmatprep.subr.mxu0 0.0
    %1167 = vmatpush2.msra.mxu0 0.0
    %1168 = vmatprep.subr.mxu0 0.0
    %1169 = vmatpush2.msra.mxu0 0.0
    %1170 = vmatprep.subr.mxu0 0.0
    %1171 = vmatpush2.msra.mxu0 0.0
    %1172 = vmatprep.subr.mxu0 0.0
    %1173 = vmatpush2.msra.mxu0 0.0
    %1174 = vmatprep.subr.mxu0 0.0
    %1175 = vmatpush2.msra.mxu0 0.0
    %1176 = vmatprep.subr.mxu0 0.0
    %1177 = vmatpush2.msra.mxu0 0.0
    %1178 = vmatprep.subr.mxu0 0.0
    %1179 = vmatpush2.msra.mxu0 0.0
    %1180 = vmatprep.subr.mxu0 0.0
    %1181 = vmatpush2.msra.mxu0 0.0
    %1182 = vmatprep.subr.mxu0 0.0
    %1183 = vmatpush2.msra.mxu0 0.0
    %1184 = vmatprep.subr.mxu0 0.0
    %1185 = vmatpush2.msra.mxu0 0.0
    %1186 = vmatprep.subr.mxu0 0.0
    %1187 = vmatpush2.msra.mxu0 0.0
    %1188 = vmatprep.mubr.f32.mxu0 0.0
    %1189 = vmatmul.mubr.f32.gmra.mxu0 %v1122
    %v1190 = vpop.f32.mrf.mxu0
    %v1191 = vadd.f32 0.0, %v1190
    %v1192 = vpop.f32.mrf.mxu0
    %1193 = vdwg.mxu0
    %1194 = vrot.lane.b32.xlu0 %v197, 104
    %v1195 = vpop.permute.xlu0 %1194
    %1196 = vrot.lane.b32.xlu0 %v197, 72
    %v1197 = vpop.permute.xlu0 %1196
    %v1198 = vsel %vm208, %v1195, 0
    %v1200 = vsel %vm208, %v1197, 0
    %1202 = vmatprep.subr.mxu0 0.0
    %1203 = vmatpush1.xpose.msra.mxu0 0.0
    %1204 = vmatprep.subr.mxu0 0.0
    %1205 = vmatpush1.xpose.msra.mxu0 0.0
    %1206 = vmatprep.subr.mxu0 0.0
    %1207 = vmatpush1.xpose.msra.mxu0 0.0
    %1208 = vmatprep.subr.mxu0 0.0
    %1209 = vmatpush1.xpose.msra.mxu0 0.0
    %1210 = vmatprep.subr.mxu0 0.0
    %1211 = vmatpush1.xpose.msra.mxu0 0.0
    %1212 = vmatprep.subr.mxu0 0.0
    %1213 = vmatpush1.xpose.msra.mxu0 0.0
    %1214 = vmatprep.subr.mxu0 0.0
    %1215 = vmatpush1.xpose.msra.mxu0 0.0
    %1216 = vmatprep.subr.mxu0 0.0
    %1217 = vmatpush1.xpose.msra.mxu0 0.0
    %1218 = vmatprep.subr.mxu0 0.0
    %1219 = vmatpush1.xpose.msra.mxu0 0.0
    %1220 = vmatprep.subr.mxu0 0.0
    %1221 = vmatpush1.xpose.msra.mxu0 0.0
    %1222 = vmatprep.subr.mxu0 0.0
    %1223 = vmatpush1.xpose.msra.mxu0 0.0
    %1224 = vmatprep.subr.mxu0 0.0
    %1225 = vmatpush1.xpose.msra.mxu0 0.0
    %1226 = vmatprep.subr.mxu0 0.0
    %1227 = vmatpush1.xpose.msra.mxu0 0.0
    %1228 = vmatprep.subr.mxu0 0.0
    %1229 = vmatpush1.xpose.msra.mxu0 0.0
    %1230 = vmatprep.subr.mxu0 0.0
    %1231 = vmatpush1.xpose.msra.mxu0 0.0
    %1232 = vmatprep.subr.mxu0 0.0
    %1233 = vmatpush1.xpose.msra.mxu0 %v1200
    %1234 = vmatprep.subr.mxu0 0.0
    %1235 = vmatpush2.xpose.msra.mxu0 0.0
    %1236 = vmatprep.subr.mxu0 0.0
    %1237 = vmatpush2.xpose.msra.mxu0 0.0
    %1238 = vmatprep.subr.mxu0 0.0
    %1239 = vmatpush2.xpose.msra.mxu0 0.0
    %1240 = vmatprep.subr.mxu0 0.0
    %1241 = vmatpush2.xpose.msra.mxu0 0.0
    %1242 = vmatprep.subr.mxu0 0.0
    %1243 = vmatpush2.xpose.msra.mxu0 0.0
    %1244 = vmatprep.subr.mxu0 0.0
    %1245 = vmatpush2.xpose.msra.mxu0 0.0
    %1246 = vmatprep.subr.mxu0 0.0
    %1247 = vmatpush2.xpose.msra.mxu0 0.0
    %1248 = vmatprep.subr.mxu0 0.0
    %1249 = vmatpush2.xpose.msra.mxu0 0.0
    %1250 = vmatprep.subr.mxu0 0.0
    %1251 = vmatpush2.xpose.msra.mxu0 0.0
    %1252 = vmatprep.subr.mxu0 0.0
    %1253 = vmatpush2.xpose.msra.mxu0 0.0
    %1254 = vmatprep.subr.mxu0 0.0
    %1255 = vmatpush2.xpose.msra.mxu0 0.0
    %1256 = vmatprep.subr.mxu0 0.0
    %1257 = vmatpush2.xpose.msra.mxu0 0.0
    %1258 = vmatprep.subr.mxu0 0.0
    %1259 = vmatpush2.xpose.msra.mxu0 0.0
    %1260 = vmatprep.subr.mxu0 0.0
    %1261 = vmatpush2.xpose.msra.mxu0 0.0
    %1262 = vmatprep.subr.mxu0 0.0
    %1263 = vmatpush2.xpose.msra.mxu0 0.0
    %1264 = vmatprep.subr.mxu0 0.0
    %1265 = vmatpush2.xpose.msra.mxu0 0.0
    %1266 = vmatprep.mubr.f32.mxu0 0.0
    %1267 = vmatmul.mubr.f32.gmra.mxu0 %v1198
    %v1268 = vpop.f32.mrf.mxu0
    %v1269 = vadd.f32 0.0, %v1268
    %v1270 = vpop.f32.mrf.mxu0
    %1271 = vdwg.mxu0
    %1272 = vrot.lane.b32.xlu0 %v202, 104
    %v1273 = vpop.permute.xlu0 %1272
    %1274 = vrot.lane.b32.xlu0 %v202, 72
    %v1275 = vpop.permute.xlu0 %1274
    %v1276 = vsel %vm208, %v1273, 0
    %v1278 = vsel %vm208, %v1275, 0
    %1280 = vmatprep.subr.mxu0 0.0
    %1281 = vmatpush1.xpose.msra.mxu0 0.0
    %1282 = vmatprep.subr.mxu0 0.0
    %1283 = vmatpush1.xpose.msra.mxu0 0.0
    %1284 = vmatprep.subr.mxu0 0.0
    %1285 = vmatpush1.xpose.msra.mxu0 0.0
    %1286 = vmatprep.subr.mxu0 0.0
    %1287 = vmatpush1.xpose.msra.mxu0 0.0
    %1288 = vmatprep.subr.mxu0 0.0
    %1289 = vmatpush1.xpose.msra.mxu0 0.0
    %1290 = vmatprep.subr.mxu0 0.0
    %1291 = vmatpush1.xpose.msra.mxu0 0.0
    %1292 = vmatprep.subr.mxu0 0.0
    %1293 = vmatpush1.xpose.msra.mxu0 0.0
    %1294 = vmatprep.subr.mxu0 0.0
    %1295 = vmatpush1.xpose.msra.mxu0 0.0
    %1296 = vmatprep.subr.mxu0 0.0
    %1297 = vmatpush1.xpose.msra.mxu0 0.0
    %1298 = vmatprep.subr.mxu0 0.0
    %1299 = vmatpush1.xpose.msra.mxu0 0.0
    %1300 = vmatprep.subr.mxu0 0.0
    %1301 = vmatpush1.xpose.msra.mxu0 0.0
    %1302 = vmatprep.subr.mxu0 0.0
    %1303 = vmatpush1.xpose.msra.mxu0 0.0
    %1304 = vmatprep.subr.mxu0 0.0
    %1305 = vmatpush1.xpose.msra.mxu0 0.0
    %1306 = vmatprep.subr.mxu0 0.0
    %1307 = vmatpush1.xpose.msra.mxu0 0.0
    %1308 = vmatprep.subr.mxu0 0.0
    %1309 = vmatpush1.xpose.msra.mxu0 0.0
    %1310 = vmatprep.subr.mxu0 0.0
    %1311 = vmatpush1.xpose.msra.mxu0 %v1278
    %1312 = vmatprep.subr.mxu0 0.0
    %1313 = vmatpush2.xpose.msra.mxu0 0.0
    %1314 = vmatprep.subr.mxu0 0.0
    %1315 = vmatpush2.xpose.msra.mxu0 0.0
    %1316 = vmatprep.subr.mxu0 0.0
    %1317 = vmatpush2.xpose.msra.mxu0 0.0
    %1318 = vmatprep.subr.mxu0 0.0
    %1319 = vmatpush2.xpose.msra.mxu0 0.0
    %1320 = vmatprep.subr.mxu0 0.0
    %1321 = vmatpush2.xpose.msra.mxu0 0.0
    %1322 = vmatprep.subr.mxu0 0.0
    %1323 = vmatpush2.xpose.msra.mxu0 0.0
    %1324 = vmatprep.subr.mxu0 0.0
    %1325 = vmatpush2.xpose.msra.mxu0 0.0
    %1326 = vmatprep.subr.mxu0 0.0
    %1327 = vmatpush2.xpose.msra.mxu0 0.0
    %1328 = vmatprep.subr.mxu0 0.0
    %1329 = vmatpush2.xpose.msra.mxu0 0.0
    %1330 = vmatprep.subr.mxu0 0.0
    %1331 = vmatpush2.xpose.msra.mxu0 0.0
    %1332 = vmatprep.subr.mxu0 0.0
    %1333 = vmatpush2.xpose.msra.mxu0 0.0
    %1334 = vmatprep.subr.mxu0 0.0
    %1335 = vmatpush2.xpose.msra.mxu0 0.0
    %1336 = vmatprep.subr.mxu0 0.0
    %1337 = vmatpush2.xpose.msra.mxu0 0.0
    %1338 = vmatprep.subr.mxu0 0.0
    %1339 = vmatpush2.xpose.msra.mxu0 0.0
    %1340 = vmatprep.subr.mxu0 0.0
    %1341 = vmatpush2.xpose.msra.mxu0 0.0
    %1342 = vmatprep.subr.mxu0 0.0
    %1343 = vmatpush2.xpose.msra.mxu0 0.0
    %1344 = vmatprep.mubr.f32.mxu0 0.0
    %1345 = vmatmul.mubr.f32.gmra.mxu0 %v1276
    %v1346 = vpop.f32.mrf.mxu0
    %v1347 = vadd.f32 0.0, %v1346
    %v1348 = vpop.f32.mrf.mxu0
    %1349 = vdwg.mxu0
    %v1350 = vsel %vm208, %v1269, -inf
    %1351 = vmax.xlane.f32.xlu0 %v1350
    %v1352 = vpop.xlane.xlu0 %1351
    %v1353 = vsel %vm208, %v1347, -inf
    %1354 = vmax.xlane.f32.xlu0 %v1353
    %v1355 = vpop.xlane.xlu0 %1354
    %v1356 = vsub.f32 %v1269, %v1352
    %v1357 = vsub.f32 %v1347, %v1355
    %v1358 = vmul.f32 %v1356, 1.442695
    %v1359 = vpow.pop %v1358
    %v1360 = vmul.f32 %v1357, 1.442695
    %v1361 = vpow.pop %v1360
    %v1362 = vsel %vm208, %v1359, 0.0
    %1363 = vadd.xlane.f32.xlu0 %v1362
    %v1364 = vpop.xlane.xlu0 %1363
    %v1365 = vsel %vm208, %v1361, 0.0
    %1366 = vadd.xlane.f32.xlu0 %v1365
    %v1367 = vpop.xlane.xlu0 %1366
    %v1368 = vrcp.pop %v1364
    %v1369 = vrcp.pop %v1367
    %v1370 = vmul.f32 %v1359, %v1368
    %v1371 = vmul.f32 %v1361, %v1369
    %1372 = vrot.lane.b32.xlu0 %v197, 40
    %v1373 = vpop.permute.xlu0 %1372
    %v1376 = vsel %vm208, %v1370, 0
    %1378 = vmatprep.subr.mxu0 0.0
    %1379 = vmatpush1.msra.mxu0 0.0
    %1380 = vmatprep.subr.mxu0 0.0
    %1381 = vmatpush1.msra.mxu0 0.0
    %1382 = vmatprep.subr.mxu0 0.0
    %1383 = vmatpush1.msra.mxu0 0.0
    %1384 = vmatprep.subr.mxu0 0.0
    %1385 = vmatpush1.msra.mxu0 0.0
    %1386 = vmatprep.subr.mxu0 0.0
    %1387 = vmatpush1.msra.mxu0 0.0
    %1388 = vmatprep.subr.mxu0 0.0
    %1389 = vmatpush1.msra.mxu0 0.0
    %1390 = vmatprep.subr.mxu0 0.0
    %1391 = vmatpush1.msra.mxu0 0.0
    %1392 = vmatprep.subr.mxu0 0.0
    %1393 = vmatpush1.msra.mxu0 0.0
    %1394 = vmatprep.subr.mxu0 0.0
    %1395 = vmatpush1.msra.mxu0 0.0
    %1396 = vmatprep.subr.mxu0 0.0
    %1397 = vmatpush1.msra.mxu0 0.0
    %1398 = vmatprep.subr.mxu0 0.0
    %1399 = vmatpush1.msra.mxu0 0.0
    %1400 = vmatprep.subr.mxu0 0.0
    %1401 = vmatpush1.msra.mxu0 0.0
    %1402 = vmatprep.subr.mxu0 0.0
    %1403 = vmatpush1.msra.mxu0 0.0
    %1404 = vmatprep.subr.mxu0 0.0
    %1405 = vmatpush1.msra.mxu0 0.0
    %1406 = vmatprep.subr.mxu0 0.0
    %1407 = vmatpush1.msra.mxu0 0.0
    %1408 = vmatprep.subr.mxu0 0.0
    %1409 = vmatpush1.msra.mxu0 %v1373
    %1410 = vmatprep.subr.mxu0 0.0
    %1411 = vmatpush2.msra.mxu0 0.0
    %1412 = vmatprep.subr.mxu0 0.0
    %1413 = vmatpush2.msra.mxu0 0.0
    %1414 = vmatprep.subr.mxu0 0.0
    %1415 = vmatpush2.msra.mxu0 0.0
    %1416 = vmatprep.subr.mxu0 0.0
    %1417 = vmatpush2.msra.mxu0 0.0
    %1418 = vmatprep.subr.mxu0 0.0
    %1419 = vmatpush2.msra.mxu0 0.0
    %1420 = vmatprep.subr.mxu0 0.0
    %1421 = vmatpush2.msra.mxu0 0.0
    %1422 = vmatprep.subr.mxu0 0.0
    %1423 = vmatpush2.msra.mxu0 0.0
    %1424 = vmatprep.subr.mxu0 0.0
    %1425 = vmatpush2.msra.mxu0 0.0
    %1426 = vmatprep.subr.mxu0 0.0
    %1427 = vmatpush2.msra.mxu0 0.0
    %1428 = vmatprep.subr.mxu0 0.0
    %1429 = vmatpush2.msra.mxu0 0.0
    %1430 = vmatprep.subr.mxu0 0.0
    %1431 = vmatpush2.msra.mxu0 0.0
    %1432 = vmatprep.subr.mxu0 0.0
    %1433 = vmatpush2.msra.mxu0 0.0
    %1434 = vmatprep.subr.mxu0 0.0
    %1435 = vmatpush2.msra.mxu0 0.0
    %1436 = vmatprep.subr.mxu0 0.0
    %1437 = vmatpush2.msra.mxu0 0.0
    %1438 = vmatprep.subr.mxu0 0.0
    %1439 = vmatpush2.msra.mxu0 0.0
    %1440 = vmatprep.subr.mxu0 0.0
    %1441 = vmatpush2.msra.mxu0 0.0
    %1442 = vmatprep.mubr.f32.mxu0 0.0
    %1443 = vmatmul.mubr.f32.gmra.mxu0 %v1376
    %v1444 = vpop.f32.mrf.mxu0
    %v1445 = vadd.f32 0.0, %v1444
    %v1446 = vpop.f32.mrf.mxu0
    %1447 = vdwg.mxu0
    %1448 = vrot.lane.b32.xlu0 %v202, 40
    %v1449 = vpop.permute.xlu0 %1448
    %v1452 = vsel %vm208, %v1371, 0
    %1454 = vmatprep.subr.mxu0 0.0
    %1455 = vmatpush1.msra.mxu0 0.0
    %1456 = vmatprep.subr.mxu0 0.0
    %1457 = vmatpush1.msra.mxu0 0.0
    %1458 = vmatprep.subr.mxu0 0.0
    %1459 = vmatpush1.msra.mxu0 0.0
    %1460 = vmatprep.subr.mxu0 0.0
    %1461 = vmatpush1.msra.mxu0 0.0
    %1462 = vmatprep.subr.mxu0 0.0
    %1463 = vmatpush1.msra.mxu0 0.0
    %1464 = vmatprep.subr.mxu0 0.0
    %1465 = vmatpush1.msra.mxu0 0.0
    %1466 = vmatprep.subr.mxu0 0.0
    %1467 = vmatpush1.msra.mxu0 0.0
    %1468 = vmatprep.subr.mxu0 0.0
    %1469 = vmatpush1.msra.mxu0 0.0
    %1470 = vmatprep.subr.mxu0 0.0
    %1471 = vmatpush1.msra.mxu0 0.0
    %1472 = vmatprep.subr.mxu0 0.0
    %1473 = vmatpush1.msra.mxu0 0.0
    %1474 = vmatprep.subr.mxu0 0.0
    %1475 = vmatpush1.msra.mxu0 0.0
    %1476 = vmatprep.subr.mxu0 0.0
    %1477 = vmatpush1.msra.mxu0 0.0
    %1478 = vmatprep.subr.mxu0 0.0
    %1479 = vmatpush1.msra.mxu0 0.0
    %1480 = vmatprep.subr.mxu0 0.0
    %1481 = vmatpush1.msra.mxu0 0.0
    %1482 = vmatprep.subr.mxu0 0.0
    %1483 = vmatpush1.msra.mxu0 0.0
    %1484 = vmatprep.subr.mxu0 0.0
    %1485 = vmatpush1.msra.mxu0 %v1449
    %1486 = vmatprep.subr.mxu0 0.0
    %1487 = vmatpush2.msra.mxu0 0.0
    %1488 = vmatprep.subr.mxu0 0.0
    %1489 = vmatpush2.msra.mxu0 0.0
    %1490 = vmatprep.subr.mxu0 0.0
    %1491 = vmatpush2.msra.mxu0 0.0
    %1492 = vmatprep.subr.mxu0 0.0
    %1493 = vmatpush2.msra.mxu0 0.0
    %1494 = vmatprep.subr.mxu0 0.0
    %1495 = vmatpush2.msra.mxu0 0.0
    %1496 = vmatprep.subr.mxu0 0.0
    %1497 = vmatpush2.msra.mxu0 0.0
    %1498 = vmatprep.subr.mxu0 0.0
    %1499 = vmatpush2.msra.mxu0 0.0
    %1500 = vmatprep.subr.mxu0 0.0
    %1501 = vmatpush2.msra.mxu0 0.0
    %1502 = vmatprep.subr.mxu0 0.0
    %1503 = vmatpush2.msra.mxu0 0.0
    %1504 = vmatprep.subr.mxu0 0.0
    %1505 = vmatpush2.msra.mxu0 0.0
    %1506 = vmatprep.subr.mxu0 0.0
    %1507 = vmatpush2.msra.mxu0 0.0
    %1508 = vmatprep.subr.mxu0 0.0
    %1509 = vmatpush2.msra.mxu0 0.0
    %1510 = vmatprep.subr.mxu0 0.0
    %1511 = vmatpush2.msra.mxu0 0.0
    %1512 = vmatprep.subr.mxu0 0.0
    %1513 = vmatpush2.msra.mxu0 0.0
    %1514 = vmatprep.subr.mxu0 0.0
    %1515 = vmatpush2.msra.mxu0 0.0
    %1516 = vmatprep.subr.mxu0 0.0
    %1517 = vmatpush2.msra.mxu0 0.0
    %1518 = vmatprep.mubr.f32.mxu0 0.0
    %1519 = vmatmul.mubr.f32.gmra.mxu0 %v1452
    %v1520 = vpop.f32.mrf.mxu0
    %v1521 = vadd.f32 0.0, %v1520
    %v1522 = vpop.f32.mrf.mxu0
    %1523 = vdwg.mxu0
    %1526 = vrot.lane.b32.xlu0 %v785, 8
    %v1527 = vpop.permute.xlu0 %1526
    %1528 = vrot.lane.b32.xlu0 %v861, 8
    %v1529 = vpop.permute.xlu0 %1528
    %1534 = vrot.lane.b32.xlu0 %v1115, 16
    %v1535 = vpop.permute.xlu0 %1534
    %1536 = vrot.lane.b32.xlu0 %v1191, 16
    %v1537 = vpop.permute.xlu0 %1536
    %1542 = vrot.lane.b32.xlu0 %v1445, 24
    %v1543 = vpop.permute.xlu0 %1542
    %1544 = vrot.lane.b32.xlu0 %v1521, 24
    %v1545 = vpop.permute.xlu0 %1544
    %v1548 = vsel %vm208, %v455, %v1527
    %v1549 = vsel %vm208, %v531, %v1529
    %vm1550 = vcmask 130048
    %v1551 = vsel %vm1550, %v1548, %v1535
    %v1552 = vsel %vm1550, %v1549, %v1537
    %vm1553 = vcmask 195584
    %v1554 = vsel %vm1553, %v1551, %v1543
    %v1555 = vsel %vm1553, %v1552, %v1545
    %v1556 = vlaneseq
    %v1557 = vshrl.u32 %v1556, 7
    %v1558 = vsub.s32 1, %v1557
    %v1559 = vrot.slane %v119, %v1558
    %1564 = vrot.lane.b32.xlu0 %v103, 32
    %v1565 = vpop.permute.xlu0 %1564
    %1566 = vrot.lane.b32.xlu0 %v105, 32
    %v1567 = vpop.permute.xlu0 %1566
    %1568 = vrot.lane.b32.xlu0 %v107, 32
    %v1569 = vpop.permute.xlu0 %1568
    %1570 = vrot.lane.b32.xlu0 %v109, 32
    %v1571 = vpop.permute.xlu0 %1570
    %v1577 = vsel %vm63, %v1554, 0
    %v1580 = vsel %vm63, %v1555, 0
    %1582 = vmatprep.subr.mxu0 0.0
    %1583 = vmatpush1.msra.mxu0 0.0
    %1584 = vmatprep.subr.mxu0 0.0
    %1585 = vmatpush1.msra.mxu0 0.0
    %1586 = vmatprep.subr.mxu0 0.0
    %1587 = vmatpush1.msra.mxu0 0.0
    %1588 = vmatprep.subr.mxu0 0.0
    %1589 = vmatpush1.msra.mxu0 0.0
    %1590 = vmatprep.subr.mxu0 0.0
    %1591 = vmatpush1.msra.mxu0 0.0
    %1592 = vmatprep.subr.mxu0 0.0
    %1593 = vmatpush1.msra.mxu0 0.0
    %1594 = vmatprep.subr.mxu0 0.0
    %1595 = vmatpush1.msra.mxu0 0.0
    %1596 = vmatprep.subr.mxu0 0.0
    %1597 = vmatpush1.msra.mxu0 0.0
    %1598 = vmatprep.subr.mxu0 0.0
    %1599 = vmatpush1.msra.mxu0 0.0
    %1600 = vmatprep.subr.mxu0 0.0
    %1601 = vmatpush1.msra.mxu0 0.0
    %1602 = vmatprep.subr.mxu0 0.0
    %1603 = vmatpush1.msra.mxu0 0.0
    %1604 = vmatprep.subr.mxu0 0.0
    %1605 = vmatpush1.msra.mxu0 0.0
    %1606 = vmatprep.subr.mxu0 0.0
    %1607 = vmatpush1.msra.mxu0 %v1571
    %1608 = vmatprep.subr.mxu0 0.0
    %1609 = vmatpush1.msra.mxu0 %v1569
    %1610 = vmatprep.subr.mxu0 0.0
    %1611 = vmatpush1.msra.mxu0 %v1567
    %1612 = vmatprep.subr.mxu0 0.0
    %1613 = vmatpush1.msra.mxu0 %v1565
    %1614 = vmatprep.subr.mxu0 0.0
    %1615 = vmatpush2.msra.mxu0 0.0
    %1616 = vmatprep.subr.mxu0 0.0
    %1617 = vmatpush2.msra.mxu0 0.0
    %1618 = vmatprep.subr.mxu0 0.0
    %1619 = vmatpush2.msra.mxu0 0.0
    %1620 = vmatprep.subr.mxu0 0.0
    %1621 = vmatpush2.msra.mxu0 0.0
    %1622 = vmatprep.subr.mxu0 0.0
    %1623 = vmatpush2.msra.mxu0 0.0
    %1624 = vmatprep.subr.mxu0 0.0
    %1625 = vmatpush2.msra.mxu0 0.0
    %1626 = vmatprep.subr.mxu0 0.0
    %1627 = vmatpush2.msra.mxu0 0.0
    %1628 = vmatprep.subr.mxu0 0.0
    %1629 = vmatpush2.msra.mxu0 0.0
    %1630 = vmatprep.subr.mxu0 0.0
    %1631 = vmatpush2.msra.mxu0 0.0
    %1632 = vmatprep.subr.mxu0 0.0
    %1633 = vmatpush2.msra.mxu0 0.0
    %1634 = vmatprep.subr.mxu0 0.0
    %1635 = vmatpush2.msra.mxu0 0.0
    %1636 = vmatprep.subr.mxu0 0.0
    %1637 = vmatpush2.msra.mxu0 0.0
    %1638 = vmatprep.subr.mxu0 0.0
    %1639 = vmatpush2.msra.mxu0 0.0
    %1640 = vmatprep.subr.mxu0 0.0
    %1641 = vmatpush2.msra.mxu0 0.0
    %1642 = vmatprep.subr.mxu0 0.0
    %1643 = vmatpush2.msra.mxu0 0.0
    %1644 = vmatprep.subr.mxu0 0.0
    %1645 = vmatpush2.msra.mxu0 0.0
    %1646 = vmatprep.mubr.f32.mxu0 0.0
    %1647 = vmatmul.mubr.f32.gmra.mxu0 %v1577
    %v1648 = vpop.f32.mrf.mxu0
    %v1649 = vadd.f32 %v1559, %v1648
    %v1650 = vpop.f32.mrf.mxu0
    %1651 = vmatprep.mubr.f32.mxu0 0.0
    %1652 = vmatmul.mubr.f32.gmra.mxu0 %v1580
    %v1653 = vpop.f32.mrf.mxu0
    %v1654 = vadd.f32 %v1559, %v1653
    %v1655 = vpop.f32.mrf.mxu0
    %1656 = vdwg.mxu0
    %v1657 = vadd.f32 %v101, %v1649
    %v1658 = vadd.f32 %v102, %v1654
    %v1659 = vsel %vm63, %v1657, 0.0
    %1660 = vadd.xlane.f32.xlu0 %v1659
    %v1661 = vpop.xlane.xlu0 %1660
    %v1662 = vsel %vm63, %v1658, 0.0
    %1663 = vadd.xlane.f32.xlu0 %v1662
    %v1664 = vpop.xlane.xlu0 %1663
    %v1665 = vmul.f32 %v1661, %v70
    %v1666 = vmul.f32 %v1664, %v70
    %v1667 = vsub.f32 %v1657, %v1665
    %v1668 = vsub.f32 %v1658, %v1666
    %v1669 = vmul.f32 %v1667, %v1667
    %v1670 = vmul.f32 %v1668, %v1668
    %v1671 = vsel %vm63, %v1669, 0.0
    %1672 = vadd.xlane.f32.xlu0 %v1671
    %v1673 = vpop.xlane.xlu0 %1672
    %v1674 = vsel %vm63, %v1670, 0.0
    %1675 = vadd.xlane.f32.xlu0 %v1674
    %v1676 = vpop.xlane.xlu0 %1675
    %v1677 = vmul.f32 %v1673, %v70
    %v1678 = vmul.f32 %v1676, %v70
    %v1679 = vadd.f32 %v1677, 1e-12
    %v1680 = vadd.f32 %v1678, 1e-12
    %v1681 = vrsqrt.pop %v1679
    %v1682 = vrsqrt.pop %v1680
    %v1683 = vmul.f32 %v1667, %v1681
    %v1684 = vmul.f32 %v1668, %v1682
    %v1685 = vlaneseq
    %v1686 = vshrl.u32 %v1685, 7
    %v1687 = vsub.s32 4, %v1686
    %v1688 = vrot.slane %v119, %v1687
    %v1689 = vmul.f32 %v1683, %v1688
    %v1690 = vmul.f32 %v1684, %v1688
    %v1691 = vlaneseq
    %v1692 = vshrl.u32 %v1691, 7
    %v1693 = vsub.s32 5, %v1692
    %v1694 = vrot.slane %v119, %v1693
    %v1695 = vadd.f32 %v1689, %v1694
    %v1696 = vadd.f32 %v1690, %v1694
    %v1697 = vlaneseq
    %v1698 = vshrl.u32 %v1697, 7
    %v1699 = vsub.s32 2, %v1698
    %v1700 = vrot.slane %v119, %v1699
    %v1702 = vsel %vm63, %v1695, 0
    %v1705 = vsel %vm63, %v1696, 0
    %1707 = vmatprep.subr.mxu0 0.0
    %1708 = vmatpush1.msra.mxu0 0.0
    %1709 = vmatprep.subr.mxu0 0.0
    %1710 = vmatpush1.msra.mxu0 0.0
    %1711 = vmatprep.subr.mxu0 0.0
    %1712 = vmatpush1.msra.mxu0 0.0
    %1713 = vmatprep.subr.mxu0 0.0
    %1714 = vmatpush1.msra.mxu0 0.0
    %1715 = vmatprep.subr.mxu0 0.0
    %1716 = vmatpush1.msra.mxu0 0.0
    %1717 = vmatprep.subr.mxu0 0.0
    %1718 = vmatpush1.msra.mxu0 0.0
    %1719 = vmatprep.subr.mxu0 0.0
    %1720 = vmatpush1.msra.mxu0 0.0
    %1721 = vmatprep.subr.mxu0 0.0
    %1722 = vmatpush1.msra.mxu0 0.0
    %1723 = vmatprep.subr.mxu0 0.0
    %1724 = vmatpush1.msra.mxu0 0.0
    %1725 = vmatprep.subr.mxu0 0.0
    %1726 = vmatpush1.msra.mxu0 0.0
    %1727 = vmatprep.subr.mxu0 0.0
    %1728 = vmatpush1.msra.mxu0 0.0
    %1729 = vmatprep.subr.mxu0 0.0
    %1730 = vmatpush1.msra.mxu0 0.0
    %1731 = vmatprep.subr.mxu0 0.0
    %1732 = vmatpush1.msra.mxu0 %v110
    %1733 = vmatprep.subr.mxu0 0.0
    %1734 = vmatpush1.msra.mxu0 %v108
    %1735 = vmatprep.subr.mxu0 0.0
    %1736 = vmatpush1.msra.mxu0 %v106
    %1737 = vmatprep.subr.mxu0 0.0
    %1738 = vmatpush1.msra.mxu0 %v104
    %1739 = vmatprep.subr.mxu0 0.0
    %1740 = vmatpush2.msra.mxu0 0.0
    %1741 = vmatprep.subr.mxu0 0.0
    %1742 = vmatpush2.msra.mxu0 0.0
    %1743 = vmatprep.subr.mxu0 0.0
    %1744 = vmatpush2.msra.mxu0 0.0
    %1745 = vmatprep.subr.mxu0 0.0
    %1746 = vmatpush2.msra.mxu0 0.0
    %1747 = vmatprep.subr.mxu0 0.0
    %1748 = vmatpush2.msra.mxu0 0.0
    %1749 = vmatprep.subr.mxu0 0.0
    %1750 = vmatpush2.msra.mxu0 0.0
    %1751 = vmatprep.subr.mxu0 0.0
    %1752 = vmatpush2.msra.mxu0 0.0
    %1753 = vmatprep.subr.mxu0 0.0
    %1754 = vmatpush2.msra.mxu0 0.0
    %1755 = vmatprep.subr.mxu0 0.0
    %1756 = vmatpush2.msra.mxu0 0.0
    %1757 = vmatprep.subr.mxu0 0.0
    %1758 = vmatpush2.msra.mxu0 0.0
    %1759 = vmatprep.subr.mxu0 0.0
    %1760 = vmatpush2.msra.mxu0 0.0
    %1761 = vmatprep.subr.mxu0 0.0
    %1762 = vmatpush2.msra.mxu0 0.0
    %1763 = vmatprep.subr.mxu0 0.0
    %1764 = vmatpush2.msra.mxu0 0.0
    %1765 = vmatprep.subr.mxu0 0.0
    %1766 = vmatpush2.msra.mxu0 0.0
    %1767 = vmatprep.subr.mxu0 0.0
    %1768 = vmatpush2.msra.mxu0 0.0
    %1769 = vmatprep.subr.mxu0 0.0
    %1770 = vmatpush2.msra.mxu0 0.0
    %1771 = vmatprep.mubr.f32.mxu0 0.0
    %1772 = vmatmul.mubr.f32.gmra.mxu0 %v1702
    %v1773 = vpop.f32.mrf.mxu0
    %v1774 = vadd.f32 %v1700, %v1773
    %v1775 = vpop.f32.mrf.mxu0
    %1776 = vmatprep.mubr.f32.mxu0 0.0
    %1777 = vmatmul.mubr.f32.gmra.mxu0 %v1705
    %v1778 = vpop.f32.mrf.mxu0
    %v1779 = vadd.f32 %v1700, %v1778
    %v1780 = vpop.f32.mrf.mxu0
    %1781 = vdwg.mxu0
    %v1782 = vmul.f32 %v1774, 0.5
    %v1783 = vmul.f32 %v1779, 0.5
    %v1784 = vmul.f32 %v1774, 0.044715
    %v1785 = vmul.f32 %v1779, 0.044715
    %v1786 = vmul.f32 %v1784, %v1774
    %v1787 = vmul.f32 %v1785, %v1779
    %v1788 = vmul.f32 %v1786, %v1774
    %v1789 = vmul.f32 %v1787, %v1779
    %v1790 = vadd.f32 %v1774, %v1788
    %v1791 = vadd.f32 %v1779, %v1789
    %v1792 = vmul.f32 %v1790, 0.7978846
    %v1793 = vmul.f32 %v1791, 0.7978846
    %v1794 = vtanh.pop %v1792
    %v1795 = vtanh.pop %v1793
    %v1796 = vadd.f32 %v1794, 1.0
    %v1797 = vadd.f32 %v1795, 1.0
    %v1798 = vmul.f32 %v1782, %v1796
    %v1799 = vmul.f32 %v1783, %v1797
    %v1800 = vlaneseq
    %v1801 = vshrl.u32 %v1800, 7
    %v1802 = vsub.s32 3, %v1801
    %v1803 = vrot.slane %v119, %v1802
    %vm1804 = vcmask 523264
    %v1806 = vsel %vm1804, %v1798, 0
    %v1809 = vsel %vm1804, %v1799, 0
    %1811 = vmatprep.subr.mxu0 0.0
    %1812 = vmatpush1.msra.mxu0 0.0
    %1813 = vmatprep.subr.mxu0 0.0
    %1814 = vmatpush1.msra.mxu0 0.0
    %1815 = vmatprep.subr.mxu0 0.0
    %1816 = vmatpush1.msra.mxu0 0.0
    %1817 = vmatprep.subr.mxu0 0.0
    %1818 = vmatpush1.msra.mxu0 0.0
    %1819 = vmatprep.subr.mxu0 0.0
    %1820 = vmatpush1.msra.mxu0 0.0
    %1821 = vmatprep.subr.mxu0 0.0
    %1822 = vmatpush1.msra.mxu0 0.0
    %1823 = vmatprep.subr.mxu0 0.0
    %1824 = vmatpush1.msra.mxu0 0.0
    %1825 = vmatprep.subr.mxu0 0.0
    %1826 = vmatpush1.msra.mxu0 0.0
    %1827 = vmatprep.subr.mxu0 0.0
    %1828 = vmatpush1.msra.mxu0 %v118
    %1829 = vmatprep.subr.mxu0 0.0
    %1830 = vmatpush1.msra.mxu0 %v117
    %1831 = vmatprep.subr.mxu0 0.0
    %1832 = vmatpush1.msra.mxu0 %v116
    %1833 = vmatprep.subr.mxu0 0.0
    %1834 = vmatpush1.msra.mxu0 %v115
    %1835 = vmatprep.subr.mxu0 0.0
    %1836 = vmatpush1.msra.mxu0 %v114
    %1837 = vmatprep.subr.mxu0 0.0
    %1838 = vmatpush1.msra.mxu0 %v113
    %1839 = vmatprep.subr.mxu0 0.0
    %1840 = vmatpush1.msra.mxu0 %v112
    %1841 = vmatprep.subr.mxu0 0.0
    %1842 = vmatpush1.msra.mxu0 %v111
    %1843 = vmatprep.subr.mxu0 0.0
    %1844 = vmatpush2.msra.mxu0 0.0
    %1845 = vmatprep.subr.mxu0 0.0
    %1846 = vmatpush2.msra.mxu0 0.0
    %1847 = vmatprep.subr.mxu0 0.0
    %1848 = vmatpush2.msra.mxu0 0.0
    %1849 = vmatprep.subr.mxu0 0.0
    %1850 = vmatpush2.msra.mxu0 0.0
    %1851 = vmatprep.subr.mxu0 0.0
    %1852 = vmatpush2.msra.mxu0 0.0
    %1853 = vmatprep.subr.mxu0 0.0
    %1854 = vmatpush2.msra.mxu0 0.0
    %1855 = vmatprep.subr.mxu0 0.0
    %1856 = vmatpush2.msra.mxu0 0.0
    %1857 = vmatprep.subr.mxu0 0.0
    %1858 = vmatpush2.msra.mxu0 0.0
    %1859 = vmatprep.subr.mxu0 0.0
    %1860 = vmatpush2.msra.mxu0 0.0
    %1861 = vmatprep.subr.mxu0 0.0
    %1862 = vmatpush2.msra.mxu0 0.0
    %1863 = vmatprep.subr.mxu0 0.0
    %1864 = vmatpush2.msra.mxu0 0.0
    %1865 = vmatprep.subr.mxu0 0.0
    %1866 = vmatpush2.msra.mxu0 0.0
    %1867 = vmatprep.subr.mxu0 0.0
    %1868 = vmatpush2.msra.mxu0 0.0
    %1869 = vmatprep.subr.mxu0 0.0
    %1870 = vmatpush2.msra.mxu0 0.0
    %1871 = vmatprep.subr.mxu0 0.0
    %1872 = vmatpush2.msra.mxu0 0.0
    %1873 = vmatprep.subr.mxu0 0.0
    %1874 = vmatpush2.msra.mxu0 0.0
    %1875 = vmatprep.mubr.f32.mxu0 0.0
    %1876 = vmatmul.mubr.f32.gmra.mxu0 %v1806
    %v1877 = vpop.f32.mrf.mxu0
    %v1878 = vadd.f32 %v1803, %v1877
    %v1879 = vpop.f32.mrf.mxu0
    %1880 = vmatprep.mubr.f32.mxu0 0.0
    %1881 = vmatmul.mubr.f32.gmra.mxu0 %v1809
    %v1882 = vpop.f32.mrf.mxu0
    %v1883 = vadd.f32 %v1803, %v1882
    %v1884 = vpop.f32.mrf.mxu0
    %1885 = vdwg.mxu0
    %v1886 = vadd.f32 %v1695, %v1878
    %v1887 = vadd.f32 %v1696, %v1883
    %v1888 = vsel %vm63, %v1886, 0.0
    %1889 = vadd.xlane.f32.xlu0 %v1888
    %v1890 = vpop.xlane.xlu0 %1889
    %v1891 = vsel %vm63, %v1887, 0.0
    %1892 = vadd.xlane.f32.xlu0 %v1891
    %v1893 = vpop.xlane.xlu0 %1892
    %v1894 = vmul.f32 %v1890, %v70
    %v1895 = vmul.f32 %v1893, %v70
    %v1896 = vsub.f32 %v1886, %v1894
    %v1897 = vsub.f32 %v1887, %v1895
    %v1898 = vmul.f32 %v1896, %v1896
    %v1899 = vmul.f32 %v1897, %v1897
    %v1900 = vsel %vm63, %v1898, 0.0
    %1901 = vadd.xlane.f32.xlu0 %v1900
    %v1902 = vpop.xlane.xlu0 %1901
    %v1903 = vsel %vm63, %v1899, 0.0
    %1904 = vadd.xlane.f32.xlu0 %v1903
    %v1905 = vpop.xlane.xlu0 %1904
    %v1906 = vmul.f32 %v1902, %v70
    %v1907 = vmul.f32 %v1905, %v70
    %v1908 = vadd.f32 %v1906, 1e-12
    %v1909 = vadd.f32 %v1907, 1e-12
    %v1910 = vrsqrt.pop %v1908
    %v1911 = vrsqrt.pop %v1909
    %v1912 = vmul.f32 %v1896, %v1910
    %v1913 = vmul.f32 %v1897, %v1911
    %v1914 = vlaneseq
    %v1915 = vshrl.u32 %v1914, 7
    %v1916 = vsub.s32 6, %v1915
    %v1917 = vrot.slane %v119, %v1916
    %v1918 = vmul.f32 %v1912, %v1917
    %v1919 = vmul.f32 %v1913, %v1917
    %v1920 = vlaneseq
    %v1921 = vshrl.u32 %v1920, 7
    %v1922 = vsub.s32 7, %v1921
    %v1923 = vrot.slane %v119, %v1922
    %v1924 = vadd.f32 %v1918, %v1923
    %v1925 = vadd.f32 %v1919, %v1923
    %s1926 = scalar_lea.vmem %s1, 64
    %v1927 = vld [vmem:[%s1926] sm:$0xff]
    %v1928 = vld [vmem:[%s1926 + $0x8] sm:$0xff]
    %v1929 = vld [vmem:[%s1926 + $0x10] sm:$0xff]
    %v1930 = vld [vmem:[%s1926 + $0x18] sm:$0xff]
    %v1931 = vld [vmem:[%s1926 + $0x20] sm:$0xff]
    %v1932 = vld [vmem:[%s1926 + $0x28] sm:$0xff]
    %v1933 = vld [vmem:[%s1926 + $0x30] sm:$0xff]
    %v1934 = vld [vmem:[%s1926 + $0x38] sm:$0xff]
    %s1935 = scalar_lea.vmem %s2, 64
    %v1936 = vld [vmem:[%s1935] sm:$0xff]
    %v1937 = vld [vmem:[%s1935 + $0x8] sm:$0xff]
    %v1938 = vld [vmem:[%s1935 + $0x10] sm:$0xff]
    %v1939 = vld [vmem:[%s1935 + $0x18] sm:$0xff]
    %v1940 = vld [vmem:[%s1935 + $0x20] sm:$0xff]
    %v1941 = vld [vmem:[%s1935 + $0x28] sm:$0xff]
    %v1942 = vld [vmem:[%s1935 + $0x30] sm:$0xff]
    %v1943 = vld [vmem:[%s1935 + $0x38] sm:$0xff]
    %s1944 = scalar_lea.vmem [#allocation5], 8
    %v1945 = vld [vmem:[%s1944] sm:$0xff]
    %v1946 = vlaneseq
    %v1947 = vshrl.u32 %v1946, 7
    %v1948 = vsub.s32 0, %v1947
    %v1949 = vrot.slane %v1945, %v1948
    %v1951 = vsel %vm63, %v1924, 0
    %v1954 = vsel %vm63, %v1925, 0
    %1956 = vmatprep.subr.mxu0 0.0
    %1957 = vmatpush1.msra.mxu0 0.0
    %1958 = vmatprep.subr.mxu0 0.0
    %1959 = vmatpush1.msra.mxu0 0.0
    %1960 = vmatprep.subr.mxu0 0.0
    %1961 = vmatpush1.msra.mxu0 0.0
    %1962 = vmatprep.subr.mxu0 0.0
    %1963 = vmatpush1.msra.mxu0 0.0
    %1964 = vmatprep.subr.mxu0 0.0
    %1965 = vmatpush1.msra.mxu0 0.0
    %1966 = vmatprep.subr.mxu0 0.0
    %1967 = vmatpush1.msra.mxu0 0.0
    %1968 = vmatprep.subr.mxu0 0.0
    %1969 = vmatpush1.msra.mxu0 0.0
    %1970 = vmatprep.subr.mxu0 0.0
    %1971 = vmatpush1.msra.mxu0 0.0
    %1972 = vmatprep.subr.mxu0 0.0
    %1973 = vmatpush1.msra.mxu0 0.0
    %1974 = vmatprep.subr.mxu0 0.0
    %1975 = vmatpush1.msra.mxu0 0.0
    %1976 = vmatprep.subr.mxu0 0.0
    %1977 = vmatpush1.msra.mxu0 0.0
    %1978 = vmatprep.subr.mxu0 0.0
    %1979 = vmatpush1.msra.mxu0 0.0
    %1980 = vmatprep.subr.mxu0 0.0
    %1981 = vmatpush1.msra.mxu0 %v1933
    %1982 = vmatprep.subr.mxu0 0.0
    %1983 = vmatpush1.msra.mxu0 %v1931
    %1984 = vmatprep.subr.mxu0 0.0
    %1985 = vmatpush1.msra.mxu0 %v1929
    %1986 = vmatprep.subr.mxu0 0.0
    %1987 = vmatpush1.msra.mxu0 %v1927
    %1988 = vmatprep.subr.mxu0 0.0
    %1989 = vmatpush2.msra.mxu0 0.0
    %1990 = vmatprep.subr.mxu0 0.0
    %1991 = vmatpush2.msra.mxu0 0.0
    %1992 = vmatprep.subr.mxu0 0.0
    %1993 = vmatpush2.msra.mxu0 0.0
    %1994 = vmatprep.subr.mxu0 0.0
    %1995 = vmatpush2.msra.mxu0 0.0
    %1996 = vmatprep.subr.mxu0 0.0
    %1997 = vmatpush2.msra.mxu0 0.0
    %1998 = vmatprep.subr.mxu0 0.0
    %1999 = vmatpush2.msra.mxu0 0.0
    %2000 = vmatprep.subr.mxu0 0.0
    %2001 = vmatpush2.msra.mxu0 0.0
    %2002 = vmatprep.subr.mxu0 0.0
    %2003 = vmatpush2.msra.mxu0 0.0
    %2004 = vmatprep.subr.mxu0 0.0
    %2005 = vmatpush2.msra.mxu0 0.0
    %2006 = vmatprep.subr.mxu0 0.0
    %2007 = vmatpush2.msra.mxu0 0.0
    %2008 = vmatprep.subr.mxu0 0.0
    %2009 = vmatpush2.msra.mxu0 0.0
    %2010 = vmatprep.subr.mxu0 0.0
    %2011 = vmatpush2.msra.mxu0 0.0
    %2012 = vmatprep.subr.mxu0 0.0
    %2013 = vmatpush2.msra.mxu0 0.0
    %2014 = vmatprep.subr.mxu0 0.0
    %2015 = vmatpush2.msra.mxu0 0.0
    %2016 = vmatprep.subr.mxu0 0.0
    %2017 = vmatpush2.msra.mxu0 0.0
    %2018 = vmatprep.subr.mxu0 0.0
    %2019 = vmatpush2.msra.mxu0 0.0
    %2020 = vmatprep.mubr.f32.mxu0 0.0
    %2021 = vmatmul.mubr.f32.gmra.mxu0 %v1951
    %v2022 = vpop.f32.mrf.mxu0
    %v2023 = vadd.f32 %v1949, %v2022
    %v2024 = vpop.f32.mrf.mxu0
    %2025 = vmatprep.mubr.f32.mxu0 0.0
    %2026 = vmatmul.mubr.f32.gmra.mxu0 %v1954
    %v2027 = vpop.f32.mrf.mxu0
    %v2028 = vadd.f32 %v1949, %v2027
    %v2029 = vpop.f32.mrf.mxu0
    %2030 = vdwg.mxu0
    %2032 = vrot.lane.b32.xlu0 %v2023, 96
    %v2033 = vpop.permute.xlu0 %2032
    %v2034 = vsel %vm208, %v2023, 0
    %v2036 = vsel %vm208, %v2033, 0
    %2038 = vmatprep.subr.mxu0 0.0
    %2039 = vmatpush1.xpose.msra.mxu0 0.0
    %2040 = vmatprep.subr.mxu0 0.0
    %2041 = vmatpush1.xpose.msra.mxu0 0.0
    %2042 = vmatprep.subr.mxu0 0.0
    %2043 = vmatpush1.xpose.msra.mxu0 0.0
    %2044 = vmatprep.subr.mxu0 0.0
    %2045 = vmatpush1.xpose.msra.mxu0 0.0
    %2046 = vmatprep.subr.mxu0 0.0
    %2047 = vmatpush1.xpose.msra.mxu0 0.0
    %2048 = vmatprep.subr.mxu0 0.0
    %2049 = vmatpush1.xpose.msra.mxu0 0.0
    %2050 = vmatprep.subr.mxu0 0.0
    %2051 = vmatpush1.xpose.msra.mxu0 0.0
    %2052 = vmatprep.subr.mxu0 0.0
    %2053 = vmatpush1.xpose.msra.mxu0 0.0
    %2054 = vmatprep.subr.mxu0 0.0
    %2055 = vmatpush1.xpose.msra.mxu0 0.0
    %2056 = vmatprep.subr.mxu0 0.0
    %2057 = vmatpush1.xpose.msra.mxu0 0.0
    %2058 = vmatprep.subr.mxu0 0.0
    %2059 = vmatpush1.xpose.msra.mxu0 0.0
    %2060 = vmatprep.subr.mxu0 0.0
    %2061 = vmatpush1.xpose.msra.mxu0 0.0
    %2062 = vmatprep.subr.mxu0 0.0
    %2063 = vmatpush1.xpose.msra.mxu0 0.0
    %2064 = vmatprep.subr.mxu0 0.0
    %2065 = vmatpush1.xpose.msra.mxu0 0.0
    %2066 = vmatprep.subr.mxu0 0.0
    %2067 = vmatpush1.xpose.msra.mxu0 0.0
    %2068 = vmatprep.subr.mxu0 0.0
    %2069 = vmatpush1.xpose.msra.mxu0 %v2036
    %2070 = vmatprep.subr.mxu0 0.0
    %2071 = vmatpush2.xpose.msra.mxu0 0.0
    %2072 = vmatprep.subr.mxu0 0.0
    %2073 = vmatpush2.xpose.msra.mxu0 0.0
    %2074 = vmatprep.subr.mxu0 0.0
    %2075 = vmatpush2.xpose.msra.mxu0 0.0
    %2076 = vmatprep.subr.mxu0 0.0
    %2077 = vmatpush2.xpose.msra.mxu0 0.0
    %2078 = vmatprep.subr.mxu0 0.0
    %2079 = vmatpush2.xpose.msra.mxu0 0.0
    %2080 = vmatprep.subr.mxu0 0.0
    %2081 = vmatpush2.xpose.msra.mxu0 0.0
    %2082 = vmatprep.subr.mxu0 0.0
    %2083 = vmatpush2.xpose.msra.mxu0 0.0
    %2084 = vmatprep.subr.mxu0 0.0
    %2085 = vmatpush2.xpose.msra.mxu0 0.0
    %2086 = vmatprep.subr.mxu0 0.0
    %2087 = vmatpush2.xpose.msra.mxu0 0.0
    %2088 = vmatprep.subr.mxu0 0.0
    %2089 = vmatpush2.xpose.msra.mxu0 0.0
    %2090 = vmatprep.subr.mxu0 0.0
    %2091 = vmatpush2.xpose.msra.mxu0 0.0
    %2092 = vmatprep.subr.mxu0 0.0
    %2093 = vmatpush2.xpose.msra.mxu0 0.0
    %2094 = vmatprep.subr.mxu0 0.0
    %2095 = vmatpush2.xpose.msra.mxu0 0.0
    %2096 = vmatprep.subr.mxu0 0.0
    %2097 = vmatpush2.xpose.msra.mxu0 0.0
    %2098 = vmatprep.subr.mxu0 0.0
    %2099 = vmatpush2.xpose.msra.mxu0 0.0
    %2100 = vmatprep.subr.mxu0 0.0
    %2101 = vmatpush2.xpose.msra.mxu0 0.0
    %2102 = vmatprep.mubr.f32.mxu0 0.0
    %2103 = vmatmul.mubr.f32.gmra.mxu0 %v2034
    %v2104 = vpop.f32.mrf.mxu0
    %v2105 = vadd.f32 0.0, %v2104
    %v2106 = vpop.f32.mrf.mxu0
    %2107 = vdwg.mxu0
    %2109 = vrot.lane.b32.xlu0 %v2028, 96
    %v2110 = vpop.permute.xlu0 %2109
    %v2111 = vsel %vm208, %v2028, 0
    %v2113 = vsel %vm208, %v2110, 0
    %2115 = vmatprep.subr.mxu0 0.0
    %2116 = vmatpush1.xpose.msra.mxu0 0.0
    %2117 = vmatprep.subr.mxu0 0.0
    %2118 = vmatpush1.xpose.msra.mxu0 0.0
    %2119 = vmatprep.subr.mxu0 0.0
    %2120 = vmatpush1.xpose.msra.mxu0 0.0
    %2121 = vmatprep.subr.mxu0 0.0
    %2122 = vmatpush1.xpose.msra.mxu0 0.0
    %2123 = vmatprep.subr.mxu0 0.0
    %2124 = vmatpush1.xpose.msra.mxu0 0.0
    %2125 = vmatprep.subr.mxu0 0.0
    %2126 = vmatpush1.xpose.msra.mxu0 0.0
    %2127 = vmatprep.subr.mxu0 0.0
    %2128 = vmatpush1.xpose.msra.mxu0 0.0
    %2129 = vmatprep.subr.mxu0 0.0
    %2130 = vmatpush1.xpose.msra.mxu0 0.0
    %2131 = vmatprep.subr.mxu0 0.0
    %2132 = vmatpush1.xpose.msra.mxu0 0.0
    %2133 = vmatprep.subr.mxu0 0.0
    %2134 = vmatpush1.xpose.msra.mxu0 0.0
    %2135 = vmatprep.subr.mxu0 0.0
    %2136 = vmatpush1.xpose.msra.mxu0 0.0
    %2137 = vmatprep.subr.mxu0 0.0
    %2138 = vmatpush1.xpose.msra.mxu0 0.0
    %2139 = vmatprep.subr.mxu0 0.0
    %2140 = vmatpush1.xpose.msra.mxu0 0.0
    %2141 = vmatprep.subr.mxu0 0.0
    %2142 = vmatpush1.xpose.msra.mxu0 0.0
    %2143 = vmatprep.subr.mxu0 0.0
    %2144 = vmatpush1.xpose.msra.mxu0 0.0
    %2145 = vmatprep.subr.mxu0 0.0
    %2146 = vmatpush1.xpose.msra.mxu0 %v2113
    %2147 = vmatprep.subr.mxu0 0.0
    %2148 = vmatpush2.xpose.msra.mxu0 0.0
    %2149 = vmatprep.subr.mxu0 0.0
    %2150 = vmatpush2.xpose.msra.mxu0 0.0
    %2151 = vmatprep.subr.mxu0 0.0
    %2152 = vmatpush2.xpose.msra.mxu0 0.0
    %2153 = vmatprep.subr.mxu0 0.0
    %2154 = vmatpush2.xpose.msra.mxu0 0.0
    %2155 = vmatprep.subr.mxu0 0.0
    %2156 = vmatpush2.xpose.msra.mxu0 0.0
    %2157 = vmatprep.subr.mxu0 0.0
    %2158 = vmatpush2.xpose.msra.mxu0 0.0
    %2159 = vmatprep.subr.mxu0 0.0
    %2160 = vmatpush2.xpose.msra.mxu0 0.0
    %2161 = vmatprep.subr.mxu0 0.0
    %2162 = vmatpush2.xpose.msra.mxu0 0.0
    %2163 = vmatprep.subr.mxu0 0.0
    %2164 = vmatpush2.xpose.msra.mxu0 0.0
    %2165 = vmatprep.subr.mxu0 0.0
    %2166 = vmatpush2.xpose.msra.mxu0 0.0
    %2167 = vmatprep.subr.mxu0 0.0
    %2168 = vmatpush2.xpose.msra.mxu0 0.0
    %2169 = vmatprep.subr.mxu0 0.0
    %2170 = vmatpush2.xpose.msra.mxu0 0.0
    %2171 = vmatprep.subr.mxu0 0.0
    %2172 = vmatpush2.xpose.msra.mxu0 0.0
    %2173 = vmatprep.subr.mxu0 0.0
    %2174 = vmatpush2.xpose.msra.mxu0 0.0
    %2175 = vmatprep.subr.mxu0 0.0
    %2176 = vmatpush2.xpose.msra.mxu0 0.0
    %2177 = vmatprep.subr.mxu0 0.0
    %2178 = vmatpush2.xpose.msra.mxu0 0.0
    %2179 = vmatprep.mubr.f32.mxu0 0.0
    %2180 = vmatmul.mubr.f32.gmra.mxu0 %v2111
    %v2181 = vpop.f32.mrf.mxu0
    %v2182 = vadd.f32 0.0, %v2181
    %v2183 = vpop.f32.mrf.mxu0
    %2184 = vdwg.mxu0
    %v2185 = vsel %vm208, %v2105, -inf
    %2186 = vmax.xlane.f32.xlu0 %v2185
    %v2187 = vpop.xlane.xlu0 %2186
    %v2188 = vsel %vm208, %v2182, -inf
    %2189 = vmax.xlane.f32.xlu0 %v2188
    %v2190 = vpop.xlane.xlu0 %2189
    %v2191 = vsub.f32 %v2105, %v2187
    %v2192 = vsub.f32 %v2182, %v2190
    %v2193 = vmul.f32 %v2191, 1.442695
    %v2194 = vpow.pop %v2193
    %v2195 = vmul.f32 %v2192, 1.442695
    %v2196 = vpow.pop %v2195
    %v2197 = vsel %vm208, %v2194, 0.0
    %2198 = vadd.xlane.f32.xlu0 %v2197
    %v2199 = vpop.xlane.xlu0 %2198
    %v2200 = vsel %vm208, %v2196, 0.0
    %2201 = vadd.xlane.f32.xlu0 %v2200
    %v2202 = vpop.xlane.xlu0 %2201
    %v2203 = vrcp.pop %v2199
    %v2204 = vrcp.pop %v2202
    %v2205 = vmul.f32 %v2194, %v2203
    %v2206 = vmul.f32 %v2196, %v2204
    %2207 = vrot.lane.b32.xlu0 %v2023, 64
    %v2208 = vpop.permute.xlu0 %2207
    %v2211 = vsel %vm208, %v2205, 0
    %2213 = vmatprep.subr.mxu0 0.0
    %2214 = vmatpush1.msra.mxu0 0.0
    %2215 = vmatprep.subr.mxu0 0.0
    %2216 = vmatpush1.msra.mxu0 0.0
    %2217 = vmatprep.subr.mxu0 0.0
    %2218 = vmatpush1.msra.mxu0 0.0
    %2219 = vmatprep.subr.mxu0 0.0
    %2220 = vmatpush1.msra.mxu0 0.0
    %2221 = vmatprep.subr.mxu0 0.0
    %2222 = vmatpush1.msra.mxu0 0.0
    %2223 = vmatprep.subr.mxu0 0.0
    %2224 = vmatpush1.msra.mxu0 0.0
    %2225 = vmatprep.subr.mxu0 0.0
    %2226 = vmatpush1.msra.mxu0 0.0
    %2227 = vmatprep.subr.mxu0 0.0
    %2228 = vmatpush1.msra.mxu0 0.0
    %2229 = vmatprep.subr.mxu0 0.0
    %2230 = vmatpush1.msra.mxu0 0.0
    %2231 = vmatprep.subr.mxu0 0.0
    %2232 = vmatpush1.msra.mxu0 0.0
    %2233 = vmatprep.subr.mxu0 0.0
    %2234 = vmatpush1.msra.mxu0 0.0
    %2235 = vmatprep.subr.mxu0 0.0
    %2236 = vmatpush1.msra.mxu0 0.0
    %2237 = vmatprep.subr.mxu0 0.0
    %2238 = vmatpush1.msra.mxu0 0.0
    %2239 = vmatprep.subr.mxu0 0.0
    %2240 = vmatpush1.msra.mxu0 0.0
    %2241 = vmatprep.subr.mxu0 0.0
    %2242 = vmatpush1.msra.mxu0 0.0
    %2243 = vmatprep.subr.mxu0 0.0
    %2244 = vmatpush1.msra.mxu0 %v2208
    %2245 = vmatprep.subr.mxu0 0.0
    %2246 = vmatpush2.msra.mxu0 0.0
    %2247 = vmatprep.subr.mxu0 0.0
    %2248 = vmatpush2.msra.mxu0 0.0
    %2249 = vmatprep.subr.mxu0 0.0
    %2250 = vmatpush2.msra.mxu0 0.0
    %2251 = vmatprep.subr.mxu0 0.0
    %2252 = vmatpush2.msra.mxu0 0.0
    %2253 = vmatprep.subr.mxu0 0.0
    %2254 = vmatpush2.msra.mxu0 0.0
    %2255 = vmatprep.subr.mxu0 0.0
    %2256 = vmatpush2.msra.mxu0 0.0
    %2257 = vmatprep.subr.mxu0 0.0
    %2258 = vmatpush2.msra.mxu0 0.0
    %2259 = vmatprep.subr.mxu0 0.0
    %2260 = vmatpush2.msra.mxu0 0.0
    %2261 = vmatprep.subr.mxu0 0.0
    %2262 = vmatpush2.msra.mxu0 0.0
    %2263 = vmatprep.subr.mxu0 0.0
    %2264 = vmatpush2.msra.mxu0 0.0
    %2265 = vmatprep.subr.mxu0 0.0
    %2266 = vmatpush2.msra.mxu0 0.0
    %2267 = vmatprep.subr.mxu0 0.0
    %2268 = vmatpush2.msra.mxu0 0.0
    %2269 = vmatprep.subr.mxu0 0.0
    %2270 = vmatpush2.msra.mxu0 0.0
    %2271 = vmatprep.subr.mxu0 0.0
    %2272 = vmatpush2.msra.mxu0 0.0
    %2273 = vmatprep.subr.mxu0 0.0
    %2274 = vmatpush2.msra.mxu0 0.0
    %2275 = vmatprep.subr.mxu0 0.0
    %2276 = vmatpush2.msra.mxu0 0.0
    %2277 = vmatprep.mubr.f32.mxu0 0.0
    %2278 = vmatmul.mubr.f32.gmra.mxu0 %v2211
    %v2279 = vpop.f32.mrf.mxu0
    %v2280 = vadd.f32 0.0, %v2279
    %v2281 = vpop.f32.mrf.mxu0
    %2282 = vdwg.mxu0
    %2283 = vrot.lane.b32.xlu0 %v2028, 64
    %v2284 = vpop.permute.xlu0 %2283
    %v2287 = vsel %vm208, %v2206, 0
    %2289 = vmatprep.subr.mxu0 0.0
    %2290 = vmatpush1.msra.mxu0 0.0
    %2291 = vmatprep.subr.mxu0 0.0
    %2292 = vmatpush1.msra.mxu0 0.0
    %2293 = vmatprep.subr.mxu0 0.0
    %2294 = vmatpush1.msra.mxu0 0.0
    %2295 = vmatprep.subr.mxu0 0.0
    %2296 = vmatpush1.msra.mxu0 0.0
    %2297 = vmatprep.subr.mxu0 0.0
    %2298 = vmatpush1.msra.mxu0 0.0
    %2299 = vmatprep.subr.mxu0 0.0
    %2300 = vmatpush1.msra.mxu0 0.0
    %2301 = vmatprep.subr.mxu0 0.0
    %2302 = vmatpush1.msra.mxu0 0.0
    %2303 = vmatprep.subr.mxu0 0.0
    %2304 = vmatpush1.msra.mxu0 0.0
    %2305 = vmatprep.subr.mxu0 0.0
    %2306 = vmatpush1.msra.mxu0 0.0
    %2307 = vmatprep.subr.mxu0 0.0
    %2308 = vmatpush1.msra.mxu0 0.0
    %2309 = vmatprep.subr.mxu0 0.0
    %2310 = vmatpush1.msra.mxu0 0.0
    %2311 = vmatprep.subr.mxu0 0.0
    %2312 = vmatpush1.msra.mxu0 0.0
    %2313 = vmatprep.subr.mxu0 0.0
    %2314 = vmatpush1.msra.mxu0 0.0
    %2315 = vmatprep.subr.mxu0 0.0
    %2316 = vmatpush1.msra.mxu0 0.0
    %2317 = vmatprep.subr.mxu0 0.0
    %2318 = vmatpush1.msra.mxu0 0.0
    %2319 = vmatprep.subr.mxu0 0.0
    %2320 = vmatpush1.msra.mxu0 %v2284
    %2321 = vmatprep.subr.mxu0 0.0
    %2322 = vmatpush2.msra.mxu0 0.0
    %2323 = vmatprep.subr.mxu0 0.0
    %2324 = vmatpush2.msra.mxu0 0.0
    %2325 = vmatprep.subr.mxu0 0.0
    %2326 = vmatpush2.msra.mxu0 0.0
    %2327 = vmatprep.subr.mxu0 0.0
    %2328 = vmatpush2.msra.mxu0 0.0
    %2329 = vmatprep.subr.mxu0 0.0
    %2330 = vmatpush2.msra.mxu0 0.0
    %2331 = vmatprep.subr.mxu0 0.0
    %2332 = vmatpush2.msra.mxu0 0.0
    %2333 = vmatprep.subr.mxu0 0.0
    %2334 = vmatpush2.msra.mxu0 0.0
    %2335 = vmatprep.subr.mxu0 0.0
    %2336 = vmatpush2.msra.mxu0 0.0
    %2337 = vmatprep.subr.mxu0 0.0
    %2338 = vmatpush2.msra.mxu0 0.0
    %2339 = vmatprep.subr.mxu0 0.0
    %2340 = vmatpush2.msra.mxu0 0.0
    %2341 = vmatprep.subr.mxu0 0.0
    %2342 = vmatpush2.msra.mxu0 0.0
    %2343 = vmatprep.subr.mxu0 0.0
    %2344 = vmatpush2.msra.mxu0 0.0
    %2345 = vmatprep.subr.mxu0 0.0
    %2346 = vmatpush2.msra.mxu0 0.0
    %2347 = vmatprep.subr.mxu0 0.0
    %2348 = vmatpush2.msra.mxu0 0.0
    %2349 = vmatprep.subr.mxu0 0.0
    %2350 = vmatpush2.msra.mxu0 0.0
    %2351 = vmatprep.subr.mxu0 0.0
    %2352 = vmatpush2.msra.mxu0 0.0
    %2353 = vmatprep.mubr.f32.mxu0 0.0
    %2354 = vmatmul.mubr.f32.gmra.mxu0 %v2287
    %v2355 = vpop.f32.mrf.mxu0
    %v2356 = vadd.f32 0.0, %v2355
    %v2357 = vpop.f32.mrf.mxu0
    %2358 = vdwg.mxu0
    %2359 = vrot.lane.b32.xlu0 %v2023, 120
    %v2360 = vpop.permute.xlu0 %2359
    %2361 = vrot.lane.b32.xlu0 %v2023, 88
    %v2362 = vpop.permute.xlu0 %2361
    %v2363 = vsel %vm208, %v2360, 0
    %v2365 = vsel %vm208, %v2362, 0
    %2367 = vmatprep.subr.mxu0 0.0
    %2368 = vmatpush1.xpose.msra.mxu0 0.0
    %2369 = vmatprep.subr.mxu0 0.0
    %2370 = vmatpush1.xpose.msra.mxu0 0.0
    %2371 = vmatprep.subr.mxu0 0.0
    %2372 = vmatpush1.xpose.msra.mxu0 0.0
    %2373 = vmatprep.subr.mxu0 0.0
    %2374 = vmatpush1.xpose.msra.mxu0 0.0
    %2375 = vmatprep.subr.mxu0 0.0
    %2376 = vmatpush1.xpose.msra.mxu0 0.0
    %2377 = vmatprep.subr.mxu0 0.0
    %2378 = vmatpush1.xpose.msra.mxu0 0.0
    %2379 = vmatprep.subr.mxu0 0.0
    %2380 = vmatpush1.xpose.msra.mxu0 0.0
    %2381 = vmatprep.subr.mxu0 0.0
    %2382 = vmatpush1.xpose.msra.mxu0 0.0
    %2383 = vmatprep.subr.mxu0 0.0
    %2384 = vmatpush1.xpose.msra.mxu0 0.0
    %2385 = vmatprep.subr.mxu0 0.0
    %2386 = vmatpush1.xpose.msra.mxu0 0.0
    %2387 = vmatprep.subr.mxu0 0.0
    %2388 = vmatpush1.xpose.msra.mxu0 0.0
    %2389 = vmatprep.subr.mxu0 0.0
    %2390 = vmatpush1.xpose.msra.mxu0 0.0
    %2391 = vmatprep.subr.mxu0 0.0
    %2392 = vmatpush1.xpose.msra.mxu0 0.0
    %2393 = vmatprep.subr.mxu0 0.0
    %2394 = vmatpush1.xpose.msra.mxu0 0.0
    %2395 = vmatprep.subr.mxu0 0.0
    %2396 = vmatpush1.xpose.msra.mxu0 0.0
    %2397 = vmatprep.subr.mxu0 0.0
    %2398 = vmatpush1.xpose.msra.mxu0 %v2365
    %2399 = vmatprep.subr.mxu0 0.0
    %2400 = vmatpush2.xpose.msra.mxu0 0.0
    %2401 = vmatprep.subr.mxu0 0.0
    %2402 = vmatpush2.xpose.msra.mxu0 0.0
    %2403 = vmatprep.subr.mxu0 0.0
    %2404 = vmatpush2.xpose.msra.mxu0 0.0
    %2405 = vmatprep.subr.mxu0 0.0
    %2406 = vmatpush2.xpose.msra.mxu0 0.0
    %2407 = vmatprep.subr.mxu0 0.0
    %2408 = vmatpush2.xpose.msra.mxu0 0.0
    %2409 = vmatprep.subr.mxu0 0.0
    %2410 = vmatpush2.xpose.msra.mxu0 0.0
    %2411 = vmatprep.subr.mxu0 0.0
    %2412 = vmatpush2.xpose.msra.mxu0 0.0
    %2413 = vmatprep.subr.mxu0 0.0
    %2414 = vmatpush2.xpose.msra.mxu0 0.0
    %2415 = vmatprep.subr.mxu0 0.0
    %2416 = vmatpush2.xpose.msra.mxu0 0.0
    %2417 = vmatprep.subr.mxu0 0.0
    %2418 = vmatpush2.xpose.msra.mxu0 0.0
    %2419 = vmatprep.subr.mxu0 0.0
    %2420 = vmatpush2.xpose.msra.mxu0 0.0
    %2421 = vmatprep.subr.mxu0 0.0
    %2422 = vmatpush2.xpose.msra.mxu0 0.0
    %2423 = vmatprep.subr.mxu0 0.0
    %2424 = vmatpush2.xpose.msra.mxu0 0.0
    %2425 = vmatprep.subr.mxu0 0.0
    %2426 = vmatpush2.xpose.msra.mxu0 0.0
    %2427 = vmatprep.subr.mxu0 0.0
    %2428 = vmatpush2.xpose.msra.mxu0 0.0
    %2429 = vmatprep.subr.mxu0 0.0
    %2430 = vmatpush2.xpose.msra.mxu0 0.0
    %2431 = vmatprep.mubr.f32.mxu0 0.0
    %2432 = vmatmul.mubr.f32.gmra.mxu0 %v2363
    %v2433 = vpop.f32.mrf.mxu0
    %v2434 = vadd.f32 0.0, %v2433
    %v2435 = vpop.f32.mrf.mxu0
    %2436 = vdwg.mxu0
    %2437 = vrot.lane.b32.xlu0 %v2028, 120
    %v2438 = vpop.permute.xlu0 %2437
    %2439 = vrot.lane.b32.xlu0 %v2028, 88
    %v2440 = vpop.permute.xlu0 %2439
    %v2441 = vsel %vm208, %v2438, 0
    %v2443 = vsel %vm208, %v2440, 0
    %2445 = vmatprep.subr.mxu0 0.0
    %2446 = vmatpush1.xpose.msra.mxu0 0.0
    %2447 = vmatprep.subr.mxu0 0.0
    %2448 = vmatpush1.xpose.msra.mxu0 0.0
    %2449 = vmatprep.subr.mxu0 0.0
    %2450 = vmatpush1.xpose.msra.mxu0 0.0
    %2451 = vmatprep.subr.mxu0 0.0
    %2452 = vmatpush1.xpose.msra.mxu0 0.0
    %2453 = vmatprep.subr.mxu0 0.0
    %2454 = vmatpush1.xpose.msra.mxu0 0.0
    %2455 = vmatprep.subr.mxu0 0.0
    %2456 = vmatpush1.xpose.msra.mxu0 0.0
    %2457 = vmatprep.subr.mxu0 0.0
    %2458 = vmatpush1.xpose.msra.mxu0 0.0
    %2459 = vmatprep.subr.mxu0 0.0
    %2460 = vmatpush1.xpose.msra.mxu0 0.0
    %2461 = vmatprep.subr.mxu0 0.0
    %2462 = vmatpush1.xpose.msra.mxu0 0.0
    %2463 = vmatprep.subr.mxu0 0.0
    %2464 = vmatpush1.xpose.msra.mxu0 0.0
    %2465 = vmatprep.subr.mxu0 0.0
    %2466 = vmatpush1.xpose.msra.mxu0 0.0
    %2467 = vmatprep.subr.mxu0 0.0
    %2468 = vmatpush1.xpose.msra.mxu0 0.0
    %2469 = vmatprep.subr.mxu0 0.0
    %2470 = vmatpush1.xpose.msra.mxu0 0.0
    %2471 = vmatprep.subr.mxu0 0.0
    %2472 = vmatpush1.xpose.msra.mxu0 0.0
    %2473 = vmatprep.subr.mxu0 0.0
    %2474 = vmatpush1.xpose.msra.mxu0 0.0
    %2475 = vmatprep.subr.mxu0 0.0
    %2476 = vmatpush1.xpose.msra.mxu0 %v2443
    %2477 = vmatprep.subr.mxu0 0.0
    %2478 = vmatpush2.xpose.msra.mxu0 0.0
    %2479 = vmatprep.subr.mxu0 0.0
    %2480 = vmatpush2.xpose.msra.mxu0 0.0
    %2481 = vmatprep.subr.mxu0 0.0
    %2482 = vmatpush2.xpose.msra.mxu0 0.0
    %2483 = vmatprep.subr.mxu0 0.0
    %2484 = vmatpush2.xpose.msra.mxu0 0.0
    %2485 = vmatprep.subr.mxu0 0.0
    %2486 = vmatpush2.xpose.msra.mxu0 0.0
    %2487 = vmatprep.subr.mxu0 0.0
    %2488 = vmatpush2.xpose.msra.mxu0 0.0
    %2489 = vmatprep.subr.mxu0 0.0
    %2490 = vmatpush2.xpose.msra.mxu0 0.0
    %2491 = vmatprep.subr.mxu0 0.0
    %2492 = vmatpush2.xpose.msra.mxu0 0.0
    %2493 = vmatprep.subr.mxu0 0.0
    %2494 = vmatpush2.xpose.msra.mxu0 0.0
    %2495 = vmatprep.subr.mxu0 0.0
    %2496 = vmatpush2.xpose.msra.mxu0 0.0
    %2497 = vmatprep.subr.mxu0 0.0
    %2498 = vmatpush2.xpose.msra.mxu0 0.0
    %2499 = vmatprep.subr.mxu0 0.0
    %2500 = vmatpush2.xpose.msra.mxu0 0.0
    %2501 = vmatprep.subr.mxu0 0.0
    %2502 = vmatpush2.xpose.msra.mxu0 0.0
    %2503 = vmatprep.subr.mxu0 0.0
    %2504 = vmatpush2.xpose.msra.mxu0 0.0
    %2505 = vmatprep.subr.mxu0 0.0
    %2506 = vmatpush2.xpose.msra.mxu0 0.0
    %2507 = vmatprep.subr.mxu0 0.0
    %2508 = vmatpush2.xpose.msra.mxu0 0.0
    %2509 = vmatprep.mubr.f32.mxu0 0.0
    %2510 = vmatmul.mubr.f32.gmra.mxu0 %v2441
    %v2511 = vpop.f32.mrf.mxu0
    %v2512 = vadd.f32 0.0, %v2511
    %v2513 = vpop.f32.mrf.mxu0
    %2514 = vdwg.mxu0
    %v2515 = vsel %vm208, %v2434, -inf
    %2516 = vmax.xlane.f32.xlu0 %v2515
    %v2517 = vpop.xlane.xlu0 %2516
    %v2518 = vsel %vm208, %v2512, -inf
    %2519 = vmax.xlane.f32.xlu0 %v2518
    %v2520 = vpop.xlane.xlu0 %2519
    %v2521 = vsub.f32 %v2434, %v2517
    %v2522 = vsub.f32 %v2512, %v2520
    %v2523 = vmul.f32 %v2521, 1.442695
    %v2524 = vpow.pop %v2523
    %v2525 = vmul.f32 %v2522, 1.442695
    %v2526 = vpow.pop %v2525
    %v2527 = vsel %vm208, %v2524, 0.0
    %2528 = vadd.xlane.f32.xlu0 %v2527
    %v2529 = vpop.xlane.xlu0 %2528
    %v2530 = vsel %vm208, %v2526, 0.0
    %2531 = vadd.xlane.f32.xlu0 %v2530
    %v2532 = vpop.xlane.xlu0 %2531
    %v2533 = vrcp.pop %v2529
    %v2534 = vrcp.pop %v2532
    %v2535 = vmul.f32 %v2524, %v2533
    %v2536 = vmul.f32 %v2526, %v2534
    %2537 = vrot.lane.b32.xlu0 %v2023, 56
    %v2538 = vpop.permute.xlu0 %2537
    %v2541 = vsel %vm208, %v2535, 0
    %2543 = vmatprep.subr.mxu0 0.0
    %2544 = vmatpush1.msra.mxu0 0.0
    %2545 = vmatprep.subr.mxu0 0.0
    %2546 = vmatpush1.msra.mxu0 0.0
    %2547 = vmatprep.subr.mxu0 0.0
    %2548 = vmatpush1.msra.mxu0 0.0
    %2549 = vmatprep.subr.mxu0 0.0
    %2550 = vmatpush1.msra.mxu0 0.0
    %2551 = vmatprep.subr.mxu0 0.0
    %2552 = vmatpush1.msra.mxu0 0.0
    %2553 = vmatprep.subr.mxu0 0.0
    %2554 = vmatpush1.msra.mxu0 0.0
    %2555 = vmatprep.subr.mxu0 0.0
    %2556 = vmatpush1.msra.mxu0 0.0
    %2557 = vmatprep.subr.mxu0 0.0
    %2558 = vmatpush1.msra.mxu0 0.0
    %2559 = vmatprep.subr.mxu0 0.0
    %2560 = vmatpush1.msra.mxu0 0.0
    %2561 = vmatprep.subr.mxu0 0.0
    %2562 = vmatpush1.msra.mxu0 0.0
    %2563 = vmatprep.subr.mxu0 0.0
    %2564 = vmatpush1.msra.mxu0 0.0
    %2565 = vmatprep.subr.mxu0 0.0
    %2566 = vmatpush1.msra.mxu0 0.0
    %2567 = vmatprep.subr.mxu0 0.0
    %2568 = vmatpush1.msra.mxu0 0.0
    %2569 = vmatprep.subr.mxu0 0.0
    %2570 = vmatpush1.msra.mxu0 0.0
    %2571 = vmatprep.subr.mxu0 0.0
    %2572 = vmatpush1.msra.mxu0 0.0
    %2573 = vmatprep.subr.mxu0 0.0
    %2574 = vmatpush1.msra.mxu0 %v2538
    %2575 = vmatprep.subr.mxu0 0.0
    %2576 = vmatpush2.msra.mxu0 0.0
    %2577 = vmatprep.subr.mxu0 0.0
    %2578 = vmatpush2.msra.mxu0 0.0
    %2579 = vmatprep.subr.mxu0 0.0
    %2580 = vmatpush2.msra.mxu0 0.0
    %2581 = vmatprep.subr.mxu0 0.0
    %2582 = vmatpush2.msra.mxu0 0.0
    %2583 = vmatprep.subr.mxu0 0.0
    %2584 = vmatpush2.msra.mxu0 0.0
    %2585 = vmatprep.subr.mxu0 0.0
    %2586 = vmatpush2.msra.mxu0 0.0
    %2587 = vmatprep.subr.mxu0 0.0
    %2588 = vmatpush2.msra.mxu0 0.0
    %2589 = vmatprep.subr.mxu0 0.0
    %2590 = vmatpush2.msra.mxu0 0.0
    %2591 = vmatprep.subr.mxu0 0.0
    %2592 = vmatpush2.msra.mxu0 0.0
    %2593 = vmatprep.subr.mxu0 0.0
    %2594 = vmatpush2.msra.mxu0 0.0
    %2595 = vmatprep.subr.mxu0 0.0
    %2596 = vmatpush2.msra.mxu0 0.0
    %2597 = vmatprep.subr.mxu0 0.0
    %2598 = vmatpush2.msra.mxu0 0.0
    %2599 = vmatprep.subr.mxu0 0.0
    %2600 = vmatpush2.msra.mxu0 0.0
    %2601 = vmatprep.subr.mxu0 0.0
    %2602 = vmatpush2.msra.mxu0 0.0
    %2603 = vmatprep.subr.mxu0 0.0
    %2604 = vmatpush2.msra.mxu0 0.0
    %2605 = vmatprep.subr.mxu0 0.0
    %2606 = vmatpush2.msra.mxu0 0.0
    %2607 = vmatprep.mubr.f32.mxu0 0.0
    %2608 = vmatmul.mubr.f32.gmra.mxu0 %v2541
    %v2609 = vpop.f32.mrf.mxu0
    %v2610 = vadd.f32 0.0, %v2609
    %v2611 = vpop.f32.mrf.mxu0
    %2612 = vdwg.mxu0
    %2613 = vrot.lane.b32.xlu0 %v2028, 56
    %v2614 = vpop.permute.xlu0 %2613
    %v2617 = vsel %vm208, %v2536, 0
    %2619 = vmatprep.subr.mxu0 0.0
    %2620 = vmatpush1.msra.mxu0 0.0
    %2621 = vmatprep.subr.mxu0 0.0
    %2622 = vmatpush1.msra.mxu0 0.0
    %2623 = vmatprep.subr.mxu0 0.0
    %2624 = vmatpush1.msra.mxu0 0.0
    %2625 = vmatprep.subr.mxu0 0.0
    %2626 = vmatpush1.msra.mxu0 0.0
    %2627 = vmatprep.subr.mxu0 0.0
    %2628 = vmatpush1.msra.mxu0 0.0
    %2629 = vmatprep.subr.mxu0 0.0
    %2630 = vmatpush1.msra.mxu0 0.0
    %2631 = vmatprep.subr.mxu0 0.0
    %2632 = vmatpush1.msra.mxu0 0.0
    %2633 = vmatprep.subr.mxu0 0.0
    %2634 = vmatpush1.msra.mxu0 0.0
    %2635 = vmatprep.subr.mxu0 0.0
    %2636 = vmatpush1.msra.mxu0 0.0
    %2637 = vmatprep.subr.mxu0 0.0
    %2638 = vmatpush1.msra.mxu0 0.0
    %2639 = vmatprep.subr.mxu0 0.0
    %2640 = vmatpush1.msra.mxu0 0.0
    %2641 = vmatprep.subr.mxu0 0.0
    %2642 = vmatpush1.msra.mxu0 0.0
    %2643 = vmatprep.subr.mxu0 0.0
    %2644 = vmatpush1.msra.mxu0 0.0
    %2645 = vmatprep.subr.mxu0 0.0
    %2646 = vmatpush1.msra.mxu0 0.0
    %2647 = vmatprep.subr.mxu0 0.0
    %2648 = vmatpush1.msra.mxu0 0.0
    %2649 = vmatprep.subr.mxu0 0.0
    %2650 = vmatpush1.msra.mxu0 %v2614
    %2651 = vmatprep.subr.mxu0 0.0
    %2652 = vmatpush2.msra.mxu0 0.0
    %2653 = vmatprep.subr.mxu0 0.0
    %2654 = vmatpush2.msra.mxu0 0.0
    %2655 = vmatprep.subr.mxu0 0.0
    %2656 = vmatpush2.msra.mxu0 0.0
    %2657 = vmatprep.subr.mxu0 0.0
    %2658 = vmatpush2.msra.mxu0 0.0
    %2659 = vmatprep.subr.mxu0 0.0
    %2660 = vmatpush2.msra.mxu0 0.0
    %2661 = vmatprep.subr.mxu0 0.0
    %2662 = vmatpush2.msra.mxu0 0.0
    %2663 = vmatprep.subr.mxu0 0.0
    %2664 = vmatpush2.msra.mxu0 0.0
    %2665 = vmatprep.subr.mxu0 0.0
    %2666 = vmatpush2.msra.mxu0 0.0
    %2667 = vmatprep.subr.mxu0 0.0
    %2668 = vmatpush2.msra.mxu0 0.0
    %2669 = vmatprep.subr.mxu0 0.0
    %2670 = vmatpush2.msra.mxu0 0.0
    %2671 = vmatprep.subr.mxu0 0.0
    %2672 = vmatpush2.msra.mxu0 0.0
    %2673 = vmatprep.subr.mxu0 0.0
    %2674 = vmatpush2.msra.mxu0 0.0
    %2675 = vmatprep.subr.mxu0 0.0
    %2676 = vmatpush2.msra.mxu0 0.0
    %2677 = vmatprep.subr.mxu0 0.0
    %2678 = vmatpush2.msra.mxu0 0.0
    %2679 = vmatprep.subr.mxu0 0.0
    %2680 = vmatpush2.msra.mxu0 0.0
    %2681 = vmatprep.subr.mxu0 0.0
    %2682 = vmatpush2.msra.mxu0 0.0
    %2683 = vmatprep.mubr.f32.mxu0 0.0
    %2684 = vmatmul.mubr.f32.gmra.mxu0 %v2617
    %v2685 = vpop.f32.mrf.mxu0
    %v2686 = vadd.f32 0.0, %v2685
    %v2687 = vpop.f32.mrf.mxu0
    %2688 = vdwg.mxu0
    %2689 = vrot.lane.b32.xlu0 %v2023, 112
    %v2690 = vpop.permute.xlu0 %2689
    %2691 = vrot.lane.b32.xlu0 %v2023, 80
    %v2692 = vpop.permute.xlu0 %2691
    %v2693 = vsel %vm208, %v2690, 0
    %v2695 = vsel %vm208, %v2692, 0
    %2697 = vmatprep.subr.mxu0 0.0
    %2698 = vmatpush1.xpose.msra.mxu0 0.0
    %2699 = vmatprep.subr.mxu0 0.0
    %2700 = vmatpush1.xpose.msra.mxu0 0.0
    %2701 = vmatprep.subr.mxu0 0.0
    %2702 = vmatpush1.xpose.msra.mxu0 0.0
    %2703 = vmatprep.subr.mxu0 0.0
    %2704 = vmatpush1.xpose.msra.mxu0 0.0
    %2705 = vmatprep.subr.mxu0 0.0
    %2706 = vmatpush1.xpose.msra.mxu0 0.0
    %2707 = vmatprep.subr.mxu0 0.0
    %2708 = vmatpush1.xpose.msra.mxu0 0.0
    %2709 = vmatprep.subr.mxu0 0.0
    %2710 = vmatpush1.xpose.msra.mxu0 0.0
    %2711 = vmatprep.subr.mxu0 0.0
    %2712 = vmatpush1.xpose.msra.mxu0 0.0
    %2713 = vmatprep.subr.mxu0 0.0
    %2714 = vmatpush1.xpose.msra.mxu0 0.0
    %2715 = vmatprep.subr.mxu0 0.0
    %2716 = vmatpush1.xpose.msra.mxu0 0.0
    %2717 = vmatprep.subr.mxu0 0.0
    %2718 = vmatpush1.xpose.msra.mxu0 0.0
    %2719 = vmatprep.subr.mxu0 0.0
    %2720 = vmatpush1.xpose.msra.mxu0 0.0
    %2721 = vmatprep.subr.mxu0 0.0
    %2722 = vmatpush1.xpose.msra.mxu0 0.0
    %2723 = vmatprep.subr.mxu0 0.0
    %2724 = vmatpush1.xpose.msra.mxu0 0.0
    %2725 = vmatprep.subr.mxu0 0.0
    %2726 = vmatpush1.xpose.msra.mxu0 0.0
    %2727 = vmatprep.subr.mxu0 0.0
    %2728 = vmatpush1.xpose.msra.mxu0 %v2695
    %2729 = vmatprep.subr.mxu0 0.0
    %2730 = vmatpush2.xpose.msra.mxu0 0.0
    %2731 = vmatprep.subr.mxu0 0.0
    %2732 = vmatpush2.xpose.msra.mxu0 0.0
    %2733 = vmatprep.subr.mxu0 0.0
    %2734 = vmatpush2.xpose.msra.mxu0 0.0
    %2735 = vmatprep.subr.mxu0 0.0
    %2736 = vmatpush2.xpose.msra.mxu0 0.0
    %2737 = vmatprep.subr.mxu0 0.0
    %2738 = vmatpush2.xpose.msra.mxu0 0.0
    %2739 = vmatprep.subr.mxu0 0.0
    %2740 = vmatpush2.xpose.msra.mxu0 0.0
    %2741 = vmatprep.subr.mxu0 0.0
    %2742 = vmatpush2.xpose.msra.mxu0 0.0
    %2743 = vmatprep.subr.mxu0 0.0
    %2744 = vmatpush2.xpose.msra.mxu0 0.0
    %2745 = vmatprep.subr.mxu0 0.0
    %2746 = vmatpush2.xpose.msra.mxu0 0.0
    %2747 = vmatprep.subr.mxu0 0.0
    %2748 = vmatpush2.xpose.msra.mxu0 0.0
    %2749 = vmatprep.subr.mxu0 0.0
    %2750 = vmatpush2.xpose.msra.mxu0 0.0
    %2751 = vmatprep.subr.mxu0 0.0
    %2752 = vmatpush2.xpose.msra.mxu0 0.0
    %2753 = vmatprep.subr.mxu0 0.0
    %2754 = vmatpush2.xpose.msra.mxu0 0.0
    %2755 = vmatprep.subr.mxu0 0.0
    %2756 = vmatpush2.xpose.msra.mxu0 0.0
    %2757 = vmatprep.subr.mxu0 0.0
    %2758 = vmatpush2.xpose.msra.mxu0 0.0
    %2759 = vmatprep.subr.mxu0 0.0
    %2760 = vmatpush2.xpose.msra.mxu0 0.0
    %2761 = vmatprep.mubr.f32.mxu0 0.0
    %2762 = vmatmul.mubr.f32.gmra.mxu0 %v2693
    %v2763 = vpop.f32.mrf.mxu0
    %v2764 = vadd.f32 0.0, %v2763
    %v2765 = vpop.f32.mrf.mxu0
    %2766 = vdwg.mxu0
    %2767 = vrot.lane.b32.xlu0 %v2028, 112
    %v2768 = vpop.permute.xlu0 %2767
    %2769 = vrot.lane.b32.xlu0 %v2028, 80
    %v2770 = vpop.permute.xlu0 %2769
    %v2771 = vsel %vm208, %v2768, 0
    %v2773 = vsel %vm208, %v2770, 0
    %2775 = vmatprep.subr.mxu0 0.0
    %2776 = vmatpush1.xpose.msra.mxu0 0.0
    %2777 = vmatprep.subr.mxu0 0.0
    %2778 = vmatpush1.xpose.msra.mxu0 0.0
    %2779 = vmatprep.subr.mxu0 0.0
    %2780 = vmatpush1.xpose.msra.mxu0 0.0
    %2781 = vmatprep.subr.mxu0 0.0
    %2782 = vmatpush1.xpose.msra.mxu0 0.0
    %2783 = vmatprep.subr.mxu0 0.0
    %2784 = vmatpush1.xpose.msra.mxu0 0.0
    %2785 = vmatprep.subr.mxu0 0.0
    %2786 = vmatpush1.xpose.msra.mxu0 0.0
    %2787 = vmatprep.subr.mxu0 0.0
    %2788 = vmatpush1.xpose.msra.mxu0 0.0
    %2789 = vmatprep.subr.mxu0 0.0
    %2790 = vmatpush1.xpose.msra.mxu0 0.0
    %2791 = vmatprep.subr.mxu0 0.0
    %2792 = vmatpush1.xpose.msra.mxu0 0.0
    %2793 = vmatprep.subr.mxu0 0.0
    %2794 = vmatpush1.xpose.msra.mxu0 0.0
    %2795 = vmatprep.subr.mxu0 0.0
    %2796 = vmatpush1.xpose.msra.mxu0 0.0
    %2797 = vmatprep.subr.mxu0 0.0
    %2798 = vmatpush1.xpose.msra.mxu0 0.0
    %2799 = vmatprep.subr.mxu0 0.0
    %2800 = vmatpush1.xpose.msra.mxu0 0.0
    %2801 = vmatprep.subr.mxu0 0.0
    %2802 = vmatpush1.xpose.msra.mxu0 0.0
    %2803 = vmatprep.subr.mxu0 0.0
    %2804 = vmatpush1.xpose.msra.mxu0 0.0
    %2805 = vmatprep.subr.mxu0 0.0
    %2806 = vmatpush1.xpose.msra.mxu0 %v2773
    %2807 = vmatprep.subr.mxu0 0.0
    %2808 = vmatpush2.xpose.msra.mxu0 0.0
    %2809 = vmatprep.subr.mxu0 0.0
    %2810 = vmatpush2.xpose.msra.mxu0 0.0
    %2811 = vmatprep.subr.mxu0 0.0
    %2812 = vmatpush2.xpose.msra.mxu0 0.0
    %2813 = vmatprep.subr.mxu0 0.0
    %2814 = vmatpush2.xpose.msra.mxu0 0.0
    %2815 = vmatprep.subr.mxu0 0.0
    %2816 = vmatpush2.xpose.msra.mxu0 0.0
    %2817 = vmatprep.subr.mxu0 0.0
    %2818 = vmatpush2.xpose.msra.mxu0 0.0
    %2819 = vmatprep.subr.mxu0 0.0
    %2820 = vmatpush2.xpose.msra.mxu0 0.0
    %2821 = vmatprep.subr.mxu0 0.0
    %2822 = vmatpush2.xpose.msra.mxu0 0.0
    %2823 = vmatprep.subr.mxu0 0.0
    %2824 = vmatpush2.xpose.msra.mxu0 0.0
    %2825 = vmatprep.subr.mxu0 0.0
    %2826 = vmatpush2.xpose.msra.mxu0 0.0
    %2827 = vmatprep.subr.mxu0 0.0
    %2828 = vmatpush2.xpose.msra.mxu0 0.0
    %2829 = vmatprep.subr.mxu0 0.0
    %2830 = vmatpush2.xpose.msra.mxu0 0.0
    %2831 = vmatprep.subr.mxu0 0.0
    %2832 = vmatpush2.xpose.msra.mxu0 0.0
    %2833 = vmatprep.subr.mxu0 0.0
    %2834 = vmatpush2.xpose.msra.mxu0 0.0
    %2835 = vmatprep.subr.mxu0 0.0
    %2836 = vmatpush2.xpose.msra.mxu0 0.0
    %2837 = vmatprep.subr.mxu0 0.0
    %2838 = vmatpush2.xpose.msra.mxu0 0.0
    %2839 = vmatprep.mubr.f32.mxu0 0.0
    %2840 = vmatmul.mubr.f32.gmra.mxu0 %v2771
    %v2841 = vpop.f32.mrf.mxu0
    %v2842 = vadd.f32 0.0, %v2841
    %v2843 = vpop.f32.mrf.mxu0
    %2844 = vdwg.mxu0
    %v2845 = vsel %vm208, %v2764, -inf
    %2846 = vmax.xlane.f32.xlu0 %v2845
    %v2847 = vpop.xlane.xlu0 %2846
    %v2848 = vsel %vm208, %v2842, -inf
    %2849 = vmax.xlane.f32.xlu0 %v2848
    %v2850 = vpop.xlane.xlu0 %2849
    %v2851 = vsub.f32 %v2764, %v2847
    %v2852 = vsub.f32 %v2842, %v2850
    %v2853 = vmul.f32 %v2851, 1.442695
    %v2854 = vpow.pop %v2853
    %v2855 = vmul.f32 %v2852, 1.442695
    %v2856 = vpow.pop %v2855
    %v2857 = vsel %vm208, %v2854, 0.0
    %2858 = vadd.xlane.f32.xlu0 %v2857
    %v2859 = vpop.xlane.xlu0 %2858
    %v2860 = vsel %vm208, %v2856, 0.0
    %2861 = vadd.xlane.f32.xlu0 %v2860
    %v2862 = vpop.xlane.xlu0 %2861
    %v2863 = vrcp.pop %v2859
    %v2864 = vrcp.pop %v2862
    %v2865 = vmul.f32 %v2854, %v2863
    %v2866 = vmul.f32 %v2856, %v2864
    %2867 = vrot.lane.b32.xlu0 %v2023, 48
    %v2868 = vpop.permute.xlu0 %2867
    %v2871 = vsel %vm208, %v2865, 0
    %2873 = vmatprep.subr.mxu0 0.0
    %2874 = vmatpush1.msra.mxu0 0.0
    %2875 = vmatprep.subr.mxu0 0.0
    %2876 = vmatpush1.msra.mxu0 0.0
    %2877 = vmatprep.subr.mxu0 0.0
    %2878 = vmatpush1.msra.mxu0 0.0
    %2879 = vmatprep.subr.mxu0 0.0
    %2880 = vmatpush1.msra.mxu0 0.0
    %2881 = vmatprep.subr.mxu0 0.0
    %2882 = vmatpush1.msra.mxu0 0.0
    %2883 = vmatprep.subr.mxu0 0.0
    %2884 = vmatpush1.msra.mxu0 0.0
    %2885 = vmatprep.subr.mxu0 0.0
    %2886 = vmatpush1.msra.mxu0 0.0
    %2887 = vmatprep.subr.mxu0 0.0
    %2888 = vmatpush1.msra.mxu0 0.0
    %2889 = vmatprep.subr.mxu0 0.0
    %2890 = vmatpush1.msra.mxu0 0.0
    %2891 = vmatprep.subr.mxu0 0.0
    %2892 = vmatpush1.msra.mxu0 0.0
    %2893 = vmatprep.subr.mxu0 0.0
    %2894 = vmatpush1.msra.mxu0 0.0
    %2895 = vmatprep.subr.mxu0 0.0
    %2896 = vmatpush1.msra.mxu0 0.0
    %2897 = vmatprep.subr.mxu0 0.0
    %2898 = vmatpush1.msra.mxu0 0.0
    %2899 = vmatprep.subr.mxu0 0.0
    %2900 = vmatpush1.msra.mxu0 0.0
    %2901 = vmatprep.subr.mxu0 0.0
    %2902 = vmatpush1.msra.mxu0 0.0
    %2903 = vmatprep.subr.mxu0 0.0
    %2904 = vmatpush1.msra.mxu0 %v2868
    %2905 = vmatprep.subr.mxu0 0.0
    %2906 = vmatpush2.msra.mxu0 0.0
    %2907 = vmatprep.subr.mxu0 0.0
    %2908 = vmatpush2.msra.mxu0 0.0
    %2909 = vmatprep.subr.mxu0 0.0
    %2910 = vmatpush2.msra.mxu0 0.0
    %2911 = vmatprep.subr.mxu0 0.0
    %2912 = vmatpush2.msra.mxu0 0.0
    %2913 = vmatprep.subr.mxu0 0.0
    %2914 = vmatpush2.msra.mxu0 0.0
    %2915 = vmatprep.subr.mxu0 0.0
    %2916 = vmatpush2.msra.mxu0 0.0
    %2917 = vmatprep.subr.mxu0 0.0
    %2918 = vmatpush2.msra.mxu0 0.0
    %2919 = vmatprep.subr.mxu0 0.0
    %2920 = vmatpush2.msra.mxu0 0.0
    %2921 = vmatprep.subr.mxu0 0.0
    %2922 = vmatpush2.msra.mxu0 0.0
    %2923 = vmatprep.subr.mxu0 0.0
    %2924 = vmatpush2.msra.mxu0 0.0
    %2925 = vmatprep.subr.mxu0 0.0
    %2926 = vmatpush2.msra.mxu0 0.0
    %2927 = vmatprep.subr.mxu0 0.0
    %2928 = vmatpush2.msra.mxu0 0.0
    %2929 = vmatprep.subr.mxu0 0.0
    %2930 = vmatpush2.msra.mxu0 0.0
    %2931 = vmatprep.subr.mxu0 0.0
    %2932 = vmatpush2.msra.mxu0 0.0
    %2933 = vmatprep.subr.mxu0 0.0
    %2934 = vmatpush2.msra.mxu0 0.0
    %2935 = vmatprep.subr.mxu0 0.0
    %2936 = vmatpush2.msra.mxu0 0.0
    %2937 = vmatprep.mubr.f32.mxu0 0.0
    %2938 = vmatmul.mubr.f32.gmra.mxu0 %v2871
    %v2939 = vpop.f32.mrf.mxu0
    %v2940 = vadd.f32 0.0, %v2939
    %v2941 = vpop.f32.mrf.mxu0
    %2942 = vdwg.mxu0
    %2943 = vrot.lane.b32.xlu0 %v2028, 48
    %v2944 = vpop.permute.xlu0 %2943
    %v2947 = vsel %vm208, %v2866, 0
    %2949 = vmatprep.subr.mxu0 0.0
    %2950 = vmatpush1.msra.mxu0 0.0
    %2951 = vmatprep.subr.mxu0 0.0
    %2952 = vmatpush1.msra.mxu0 0.0
    %2953 = vmatprep.subr.mxu0 0.0
    %2954 = vmatpush1.msra.mxu0 0.0
    %2955 = vmatprep.subr.mxu0 0.0
    %2956 = vmatpush1.msra.mxu0 0.0
    %2957 = vmatprep.subr.mxu0 0.0
    %2958 = vmatpush1.msra.mxu0 0.0
    %2959 = vmatprep.subr.mxu0 0.0
    %2960 = vmatpush1.msra.mxu0 0.0
    %2961 = vmatprep.subr.mxu0 0.0
    %2962 = vmatpush1.msra.mxu0 0.0
    %2963 = vmatprep.subr.mxu0 0.0
    %2964 = vmatpush1.msra.mxu0 0.0
    %2965 = vmatprep.subr.mxu0 0.0
    %2966 = vmatpush1.msra.mxu0 0.0
    %2967 = vmatprep.subr.mxu0 0.0
    %2968 = vmatpush1.msra.mxu0 0.0
    %2969 = vmatprep.subr.mxu0 0.0
    %2970 = vmatpush1.msra.mxu0 0.0
    %2971 = vmatprep.subr.mxu0 0.0
    %2972 = vmatpush1.msra.mxu0 0.0
    %2973 = vmatprep.subr.mxu0 0.0
    %2974 = vmatpush1.msra.mxu0 0.0
    %2975 = vmatprep.subr.mxu0 0.0
    %2976 = vmatpush1.msra.mxu0 0.0
    %2977 = vmatprep.subr.mxu0 0.0
    %2978 = vmatpush1.msra.mxu0 0.0
    %2979 = vmatprep.subr.mxu0 0.0
    %2980 = vmatpush1.msra.mxu0 %v2944
    %2981 = vmatprep.subr.mxu0 0.0
    %2982 = vmatpush2.msra.mxu0 0.0
    %2983 = vmatprep.subr.mxu0 0.0
    %2984 = vmatpush2.msra.mxu0 0.0
    %2985 = vmatprep.subr.mxu0 0.0
    %2986 = vmatpush2.msra.mxu0 0.0
    %2987 = vmatprep.subr.mxu0 0.0
    %2988 = vmatpush2.msra.mxu0 0.0
    %2989 = vmatprep.subr.mxu0 0.0
    %2990 = vmatpush2.msra.mxu0 0.0
    %2991 = vmatprep.subr.mxu0 0.0
    %2992 = vmatpush2.msra.mxu0 0.0
    %2993 = vmatprep.subr.mxu0 0.0
    %2994 = vmatpush2.msra.mxu0 0.0
    %2995 = vmatprep.subr.mxu0 0.0
    %2996 = vmatpush2.msra.mxu0 0.0
    %2997 = vmatprep.subr.mxu0 0.0
    %2998 = vmatpush2.msra.mxu0 0.0
    %2999 = vmatprep.subr.mxu0 0.0
    %3000 = vmatpush2.msra.mxu0 0.0
    %3001 = vmatprep.subr.mxu0 0.0
    %3002 = vmatpush2.msra.mxu0 0.0
    %3003 = vmatprep.subr.mxu0 0.0
    %3004 = vmatpush2.msra.mxu0 0.0
    %3005 = vmatprep.subr.mxu0 0.0
    %3006 = vmatpush2.msra.mxu0 0.0
    %3007 = vmatprep.subr.mxu0 0.0
    %3008 = vmatpush2.msra.mxu0 0.0
    %3009 = vmatprep.subr.mxu0 0.0
    %3010 = vmatpush2.msra.mxu0 0.0
    %3011 = vmatprep.subr.mxu0 0.0
    %3012 = vmatpush2.msra.mxu0 0.0
    %3013 = vmatprep.mubr.f32.mxu0 0.0
    %3014 = vmatmul.mubr.f32.gmra.mxu0 %v2947
    %v3015 = vpop.f32.mrf.mxu0
    %v3016 = vadd.f32 0.0, %v3015
    %v3017 = vpop.f32.mrf.mxu0
    %3018 = vdwg.mxu0
    %3019 = vrot.lane.b32.xlu0 %v2023, 104
    %v3020 = vpop.permute.xlu0 %3019
    %3021 = vrot.lane.b32.xlu0 %v2023, 72
    %v3022 = vpop.permute.xlu0 %3021
    %v3023 = vsel %vm208, %v3020, 0
    %v3025 = vsel %vm208, %v3022, 0
    %3027 = vmatprep.subr.mxu0 0.0
    %3028 = vmatpush1.xpose.msra.mxu0 0.0
    %3029 = vmatprep.subr.mxu0 0.0
    %3030 = vmatpush1.xpose.msra.mxu0 0.0
    %3031 = vmatprep.subr.mxu0 0.0
    %3032 = vmatpush1.xpose.msra.mxu0 0.0
    %3033 = vmatprep.subr.mxu0 0.0
    %3034 = vmatpush1.xpose.msra.mxu0 0.0
    %3035 = vmatprep.subr.mxu0 0.0
    %3036 = vmatpush1.xpose.msra.mxu0 0.0
    %3037 = vmatprep.subr.mxu0 0.0
    %3038 = vmatpush1.xpose.msra.mxu0 0.0
    %3039 = vmatprep.subr.mxu0 0.0
    %3040 = vmatpush1.xpose.msra.mxu0 0.0
    %3041 = vmatprep.subr.mxu0 0.0
    %3042 = vmatpush1.xpose.msra.mxu0 0.0
    %3043 = vmatprep.subr.mxu0 0.0
    %3044 = vmatpush1.xpose.msra.mxu0 0.0
    %3045 = vmatprep.subr.mxu0 0.0
    %3046 = vmatpush1.xpose.msra.mxu0 0.0
    %3047 = vmatprep.subr.mxu0 0.0
    %3048 = vmatpush1.xpose.msra.mxu0 0.0
    %3049 = vmatprep.subr.mxu0 0.0
    %3050 = vmatpush1.xpose.msra.mxu0 0.0
    %3051 = vmatprep.subr.mxu0 0.0
    %3052 = vmatpush1.xpose.msra.mxu0 0.0
    %3053 = vmatprep.subr.mxu0 0.0
    %3054 = vmatpush1.xpose.msra.mxu0 0.0
    %3055 = vmatprep.subr.mxu0 0.0
    %3056 = vmatpush1.xpose.msra.mxu0 0.0
    %3057 = vmatprep.subr.mxu0 0.0
    %3058 = vmatpush1.xpose.msra.mxu0 %v3025
    %3059 = vmatprep.subr.mxu0 0.0
    %3060 = vmatpush2.xpose.msra.mxu0 0.0
    %3061 = vmatprep.subr.mxu0 0.0
    %3062 = vmatpush2.xpose.msra.mxu0 0.0
    %3063 = vmatprep.subr.mxu0 0.0
    %3064 = vmatpush2.xpose.msra.mxu0 0.0
    %3065 = vmatprep.subr.mxu0 0.0
    %3066 = vmatpush2.xpose.msra.mxu0 0.0
    %3067 = vmatprep.subr.mxu0 0.0
    %3068 = vmatpush2.xpose.msra.mxu0 0.0
    %3069 = vmatprep.subr.mxu0 0.0
    %3070 = vmatpush2.xpose.msra.mxu0 0.0
    %3071 = vmatprep.subr.mxu0 0.0
    %3072 = vmatpush2.xpose.msra.mxu0 0.0
    %3073 = vmatprep.subr.mxu0 0.0
    %3074 = vmatpush2.xpose.msra.mxu0 0.0
    %3075 = vmatprep.subr.mxu0 0.0
    %3076 = vmatpush2.xpose.msra.mxu0 0.0
    %3077 = vmatprep.subr.mxu0 0.0
    %3078 = vmatpush2.xpose.msra.mxu0 0.0
    %3079 = vmatprep.subr.mxu0 0.0
    %3080 = vmatpush2.xpose.msra.mxu0 0.0
    %3081 = vmatprep.subr.mxu0 0.0
    %3082 = vmatpush2.xpose.msra.mxu0 0.0
    %3083 = vmatprep.subr.mxu0 0.0
    %3084 = vmatpush2.xpose.msra.mxu0 0.0
    %3085 = vmatprep.subr.mxu0 0.0
    %3086 = vmatpush2.xpose.msra.mxu0 0.0
    %3087 = vmatprep.subr.mxu0 0.0
    %3088 = vmatpush2.xpose.msra.mxu0 0.0
    %3089 = vmatprep.subr.mxu0 0.0
    %3090 = vmatpush2.xpose.msra.mxu0 0.0
    %3091 = vmatprep.mubr.f32.mxu0 0.0
    %3092 = vmatmul.mubr.f32.gmra.mxu0 %v3023
    %v3093 = vpop.f32.mrf.mxu0
    %v3094 = vadd.f32 0.0, %v3093
    %v3095 = vpop.f32.mrf.mxu0
    %3096 = vdwg.mxu0
    %3097 = vrot.lane.b32.xlu0 %v2028, 104
    %v3098 = vpop.permute.xlu0 %3097
    %3099 = vrot.lane.b32.xlu0 %v2028, 72
    %v3100 = vpop.permute.xlu0 %3099
    %v3101 = vsel %vm208, %v3098, 0
    %v3103 = vsel %vm208, %v3100, 0
    %3105 = vmatprep.subr.mxu0 0.0
    %3106 = vmatpush1.xpose.msra.mxu0 0.0
    %3107 = vmatprep.subr.mxu0 0.0
    %3108 = vmatpush1.xpose.msra.mxu0 0.0
    %3109 = vmatprep.subr.mxu0 0.0
    %3110 = vmatpush1.xpose.msra.mxu0 0.0
    %3111 = vmatprep.subr.mxu0 0.0
    %3112 = vmatpush1.xpose.msra.mxu0 0.0
    %3113 = vmatprep.subr.mxu0 0.0
    %3114 = vmatpush1.xpose.msra.mxu0 0.0
    %3115 = vmatprep.subr.mxu0 0.0
    %3116 = vmatpush1.xpose.msra.mxu0 0.0
    %3117 = vmatprep.subr.mxu0 0.0
    %3118 = vmatpush1.xpose.msra.mxu0 0.0
    %3119 = vmatprep.subr.mxu0 0.0
    %3120 = vmatpush1.xpose.msra.mxu0 0.0
    %3121 = vmatprep.subr.mxu0 0.0
    %3122 = vmatpush1.xpose.msra.mxu0 0.0
    %3123 = vmatprep.subr.mxu0 0.0
    %3124 = vmatpush1.xpose.msra.mxu0 0.0
    %3125 = vmatprep.subr.mxu0 0.0
    %3126 = vmatpush1.xpose.msra.mxu0 0.0
    %3127 = vmatprep.subr.mxu0 0.0
    %3128 = vmatpush1.xpose.msra.mxu0 0.0
    %3129 = vmatprep.subr.mxu0 0.0
    %3130 = vmatpush1.xpose.msra.mxu0 0.0
    %3131 = vmatprep.subr.mxu0 0.0
    %3132 = vmatpush1.xpose.msra.mxu0 0.0
    %3133 = vmatprep.subr.mxu0 0.0
    %3134 = vmatpush1.xpose.msra.mxu0 0.0
    %3135 = vmatprep.subr.mxu0 0.0
    %3136 = vmatpush1.xpose.msra.mxu0 %v3103
    %3137 = vmatprep.subr.mxu0 0.0
    %3138 = vmatpush2.xpose.msra.mxu0 0.0
    %3139 = vmatprep.subr.mxu0 0.0
    %3140 = vmatpush2.xpose.msra.mxu0 0.0
    %3141 = vmatprep.subr.mxu0 0.0
    %3142 = vmatpush2.xpose.msra.mxu0 0.0
    %3143 = vmatprep.subr.mxu0 0.0
    %3144 = vmatpush2.xpose.msra.mxu0 0.0
    %3145 = vmatprep.subr.mxu0 0.0
    %3146 = vmatpush2.xpose.msra.mxu0 0.0
    %3147 = vmatprep.subr.mxu0 0.0
    %3148 = vmatpush2.xpose.msra.mxu0 0.0
    %3149 = vmatprep.subr.mxu0 0.0
    %3150 = vmatpush2.xpose.msra.mxu0 0.0
    %3151 = vmatprep.subr.mxu0 0.0
    %3152 = vmatpush2.xpose.msra.mxu0 0.0
    %3153 = vmatprep.subr.mxu0 0.0
    %3154 = vmatpush2.xpose.msra.mxu0 0.0
    %3155 = vmatprep.subr.mxu0 0.0
    %3156 = vmatpush2.xpose.msra.mxu0 0.0
    %3157 = vmatprep.subr.mxu0 0.0
    %3158 = vmatpush2.xpose.msra.mxu0 0.0
    %3159 = vmatprep.subr.mxu0 0.0
    %3160 = vmatpush2.xpose.msra.mxu0 0.0
    %3161 = vmatprep.subr.mxu0 0.0
    %3162 = vmatpush2.xpose.msra.mxu0 0.0
    %3163 = vmatprep.subr.mxu0 0.0
    %3164 = vmatpush2.xpose.msra.mxu0 0.0
    %3165 = vmatprep.subr.mxu0 0.0
    %3166 = vmatpush2.xpose.msra.mxu0 0.0
    %3167 = vmatprep.subr.mxu0 0.0
    %3168 = vmatpush2.xpose.msra.mxu0 0.0
    %3169 = vmatprep.mubr.f32.mxu0 0.0
    %3170 = vmatmul.mubr.f32.gmra.mxu0 %v3101
    %v3171 = vpop.f32.mrf.mxu0
    %v3172 = vadd.f32 0.0, %v3171
    %v3173 = vpop.f32.mrf.mxu0
    %3174 = vdwg.mxu0
    %v3175 = vsel %vm208, %v3094, -inf
    %3176 = vmax.xlane.f32.xlu0 %v3175
    %v3177 = vpop.xlane.xlu0 %3176
    %v3178 = vsel %vm208, %v3172, -inf
    %3179 = vmax.xlane.f32.xlu0 %v3178
    %v3180 = vpop.xlane.xlu0 %3179
    %v3181 = vsub.f32 %v3094, %v3177
    %v3182 = vsub.f32 %v3172, %v3180
    %v3183 = vmul.f32 %v3181, 1.442695
    %v3184 = vpow.pop %v3183
    %v3185 = vmul.f32 %v3182, 1.442695
    %v3186 = vpow.pop %v3185
    %v3187 = vsel %vm208, %v3184, 0.0
    %3188 = vadd.xlane.f32.xlu0 %v3187
    %v3189 = vpop.xlane.xlu0 %3188
    %v3190 = vsel %vm208, %v3186, 0.0
    %3191 = vadd.xlane.f32.xlu0 %v3190
    %v3192 = vpop.xlane.xlu0 %3191
    %v3193 = vrcp.pop %v3189
    %v3194 = vrcp.pop %v3192
    %v3195 = vmul.f32 %v3184, %v3193
    %v3196 = vmul.f32 %v3186, %v3194
    %3197 = vrot.lane.b32.xlu0 %v2023, 40
    %v3198 = vpop.permute.xlu0 %3197
    %v3201 = vsel %vm208, %v3195, 0
    %3203 = vmatprep.subr.mxu0 0.0
    %3204 = vmatpush1.msra.mxu0 0.0
    %3205 = vmatprep.subr.mxu0 0.0
    %3206 = vmatpush1.msra.mxu0 0.0
    %3207 = vmatprep.subr.mxu0 0.0
    %3208 = vmatpush1.msra.mxu0 0.0
    %3209 = vmatprep.subr.mxu0 0.0
    %3210 = vmatpush1.msra.mxu0 0.0
    %3211 = vmatprep.subr.mxu0 0.0
    %3212 = vmatpush1.msra.mxu0 0.0
    %3213 = vmatprep.subr.mxu0 0.0
    %3214 = vmatpush1.msra.mxu0 0.0
    %3215 = vmatprep.subr.mxu0 0.0
    %3216 = vmatpush1.msra.mxu0 0.0
    %3217 = vmatprep.subr.mxu0 0.0
    %3218 = vmatpush1.msra.mxu0 0.0
    %3219 = vmatprep.subr.mxu0 0.0
    %3220 = vmatpush1.msra.mxu0 0.0
    %3221 = vmatprep.subr.mxu0 0.0
    %3222 = vmatpush1.msra.mxu0 0.0
    %3223 = vmatprep.subr.mxu0 0.0
    %3224 = vmatpush1.msra.mxu0 0.0
    %3225 = vmatprep.subr.mxu0 0.0
    %3226 = vmatpush1.msra.mxu0 0.0
    %3227 = vmatprep.subr.mxu0 0.0
    %3228 = vmatpush1.msra.mxu0 0.0
    %3229 = vmatprep.subr.mxu0 0.0
    %3230 = vmatpush1.msra.mxu0 0.0
    %3231 = vmatprep.subr.mxu0 0.0
    %3232 = vmatpush1.msra.mxu0 0.0
    %3233 = vmatprep.subr.mxu0 0.0
    %3234 = vmatpush1.msra.mxu0 %v3198
    %3235 = vmatprep.subr.mxu0 0.0
    %3236 = vmatpush2.msra.mxu0 0.0
    %3237 = vmatprep.subr.mxu0 0.0
    %3238 = vmatpush2.msra.mxu0 0.0
    %3239 = vmatprep.subr.mxu0 0.0
    %3240 = vmatpush2.msra.mxu0 0.0
    %3241 = vmatprep.subr.mxu0 0.0
    %3242 = vmatpush2.msra.mxu0 0.0
    %3243 = vmatprep.subr.mxu0 0.0
    %3244 = vmatpush2.msra.mxu0 0.0
    %3245 = vmatprep.subr.mxu0 0.0
    %3246 = vmatpush2.msra.mxu0 0.0
    %3247 = vmatprep.subr.mxu0 0.0
    %3248 = vmatpush2.msra.mxu0 0.0
    %3249 = vmatprep.subr.mxu0 0.0
    %3250 = vmatpush2.msra.mxu0 0.0
    %3251 = vmatprep.subr.mxu0 0.0
    %3252 = vmatpush2.msra.mxu0 0.0
    %3253 = vmatprep.subr.mxu0 0.0
    %3254 = vmatpush2.msra.mxu0 0.0
    %3255 = vmatprep.subr.mxu0 0.0
    %3256 = vmatpush2.msra.mxu0 0.0
    %3257 = vmatprep.subr.mxu0 0.0
    %3258 = vmatpush2.msra.mxu0 0.0
    %3259 = vmatprep.subr.mxu0 0.0
    %3260 = vmatpush2.msra.mxu0 0.0
    %3261 = vmatprep.subr.mxu0 0.0
    %3262 = vmatpush2.msra.mxu0 0.0
    %3263 = vmatprep.subr.mxu0 0.0
    %3264 = vmatpush2.msra.mxu0 0.0
    %3265 = vmatprep.subr.mxu0 0.0
    %3266 = vmatpush2.msra.mxu0 0.0
    %3267 = vmatprep.mubr.f32.mxu0 0.0
    %3268 = vmatmul.mubr.f32.gmra.mxu0 %v3201
    %v3269 = vpop.f32.mrf.mxu0
    %v3270 = vadd.f32 0.0, %v3269
    %v3271 = vpop.f32.mrf.mxu0
    %3272 = vdwg.mxu0
    %3273 = vrot.lane.b32.xlu0 %v2028, 40
    %v3274 = vpop.permute.xlu0 %3273
    %v3277 = vsel %vm208, %v3196, 0
    %3279 = vmatprep.subr.mxu0 0.0
    %3280 = vmatpush1.msra.mxu0 0.0
    %3281 = vmatprep.subr.mxu0 0.0
    %3282 = vmatpush1.msra.mxu0 0.0
    %3283 = vmatprep.subr.mxu0 0.0
    %3284 = vmatpush1.msra.mxu0 0.0
    %3285 = vmatprep.subr.mxu0 0.0
    %3286 = vmatpush1.msra.mxu0 0.0
    %3287 = vmatprep.subr.mxu0 0.0
    %3288 = vmatpush1.msra.mxu0 0.0
    %3289 = vmatprep.subr.mxu0 0.0
    %3290 = vmatpush1.msra.mxu0 0.0
    %3291 = vmatprep.subr.mxu0 0.0
    %3292 = vmatpush1.msra.mxu0 0.0
    %3293 = vmatprep.subr.mxu0 0.0
    %3294 = vmatpush1.msra.mxu0 0.0
    %3295 = vmatprep.subr.mxu0 0.0
    %3296 = vmatpush1.msra.mxu0 0.0
    %3297 = vmatprep.subr.mxu0 0.0
    %3298 = vmatpush1.msra.mxu0 0.0
    %3299 = vmatprep.subr.mxu0 0.0
    %3300 = vmatpush1.msra.mxu0 0.0
    %3301 = vmatprep.subr.mxu0 0.0
    %3302 = vmatpush1.msra.mxu0 0.0
    %3303 = vmatprep.subr.mxu0 0.0
    %3304 = vmatpush1.msra.mxu0 0.0
    %3305 = vmatprep.subr.mxu0 0.0
    %3306 = vmatpush1.msra.mxu0 0.0
    %3307 = vmatprep.subr.mxu0 0.0
    %3308 = vmatpush1.msra.mxu0 0.0
    %3309 = vmatprep.subr.mxu0 0.0
    %3310 = vmatpush1.msra.mxu0 %v3274
    %3311 = vmatprep.subr.mxu0 0.0
    %3312 = vmatpush2.msra.mxu0 0.0
    %3313 = vmatprep.subr.mxu0 0.0
    %3314 = vmatpush2.msra.mxu0 0.0
    %3315 = vmatprep.subr.mxu0 0.0
    %3316 = vmatpush2.msra.mxu0 0.0
    %3317 = vmatprep.subr.mxu0 0.0
    %3318 = vmatpush2.msra.mxu0 0.0
    %3319 = vmatprep.subr.mxu0 0.0
    %3320 = vmatpush2.msra.mxu0 0.0
    %3321 = vmatprep.subr.mxu0 0.0
    %3322 = vmatpush2.msra.mxu0 0.0
    %3323 = vmatprep.subr.mxu0 0.0
    %3324 = vmatpush2.msra.mxu0 0.0
    %3325 = vmatprep.subr.mxu0 0.0
    %3326 = vmatpush2.msra.mxu0 0.0
    %3327 = vmatprep.subr.mxu0 0.0
    %3328 = vmatpush2.msra.mxu0 0.0
    %3329 = vmatprep.subr.mxu0 0.0
    %3330 = vmatpush2.msra.mxu0 0.0
    %3331 = vmatprep.subr.mxu0 0.0
    %3332 = vmatpush2.msra.mxu0 0.0
    %3333 = vmatprep.subr.mxu0 0.0
    %3334 = vmatpush2.msra.mxu0 0.0
    %3335 = vmatprep.subr.mxu0 0.0
    %3336 = vmatpush2.msra.mxu0 0.0
    %3337 = vmatprep.subr.mxu0 0.0
    %3338 = vmatpush2.msra.mxu0 0.0
    %3339 = vmatprep.subr.mxu0 0.0
    %3340 = vmatpush2.msra.mxu0 0.0
    %3341 = vmatprep.subr.mxu0 0.0
    %3342 = vmatpush2.msra.mxu0 0.0
    %3343 = vmatprep.mubr.f32.mxu0 0.0
    %3344 = vmatmul.mubr.f32.gmra.mxu0 %v3277
    %v3345 = vpop.f32.mrf.mxu0
    %v3346 = vadd.f32 0.0, %v3345
    %v3347 = vpop.f32.mrf.mxu0
    %3348 = vdwg.mxu0
    %3351 = vrot.lane.b32.xlu0 %v2610, 8
    %v3352 = vpop.permute.xlu0 %3351
    %3353 = vrot.lane.b32.xlu0 %v2686, 8
    %v3354 = vpop.permute.xlu0 %3353
    %3359 = vrot.lane.b32.xlu0 %v2940, 16
    %v3360 = vpop.permute.xlu0 %3359
    %3361 = vrot.lane.b32.xlu0 %v3016, 16
    %v3362 = vpop.permute.xlu0 %3361
    %3367 = vrot.lane.b32.xlu0 %v3270, 24
    %v3368 = vpop.permute.xlu0 %3367
    %3369 = vrot.lane.b32.xlu0 %v3346, 24
    %v3370 = vpop.permute.xlu0 %3369
    %v3373 = vsel %vm208, %v2280, %v3352
    %v3374 = vsel %vm208, %v2356, %v3354
    %v3375 = vsel %vm1550, %v3373, %v3360
    %v3376 = vsel %vm1550, %v3374, %v3362
    %v3377 = vsel %vm1553, %v3375, %v3368
    %v3378 = vsel %vm1553, %v3376, %v3370
    %v3379 = vlaneseq
    %v3380 = vshrl.u32 %v3379, 7
    %v3381 = vsub.s32 1, %v3380
    %v3382 = vrot.slane %v1945, %v3381
    %3387 = vrot.lane.b32.xlu0 %v1927, 32
    %v3388 = vpop.permute.xlu0 %3387
    %3389 = vrot.lane.b32.xlu0 %v1929, 32
    %v3390 = vpop.permute.xlu0 %3389
    %3391 = vrot.lane.b32.xlu0 %v1931, 32
    %v3392 = vpop.permute.xlu0 %3391
    %3393 = vrot.lane.b32.xlu0 %v1933, 32
    %v3394 = vpop.permute.xlu0 %3393
    %v3400 = vsel %vm63, %v3377, 0
    %v3403 = vsel %vm63, %v3378, 0
    %3405 = vmatprep.subr.mxu0 0.0
    %3406 = vmatpush1.msra.mxu0 0.0
    %3407 = vmatprep.subr.mxu0 0.0
    %3408 = vmatpush1.msra.mxu0 0.0
    %3409 = vmatprep.subr.mxu0 0.0
    %3410 = vmatpush1.msra.mxu0 0.0
    %3411 = vmatprep.subr.mxu0 0.0
    %3412 = vmatpush1.msra.mxu0 0.0
    %3413 = vmatprep.subr.mxu0 0.0
    %3414 = vmatpush1.msra.mxu0 0.0
    %3415 = vmatprep.subr.mxu0 0.0
    %3416 = vmatpush1.msra.mxu0 0.0
    %3417 = vmatprep.subr.mxu0 0.0
    %3418 = vmatpush1.msra.mxu0 0.0
    %3419 = vmatprep.subr.mxu0 0.0
    %3420 = vmatpush1.msra.mxu0 0.0
    %3421 = vmatprep.subr.mxu0 0.0
    %3422 = vmatpush1.msra.mxu0 0.0
    %3423 = vmatprep.subr.mxu0 0.0
    %3424 = vmatpush1.msra.mxu0 0.0
    %3425 = vmatprep.subr.mxu0 0.0
    %3426 = vmatpush1.msra.mxu0 0.0
    %3427 = vmatprep.subr.mxu0 0.0
    %3428 = vmatpush1.msra.mxu0 0.0
    %3429 = vmatprep.subr.mxu0 0.0
    %3430 = vmatpush1.msra.mxu0 %v3394
    %3431 = vmatprep.subr.mxu0 0.0
    %3432 = vmatpush1.msra.mxu0 %v3392
    %3433 = vmatprep.subr.mxu0 0.0
    %3434 = vmatpush1.msra.mxu0 %v3390
    %3435 = vmatprep.subr.mxu0 0.0
    %3436 = vmatpush1.msra.mxu0 %v3388
    %3437 = vmatprep.subr.mxu0 0.0
    %3438 = vmatpush2.msra.mxu0 0.0
    %3439 = vmatprep.subr.mxu0 0.0
    %3440 = vmatpush2.msra.mxu0 0.0
    %3441 = vmatprep.subr.mxu0 0.0
    %3442 = vmatpush2.msra.mxu0 0.0
    %3443 = vmatprep.subr.mxu0 0.0
    %3444 = vmatpush2.msra.mxu0 0.0
    %3445 = vmatprep.subr.mxu0 0.0
    %3446 = vmatpush2.msra.mxu0 0.0
    %3447 = vmatprep.subr.mxu0 0.0
    %3448 = vmatpush2.msra.mxu0 0.0
    %3449 = vmatprep.subr.mxu0 0.0
    %3450 = vmatpush2.msra.mxu0 0.0
    %3451 = vmatprep.subr.mxu0 0.0
    %3452 = vmatpush2.msra.mxu0 0.0
    %3453 = vmatprep.subr.mxu0 0.0
    %3454 = vmatpush2.msra.mxu0 0.0
    %3455 = vmatprep.subr.mxu0 0.0
    %3456 = vmatpush2.msra.mxu0 0.0
    %3457 = vmatprep.subr.mxu0 0.0
    %3458 = vmatpush2.msra.mxu0 0.0
    %3459 = vmatprep.subr.mxu0 0.0
    %3460 = vmatpush2.msra.mxu0 0.0
    %3461 = vmatprep.subr.mxu0 0.0
    %3462 = vmatpush2.msra.mxu0 0.0
    %3463 = vmatprep.subr.mxu0 0.0
    %3464 = vmatpush2.msra.mxu0 0.0
    %3465 = vmatprep.subr.mxu0 0.0
    %3466 = vmatpush2.msra.mxu0 0.0
    %3467 = vmatprep.subr.mxu0 0.0
    %3468 = vmatpush2.msra.mxu0 0.0
    %3469 = vmatprep.mubr.f32.mxu0 0.0
    %3470 = vmatmul.mubr.f32.gmra.mxu0 %v3400
    %v3471 = vpop.f32.mrf.mxu0
    %v3472 = vadd.f32 %v3382, %v3471
    %v3473 = vpop.f32.mrf.mxu0
    %3474 = vmatprep.mubr.f32.mxu0 0.0
    %3475 = vmatmul.mubr.f32.gmra.mxu0 %v3403
    %v3476 = vpop.f32.mrf.mxu0
    %v3477 = vadd.f32 %v3382, %v3476
    %v3478 = vpop.f32.mrf.mxu0
    %3479 = vdwg.mxu0
    %v3480 = vadd.f32 %v1924, %v3472
    %v3481 = vadd.f32 %v1925, %v3477
    %v3482 = vsel %vm63, %v3480, 0.0
    %3483 = vadd.xlane.f32.xlu0 %v3482
    %v3484 = vpop.xlane.xlu0 %3483
    %v3485 = vsel %vm63, %v3481, 0.0
    %3486 = vadd.xlane.f32.xlu0 %v3485
    %v3487 = vpop.xlane.xlu0 %3486
    %v3488 = vmul.f32 %v3484, %v70
    %v3489 = vmul.f32 %v3487, %v70
    %v3490 = vsub.f32 %v3480, %v3488
    %v3491 = vsub.f32 %v3481, %v3489
    %v3492 = vmul.f32 %v3490, %v3490
    %v3493 = vmul.f32 %v3491, %v3491
    %v3494 = vsel %vm63, %v3492, 0.0
    %3495 = vadd.xlane.f32.xlu0 %v3494
    %v3496 = vpop.xlane.xlu0 %3495
    %v3497 = vsel %vm63, %v3493, 0.0
    %3498 = vadd.xlane.f32.xlu0 %v3497
    %v3499 = vpop.xlane.xlu0 %3498
    %v3500 = vmul.f32 %v3496, %v70
    %v3501 = vmul.f32 %v3499, %v70
    %v3502 = vadd.f32 %v3500, 1e-12
    %v3503 = vadd.f32 %v3501, 1e-12
    %v3504 = vrsqrt.pop %v3502
    %v3505 = vrsqrt.pop %v3503
    %v3506 = vmul.f32 %v3490, %v3504
    %v3507 = vmul.f32 %v3491, %v3505
    %v3508 = vlaneseq
    %v3509 = vshrl.u32 %v3508, 7
    %v3510 = vsub.s32 4, %v3509
    %v3511 = vrot.slane %v1945, %v3510
    %v3512 = vmul.f32 %v3506, %v3511
    %v3513 = vmul.f32 %v3507, %v3511
    %v3514 = vlaneseq
    %v3515 = vshrl.u32 %v3514, 7
    %v3516 = vsub.s32 5, %v3515
    %v3517 = vrot.slane %v1945, %v3516
    %v3518 = vadd.f32 %v3512, %v3517
    %v3519 = vadd.f32 %v3513, %v3517
    %v3520 = vlaneseq
    %v3521 = vshrl.u32 %v3520, 7
    %v3522 = vsub.s32 2, %v3521
    %v3523 = vrot.slane %v1945, %v3522
    %v3525 = vsel %vm63, %v3518, 0
    %v3528 = vsel %vm63, %v3519, 0
    %3530 = vmatprep.subr.mxu0 0.0
    %3531 = vmatpush1.msra.mxu0 0.0
    %3532 = vmatprep.subr.mxu0 0.0
    %3533 = vmatpush1.msra.mxu0 0.0
    %3534 = vmatprep.subr.mxu0 0.0
    %3535 = vmatpush1.msra.mxu0 0.0
    %3536 = vmatprep.subr.mxu0 0.0
    %3537 = vmatpush1.msra.mxu0 0.0
    %3538 = vmatprep.subr.mxu0 0.0
    %3539 = vmatpush1.msra.mxu0 0.0
    %3540 = vmatprep.subr.mxu0 0.0
    %3541 = vmatpush1.msra.mxu0 0.0
    %3542 = vmatprep.subr.mxu0 0.0
    %3543 = vmatpush1.msra.mxu0 0.0
    %3544 = vmatprep.subr.mxu0 0.0
    %3545 = vmatpush1.msra.mxu0 0.0
    %3546 = vmatprep.subr.mxu0 0.0
    %3547 = vmatpush1.msra.mxu0 0.0
    %3548 = vmatprep.subr.mxu0 0.0
    %3549 = vmatpush1.msra.mxu0 0.0
    %3550 = vmatprep.subr.mxu0 0.0
    %3551 = vmatpush1.msra.mxu0 0.0
    %3552 = vmatprep.subr.mxu0 0.0
    %3553 = vmatpush1.msra.mxu0 0.0
    %3554 = vmatprep.subr.mxu0 0.0
    %3555 = vmatpush1.msra.mxu0 %v1934
    %3556 = vmatprep.subr.mxu0 0.0
    %3557 = vmatpush1.msra.mxu0 %v1932
    %3558 = vmatprep.subr.mxu0 0.0
    %3559 = vmatpush1.msra.mxu0 %v1930
    %3560 = vmatprep.subr.mxu0 0.0
    %3561 = vmatpush1.msra.mxu0 %v1928
    %3562 = vmatprep.subr.mxu0 0.0
    %3563 = vmatpush2.msra.mxu0 0.0
    %3564 = vmatprep.subr.mxu0 0.0
    %3565 = vmatpush2.msra.mxu0 0.0
    %3566 = vmatprep.subr.mxu0 0.0
    %3567 = vmatpush2.msra.mxu0 0.0
    %3568 = vmatprep.subr.mxu0 0.0
    %3569 = vmatpush2.msra.mxu0 0.0
    %3570 = vmatprep.subr.mxu0 0.0
    %3571 = vmatpush2.msra.mxu0 0.0
    %3572 = vmatprep.subr.mxu0 0.0
    %3573 = vmatpush2.msra.mxu0 0.0
    %3574 = vmatprep.subr.mxu0 0.0
    %3575 = vmatpush2.msra.mxu0 0.0
    %3576 = vmatprep.subr.mxu0 0.0
    %3577 = vmatpush2.msra.mxu0 0.0
    %3578 = vmatprep.subr.mxu0 0.0
    %3579 = vmatpush2.msra.mxu0 0.0
    %3580 = vmatprep.subr.mxu0 0.0
    %3581 = vmatpush2.msra.mxu0 0.0
    %3582 = vmatprep.subr.mxu0 0.0
    %3583 = vmatpush2.msra.mxu0 0.0
    %3584 = vmatprep.subr.mxu0 0.0
    %3585 = vmatpush2.msra.mxu0 0.0
    %3586 = vmatprep.subr.mxu0 0.0
    %3587 = vmatpush2.msra.mxu0 0.0
    %3588 = vmatprep.subr.mxu0 0.0
    %3589 = vmatpush2.msra.mxu0 0.0
    %3590 = vmatprep.subr.mxu0 0.0
    %3591 = vmatpush2.msra.mxu0 0.0
    %3592 = vmatprep.subr.mxu0 0.0
    %3593 = vmatpush2.msra.mxu0 0.0
    %3594 = vmatprep.mubr.f32.mxu0 0.0
    %3595 = vmatmul.mubr.f32.gmra.mxu0 %v3525
    %v3596 = vpop.f32.mrf.mxu0
    %v3597 = vadd.f32 %v3523, %v3596
    %v3598 = vpop.f32.mrf.mxu0
    %3599 = vmatprep.mubr.f32.mxu0 0.0
    %3600 = vmatmul.mubr.f32.gmra.mxu0 %v3528
    %v3601 = vpop.f32.mrf.mxu0
    %v3602 = vadd.f32 %v3523, %v3601
    %v3603 = vpop.f32.mrf.mxu0
    %3604 = vdwg.mxu0
    %v3605 = vmul.f32 %v3597, 0.5
    %v3606 = vmul.f32 %v3602, 0.5
    %v3607 = vmul.f32 %v3597, 0.044715
    %v3608 = vmul.f32 %v3602, 0.044715
    %v3609 = vmul.f32 %v3607, %v3597
    %v3610 = vmul.f32 %v3608, %v3602
    %v3611 = vmul.f32 %v3609, %v3597
    %v3612 = vmul.f32 %v3610, %v3602
    %v3613 = vadd.f32 %v3597, %v3611
    %v3614 = vadd.f32 %v3602, %v3612
    %v3615 = vmul.f32 %v3613, 0.7978846
    %v3616 = vmul.f32 %v3614, 0.7978846
    %v3617 = vtanh.pop %v3615
    %v3618 = vtanh.pop %v3616
    %v3619 = vadd.f32 %v3617, 1.0
    %v3620 = vadd.f32 %v3618, 1.0
    %v3621 = vmul.f32 %v3605, %v3619
    %v3622 = vmul.f32 %v3606, %v3620
    %v3623 = vlaneseq
    %v3624 = vshrl.u32 %v3623, 7
    %v3625 = vsub.s32 3, %v3624
    %v3626 = vrot.slane %v1945, %v3625
    %v3628 = vsel %vm1804, %v3621, 0
    %v3631 = vsel %vm1804, %v3622, 0
    %3633 = vmatprep.subr.mxu0 0.0
    %3634 = vmatpush1.msra.mxu0 0.0
    %3635 = vmatprep.subr.mxu0 0.0
    %3636 = vmatpush1.msra.mxu0 0.0
    %3637 = vmatprep.subr.mxu0 0.0
    %3638 = vmatpush1.msra.mxu0 0.0
    %3639 = vmatprep.subr.mxu0 0.0
    %3640 = vmatpush1.msra.mxu0 0.0
    %3641 = vmatprep.subr.mxu0 0.0
    %3642 = vmatpush1.msra.mxu0 0.0
    %3643 = vmatprep.subr.mxu0 0.0
    %3644 = vmatpush1.msra.mxu0 0.0
    %3645 = vmatprep.subr.mxu0 0.0
    %3646 = vmatpush1.msra.mxu0 0.0
    %3647 = vmatprep.subr.mxu0 0.0
    %3648 = vmatpush1.msra.mxu0 0.0
    %3649 = vmatprep.subr.mxu0 0.0
    %3650 = vmatpush1.msra.mxu0 %v1943
    %3651 = vmatprep.subr.mxu0 0.0
    %3652 = vmatpush1.msra.mxu0 %v1942
    %3653 = vmatprep.subr.mxu0 0.0
    %3654 = vmatpush1.msra.mxu0 %v1941
    %3655 = vmatprep.subr.mxu0 0.0
    %3656 = vmatpush1.msra.mxu0 %v1940
    %3657 = vmatprep.subr.mxu0 0.0
    %3658 = vmatpush1.msra.mxu0 %v1939
    %3659 = vmatprep.subr.mxu0 0.0
    %3660 = vmatpush1.msra.mxu0 %v1938
    %3661 = vmatprep.subr.mxu0 0.0
    %3662 = vmatpush1.msra.mxu0 %v1937
    %3663 = vmatprep.subr.mxu0 0.0
    %3664 = vmatpush1.msra.mxu0 %v1936
    %3665 = vmatprep.subr.mxu0 0.0
    %3666 = vmatpush2.msra.mxu0 0.0
    %3667 = vmatprep.subr.mxu0 0.0
    %3668 = vmatpush2.msra.mxu0 0.0
    %3669 = vmatprep.subr.mxu0 0.0
    %3670 = vmatpush2.msra.mxu0 0.0
    %3671 = vmatprep.subr.mxu0 0.0
    %3672 = vmatpush2.msra.mxu0 0.0
    %3673 = vmatprep.subr.mxu0 0.0
    %3674 = vmatpush2.msra.mxu0 0.0
    %3675 = vmatprep.subr.mxu0 0.0
    %3676 = vmatpush2.msra.mxu0 0.0
    %3677 = vmatprep.subr.mxu0 0.0
    %3678 = vmatpush2.msra.mxu0 0.0
    %3679 = vmatprep.subr.mxu0 0.0
    %3680 = vmatpush2.msra.mxu0 0.0
    %3681 = vmatprep.subr.mxu0 0.0
    %3682 = vmatpush2.msra.mxu0 0.0
    %3683 = vmatprep.subr.mxu0 0.0
    %3684 = vmatpush2.msra.mxu0 0.0
    %3685 = vmatprep.subr.mxu0 0.0
    %3686 = vmatpush2.msra.mxu0 0.0
    %3687 = vmatprep.subr.mxu0 0.0
    %3688 = vmatpush2.msra.mxu0 0.0
    %3689 = vmatprep.subr.mxu0 0.0
    %3690 = vmatpush2.msra.mxu0 0.0
    %3691 = vmatprep.subr.mxu0 0.0
    %3692 = vmatpush2.msra.mxu0 0.0
    %3693 = vmatprep.subr.mxu0 0.0
    %3694 = vmatpush2.msra.mxu0 0.0
    %3695 = vmatprep.subr.mxu0 0.0
    %3696 = vmatpush2.msra.mxu0 0.0
    %3697 = vmatprep.mubr.f32.mxu0 0.0
    %3698 = vmatmul.mubr.f32.gmra.mxu0 %v3628
    %v3699 = vpop.f32.mrf.mxu0
    %v3700 = vadd.f32 %v3626, %v3699
    %v3701 = vpop.f32.mrf.mxu0
    %3702 = vmatprep.mubr.f32.mxu0 0.0
    %3703 = vmatmul.mubr.f32.gmra.mxu0 %v3631
    %v3704 = vpop.f32.mrf.mxu0
    %v3705 = vadd.f32 %v3626, %v3704
    %v3706 = vpop.f32.mrf.mxu0
    %3707 = vdwg.mxu0
    %v3708 = vadd.f32 %v3518, %v3700
    %v3709 = vadd.f32 %v3519, %v3705
    %v3710 = vsel %vm63, %v3708, 0.0
    %3711 = vadd.xlane.f32.xlu0 %v3710
    %v3712 = vpop.xlane.xlu0 %3711
    %v3713 = vsel %vm63, %v3709, 0.0
    %3714 = vadd.xlane.f32.xlu0 %v3713
    %v3715 = vpop.xlane.xlu0 %3714
    %v3716 = vmul.f32 %v3712, %v70
    %v3717 = vmul.f32 %v3715, %v70
    %v3718 = vsub.f32 %v3708, %v3716
    %v3719 = vsub.f32 %v3709, %v3717
    %v3720 = vmul.f32 %v3718, %v3718
    %v3721 = vmul.f32 %v3719, %v3719
    %v3722 = vsel %vm63, %v3720, 0.0
    %3723 = vadd.xlane.f32.xlu0 %v3722
    %v3724 = vpop.xlane.xlu0 %3723
    %v3725 = vsel %vm63, %v3721, 0.0
    %3726 = vadd.xlane.f32.xlu0 %v3725
    %v3727 = vpop.xlane.xlu0 %3726
    %v3728 = vmul.f32 %v3724, %v70
    %v3729 = vmul.f32 %v3727, %v70
    %v3730 = vadd.f32 %v3728, 1e-12
    %v3731 = vadd.f32 %v3729, 1e-12
    %v3732 = vrsqrt.pop %v3730
    %v3733 = vrsqrt.pop %v3731
    %v3734 = vmul.f32 %v3718, %v3732
    %v3735 = vmul.f32 %v3719, %v3733
    %v3736 = vlaneseq
    %v3737 = vshrl.u32 %v3736, 7
    %v3738 = vsub.s32 6, %v3737
    %v3739 = vrot.slane %v1945, %v3738
    %v3740 = vmul.f32 %v3734, %v3739
    %v3741 = vmul.f32 %v3735, %v3739
    %v3742 = vlaneseq
    %v3743 = vshrl.u32 %v3742, 7
    %v3744 = vsub.s32 7, %v3743
    %v3745 = vrot.slane %v1945, %v3744
    %v3746 = vadd.f32 %v3740, %v3745
    %v3747 = vadd.f32 %v3741, %v3745
    %v3748 = vlaneseq
    %v3749 = vshrl.u32 %v3748, 7
    %v3750 = vsub.s32 2, %v3749
    %v3751 = vrot.slane %v52, %v3750
    %v3754 = vrot.slane %v3747, 7
    %vm3755 = vcmask 1041409
    %v3756 = vsel %vm3755, %v3754, %v3746
    %v3757 = vsel %vm63, %v3756, 0
    %3759 = vmatprep.subr.mxu0 0.0
    %3760 = vmatpush1.msra.mxu0 0.0
    %3761 = vmatprep.subr.mxu0 0.0
    %3762 = vmatpush1.msra.mxu0 0.0
    %3763 = vmatprep.subr.mxu0 0.0
    %3764 = vmatpush1.msra.mxu0 0.0
    %3765 = vmatprep.subr.mxu0 0.0
    %3766 = vmatpush1.msra.mxu0 0.0
    %3767 = vmatprep.subr.mxu0 0.0
    %3768 = vmatpush1.msra.mxu0 0.0
    %3769 = vmatprep.subr.mxu0 0.0
    %3770 = vmatpush1.msra.mxu0 0.0
    %3771 = vmatprep.subr.mxu0 0.0
    %3772 = vmatpush1.msra.mxu0 0.0
    %3773 = vmatprep.subr.mxu0 0.0
    %3774 = vmatpush1.msra.mxu0 0.0
    %3775 = vmatprep.subr.mxu0 0.0
    %3776 = vmatpush1.msra.mxu0 0.0
    %3777 = vmatprep.subr.mxu0 0.0
    %3778 = vmatpush1.msra.mxu0 0.0
    %3779 = vmatprep.subr.mxu0 0.0
    %3780 = vmatpush1.msra.mxu0 0.0
    %3781 = vmatprep.subr.mxu0 0.0
    %3782 = vmatpush1.msra.mxu0 0.0
    %3783 = vmatprep.subr.mxu0 0.0
    %3784 = vmatpush1.msra.mxu0 %v59
    %3785 = vmatprep.subr.mxu0 0.0
    %3786 = vmatpush1.msra.mxu0 %v57
    %3787 = vmatprep.subr.mxu0 0.0
    %3788 = vmatpush1.msra.mxu0 %v55
    %3789 = vmatprep.subr.mxu0 0.0
    %3790 = vmatpush1.msra.mxu0 %v53
    %3791 = vmatprep.subr.mxu0 0.0
    %3792 = vmatpush2.msra.mxu0 0.0
    %3793 = vmatprep.subr.mxu0 0.0
    %3794 = vmatpush2.msra.mxu0 0.0
    %3795 = vmatprep.subr.mxu0 0.0
    %3796 = vmatpush2.msra.mxu0 0.0
    %3797 = vmatprep.subr.mxu0 0.0
    %3798 = vmatpush2.msra.mxu0 0.0
    %3799 = vmatprep.subr.mxu0 0.0
    %3800 = vmatpush2.msra.mxu0 0.0
    %3801 = vmatprep.subr.mxu0 0.0
    %3802 = vmatpush2.msra.mxu0 0.0
    %3803 = vmatprep.subr.mxu0 0.0
    %3804 = vmatpush2.msra.mxu0 0.0
    %3805 = vmatprep.subr.mxu0 0.0
    %3806 = vmatpush2.msra.mxu0 0.0
    %3807 = vmatprep.subr.mxu0 0.0
    %3808 = vmatpush2.msra.mxu0 0.0
    %3809 = vmatprep.subr.mxu0 0.0
    %3810 = vmatpush2.msra.mxu0 0.0
    %3811 = vmatprep.subr.mxu0 0.0
    %3812 = vmatpush2.msra.mxu0 0.0
    %3813 = vmatprep.subr.mxu0 0.0
    %3814 = vmatpush2.msra.mxu0 0.0
    %3815 = vmatprep.subr.mxu0 0.0
    %3816 = vmatpush2.msra.mxu0 0.0
    %3817 = vmatprep.subr.mxu0 0.0
    %3818 = vmatpush2.msra.mxu0 0.0
    %3819 = vmatprep.subr.mxu0 0.0
    %3820 = vmatpush2.msra.mxu0 0.0
    %3821 = vmatprep.subr.mxu0 0.0
    %3822 = vmatpush2.msra.mxu0 0.0
    %3823 = vmatprep.mubr.f32.mxu0 0.0
    %3824 = vmatmul.mubr.f32.gmra.mxu0 %v3757
    %v3825 = vpop.f32.mrf.mxu0
    %v3826 = vadd.f32 %v3751, %v3825
    %v3827 = vpop.f32.mrf.mxu0
    %3828 = vdwg.mxu0
    %v3829 = vtanh.pop %v3826
    %v3830 = vlaneseq
    %v3831 = vshrl.u32 %v3830, 7
    %v3832 = vsub.s32 3, %v3831
    %v3833 = vrot.slane %v52, %v3832
    %3842 = vrot.lane.b32.xlu0 %v53, 96
    %v3843 = vpop.permute.xlu0 %3842
    %3844 = vrot.lane.b32.xlu0 %v54, 96
    %v3845 = vpop.permute.xlu0 %3844
    %3846 = vrot.lane.b32.xlu0 %v55, 96
    %v3847 = vpop.permute.xlu0 %3846
    %3848 = vrot.lane.b32.xlu0 %v56, 96
    %v3849 = vpop.permute.xlu0 %3848
    %3850 = vrot.lane.b32.xlu0 %v57, 96
    %v3851 = vpop.permute.xlu0 %3850
    %3852 = vrot.lane.b32.xlu0 %v58, 96
    %v3853 = vpop.permute.xlu0 %3852
    %3854 = vrot.lane.b32.xlu0 %v59, 96
    %v3855 = vpop.permute.xlu0 %3854
    %3856 = vrot.lane.b32.xlu0 %v60, 96
    %v3857 = vpop.permute.xlu0 %3856
    %vm3858 = vcmask 785408
    %v3859 = vsel %vm3858, %v3843, %v3845
    %v3860 = vsel %vm3858, %v3847, %v3849
    %v3861 = vsel %vm3858, %v3851, %v3853
    %v3862 = vsel %vm3858, %v3855, %v3857
    %v3868 = vsel %vm63, %v3829, 0
    %3870 = vmatprep.subr.mxu0 0.0
    %3871 = vmatpush1.msra.mxu0 0.0
    %3872 = vmatprep.subr.mxu0 0.0
    %3873 = vmatpush1.msra.mxu0 0.0
    %3874 = vmatprep.subr.mxu0 0.0
    %3875 = vmatpush1.msra.mxu0 0.0
    %3876 = vmatprep.subr.mxu0 0.0
    %3877 = vmatpush1.msra.mxu0 0.0
    %3878 = vmatprep.subr.mxu0 0.0
    %3879 = vmatpush1.msra.mxu0 0.0
    %3880 = vmatprep.subr.mxu0 0.0
    %3881 = vmatpush1.msra.mxu0 0.0
    %3882 = vmatprep.subr.mxu0 0.0
    %3883 = vmatpush1.msra.mxu0 0.0
    %3884 = vmatprep.subr.mxu0 0.0
    %3885 = vmatpush1.msra.mxu0 0.0
    %3886 = vmatprep.subr.mxu0 0.0
    %3887 = vmatpush1.msra.mxu0 0.0
    %3888 = vmatprep.subr.mxu0 0.0
    %3889 = vmatpush1.msra.mxu0 0.0
    %3890 = vmatprep.subr.mxu0 0.0
    %3891 = vmatpush1.msra.mxu0 0.0
    %3892 = vmatprep.subr.mxu0 0.0
    %3893 = vmatpush1.msra.mxu0 0.0
    %3894 = vmatprep.subr.mxu0 0.0
    %3895 = vmatpush1.msra.mxu0 %v3862
    %3896 = vmatprep.subr.mxu0 0.0
    %3897 = vmatpush1.msra.mxu0 %v3861
    %3898 = vmatprep.subr.mxu0 0.0
    %3899 = vmatpush1.msra.mxu0 %v3860
    %3900 = vmatprep.subr.mxu0 0.0
    %3901 = vmatpush1.msra.mxu0 %v3859
    %3902 = vmatprep.subr.mxu0 0.0
    %3903 = vmatpush2.msra.mxu0 0.0
    %3904 = vmatprep.subr.mxu0 0.0
    %3905 = vmatpush2.msra.mxu0 0.0
    %3906 = vmatprep.subr.mxu0 0.0
    %3907 = vmatpush2.msra.mxu0 0.0
    %3908 = vmatprep.subr.mxu0 0.0
    %3909 = vmatpush2.msra.mxu0 0.0
    %3910 = vmatprep.subr.mxu0 0.0
    %3911 = vmatpush2.msra.mxu0 0.0
    %3912 = vmatprep.subr.mxu0 0.0
    %3913 = vmatpush2.msra.mxu0 0.0
    %3914 = vmatprep.subr.mxu0 0.0
    %3915 = vmatpush2.msra.mxu0 0.0
    %3916 = vmatprep.subr.mxu0 0.0
    %3917 = vmatpush2.msra.mxu0 0.0
    %3918 = vmatprep.subr.mxu0 0.0
    %3919 = vmatpush2.msra.mxu0 0.0
    %3920 = vmatprep.subr.mxu0 0.0
    %3921 = vmatpush2.msra.mxu0 0.0
    %3922 = vmatprep.subr.mxu0 0.0
    %3923 = vmatpush2.msra.mxu0 0.0
    %3924 = vmatprep.subr.mxu0 0.0
    %3925 = vmatpush2.msra.mxu0 0.0
    %3926 = vmatprep.subr.mxu0 0.0
    %3927 = vmatpush2.msra.mxu0 0.0
    %3928 = vmatprep.subr.mxu0 0.0
    %3929 = vmatpush2.msra.mxu0 0.0
    %3930 = vmatprep.subr.mxu0 0.0
    %3931 = vmatpush2.msra.mxu0 0.0
    %3932 = vmatprep.subr.mxu0 0.0
    %3933 = vmatpush2.msra.mxu0 0.0
    %3934 = vmatprep.mubr.f32.mxu0 0.0
    %3935 = vmatmul.mubr.f32.gmra.mxu0 %v3868
    %v3936 = vpop.f32.mrf.mxu0
    %v3937 = vadd.f32 %v3833, %v3936
    %v3938 = vpop.f32.mrf.mxu0
    %3939 = vdwg.mxu0
    %vm3940 = vcmask 1041408
    %v3941 = vsel %vm3940, %v3937, -inf
    %3942 = vmax.xlane.f32.xlu0 %v3941
    %v3943 = vpop.xlane.xlu0 %3942
    %v3944 = vsub.f32 %v3937, %v3943
    %v3945 = vmul.f32 %v3944, 1.442695
    %v3946 = vpow.pop %v3945
    %v3947 = vsel %vm3940, %v3946, 0.0
    %3948 = vadd.xlane.f32.xlu0 %v3947
    %v3949 = vpop.xlane.xlu0 %3948
    %v3950 = vrcp.pop %v3949
    %v3951 = vmul.f32 %v3946, %v3950
    %3952 = vst [vmem:[#allocation7] sm:$0x3] %v3951
    // Predicated region
    $region34: #{tpu_custom_call.1} parent=1 // pred_check
      _
    $region35: #{tpu_custom_call.1} parent=1 // pred_check_branch
      %3954 = sbr.rel (0) target = $region37
    $region36: #{tpu_custom_call.1} parent=1 // pred_region
      %s3956 = ssub.s32 32, 32
      %3957 = vsyncadd [#allocation4], %s3956
      %s3959 = sshll.u32 [#allocation7], 4
      %s3960 = int_to_ptr.vmem [resolvable:$true] %s3959
      %3962 = dma.vmem_to_hbm [thread:$0]  %s3960, 32, %s6, [#allocation4]
    $region37: #{tpu_custom_call.1} parent=1 // pred_fallthru
      _
    // Predicated region
    $region38: #{tpu_custom_call.1} parent=1 // pred_check
      _
    $region39: #{tpu_custom_call.1} parent=1 // pred_check_branch
      %3964 = sbr.rel (0) target = $region41
    $region40: #{tpu_custom_call.1} parent=1 // pred_region
      %3965 = dma.done [#allocation4], 32
    $region41: #{tpu_custom_call.1} parent=1 // pred_fallthru
      _
    %3966 = vsyncpa [#allocation3], 1
    %3967 = vsyncpa [#allocation6], 1
    %3968 = vsyncpa [#allocation4], 1

</llo_original>
